<compile_context>
chip_gen: v5e
topology: v5e:2x2
jax: 0.10.0
libtpu: 0.0.40
codegen_flags: <defaults>
</compile_context>

<pallas_src>
import jax
import jax.numpy as jnp
import numpy as np
from jax.experimental import pallas as pl
from jax.experimental.pallas import tpu as pltpu

EPS = 1e-5       # nn.BatchNorm2d default eps
LANE = 128       # TPU lane width


def _round_up(x, m):
    return (x + m - 1) // m * m


def _pack_width(c):
    """Channel width used per tap in the packed K dimension."""
    if c >= LANE:
        return _round_up(c, LANE)
    return 1 << (c - 1).bit_length() if c > 1 else 1


def _row_tile(h, w):
    """Output-row tile height: ~128 im2col rows per grid step, divides H."""
    th = max(1, 128 // max(w, 1))
    th = min(th, h)
    while h % th:
        th -= 1
    return th


def _scoped_vmem(bytes_needed):
    # double-buffer headroom, clamped so it fits every generation's VMEM
    return int(min(max(2 * bytes_needed + (4 << 20), 16 << 20), 64 << 20))


# ------------------------------ Pallas kernels -------------------------------

def _conv_stats_kernel(xpad_ref, w_ref, y_ref, stats_ref, patch_ref):
    """One output-row tile of Conv2d(3x3, same) + per-tile BN partial stats.

    xpad_ref : (1, H+2, W+2, CK)  bf16  per-image spatially padded input
    w_ref    : (KP, CP)           bf16  packed weights (K = 9*CK zero-padded)
    y_ref    : (1, TH, W, CP)     bf16  pre-BN conv output tile
    stats_ref: (1, 1, 2, CP)      f32   [sum, sum_of_squares] for this tile
    patch_ref: (1, TH, W, KP)     bf16  im2col tile scratch (persists per core)
    """
    _, TH, W, CP = y_ref.shape
    CK = xpad_ref.shape[-1]
    KP = patch_ref.shape[-1]
    t = pl.program_id(1)
    row0 = pl.multiple_of(t * TH, TH)

    # Zero only the padded K tail (the 9 tap blocks below are fully rewritten).
    if 9 * CK < KP:
        patch_ref[:, :, :, 9 * CK:] = jnp.zeros(
            (1, TH, W, KP - 9 * CK), patch_ref.dtype)

    # 9 statically unrolled taps, stored into the 4-D patch tile without any
    # per-tap reshape (reshape happens once, at the dot).
    for kh in range(3):
        for kw in range(3):
            tap = kh * 3 + kw
            patch_ref[:, :, :, tap * CK:(tap + 1) * CK] = (
                xpad_ref[:, pl.ds(row0 + kh, TH), kw:kw + W, :])

    p = patch_ref[...].reshape(TH * W, KP)          # leading-dim collapse only
    y = jnp.dot(p, w_ref[...], preferred_element_type=jnp.float32)  # (TH*W, CP)

    # Per-tile partial BN statistics (exact global sum done in the wrapper).
    s1 = jnp.sum(y, axis=0, keepdims=True)
    s2 = jnp.sum(y * y, axis=0, keepdims=True)
    stats_ref[...] = jnp.concatenate([s1, s2], axis=0).reshape(1, 1, 2, CP)

    y_ref[...] = y.reshape(1, TH, W, CP).astype(y_ref.dtype)


def _bn_relu_kernel(y_ref, scale_ref, shift_ref, o_ref):
    """Apply y*scale + shift, ReLU, on one row tile (scale/shift precomputed)."""
    oc = o_ref.shape[-1]
    y = y_ref[:, :, :, :oc].astype(jnp.float32)
    s = scale_ref[0, :oc].reshape(1, 1, 1, oc)
    b = shift_ref[0, :oc].reshape(1, 1, 1, oc)
    o_ref[...] = jnp.maximum(y * s + b, 0.0).astype(o_ref.dtype)


# ------------------------------ wrapper pieces --------------------------------

def _pack_weights(w, ck, kp, cp):
    """HWIO (3,3,ci,co) -> (KP, CP) bf16, rows = tap*ck + ci."""
    ci, co = w.shape[2], w.shape[3]
    wp = jnp.zeros((3, 3, ck, cp), jnp.float32).at[:, :, :ci, :co].set(w)
    wp = wp.reshape(9 * ck, cp)
    wp = jnp.pad(wp, ((0, kp - 9 * ck), (0, 0)))
    return wp.astype(jnp.bfloat16)


def _conv_pre_bn(a, w, g, be):
    """Gridded conv + streamed BN stats.

    a: (N,H,W,CK) bf16, channel-packed activation (channels >= w.shape[2],
       extras are zero).  Returns (y_pre (N,H,W,CP) bf16, scale (1,CP) f32,
       shift (1,CP) f32) with CP = round_up(Cout, 128).
    """
    N, H, W, CK = a.shape
    cout = w.shape[3]
    CP = _round_up(cout, LANE)
    KP = _round_up(9 * CK, LANE)
    TH = _row_tile(H, W)
    T = H // TH
    NHW = N * H * W

    xpad = jnp.pad(a, ((0, 0), (1, 1), (1, 1), (0, 0)))      # bf16 spatial halo
    wk = _pack_weights(w, CK, KP, CP)

    cost = pl.CostEstimate(
        flops=2 * NHW * KP * CP,
        transcendentals=0,
        bytes_accessed=int(xpad.size * 2 + wk.size * 2
                           + NHW * CP * 2 + N * T * 2 * CP * 4))

    block_bytes = ((H + 2) * (W + 2) * CK * 2 + KP * CP * 2
                   + TH * W * CP * 2 + 2 * CP * 4 + TH * W * KP * 2)

    y_pre, stats = pl.pallas_call(
        _conv_stats_kernel,
        grid=(N, T),
        in_specs=[
            pl.BlockSpec((1, H + 2, W + 2, CK), lambda n, t: (n, 0, 0, 0)),
            pl.BlockSpec((KP, CP), lambda n, t: (0, 0)),
        ],
        out_specs=[
            pl.BlockSpec((1, TH, W, CP), lambda n, t: (n, t, 0, 0)),
            pl.BlockSpec((1, 1, 2, CP), lambda n, t: (n, t, 0, 0)),
        ],
        out_shape=(jax.ShapeDtypeStruct((N, H, W, CP), jnp.bfloat16),
                   jax.ShapeDtypeStruct((N, T, 2, CP), jnp.float32)),
        scratch_shapes=[pltpu.VMEM((1, TH, W, KP), jnp.bfloat16)],
        compiler_params=pltpu.CompilerParams(
            dimension_semantics=("parallel", "parallel"),
            vmem_limit_bytes=_scoped_vmem(block_bytes)),
        cost_estimate=cost,
    )(xpad, wk)

    # Exact global reduction of the per-tile partial sums (tiny f32 math).
    s = jnp.sum(stats, axis=(0, 1))                  # (2, CP)
    mean = s[0] / NHW
    var = jnp.maximum(s[1] / NHW - mean * mean, 0.0)  # clamp: no NaN from rsqrt
    gp = jnp.pad(g.reshape(-1).astype(jnp.float32), (0, CP - cout))
    bp = jnp.pad(be.reshape(-1).astype(jnp.float32), (0, CP - cout))
    scale = gp * jax.lax.rsqrt(var + EPS)
    shift = bp - mean * scale
    return y_pre, scale.reshape(1, CP), shift.reshape(1, CP)


def _bn_relu_apply(y_pre, scale, shift, out_ch, out_dtype):
    """Gridded elementwise BN-apply + ReLU pass."""
    N, H, W, CP = y_pre.shape
    TH = _row_tile(H, W)
    T = H // TH
    return pl.pallas_call(
        _bn_relu_kernel,
        grid=(N, T),
        in_specs=[
            pl.BlockSpec((1, TH, W, CP), lambda n, t: (n, t, 0, 0)),
            pl.BlockSpec((1, CP), lambda n, t: (0, 0)),
            pl.BlockSpec((1, CP), lambda n, t: (0, 0)),
        ],
        out_specs=pl.BlockSpec((1, TH, W, out_ch), lambda n, t: (n, t, 0, 0)),
        out_shape=jax.ShapeDtypeStruct((N, H, W, out_ch), out_dtype),
        compiler_params=pltpu.CompilerParams(
            dimension_semantics=("parallel", "parallel")),
    )(y_pre, scale, shift)


def conv_block(x_nchw, params):
    """ConvBlock forward. x_nchw: (N, Cin, H, W) f32 -> (N, Cout, H, W) f32."""
    w1, b1, g1, be1, w2, b2, g2, be2 = params
    # Conv bias is exactly cancelled by training-mode BatchNorm (the batch mean
    # absorbs it), so b1/b2 never reach the kernels.
    del b1, b2
    N, Cin, H, W = x_nchw.shape
    Cout = w1.shape[-1]
    CK1 = _pack_width(Cin)
    CK2 = _pack_width(Cout)

    # NCHW f32 -> NHWC bf16 (MXU operand dtype; halves HBM->VMEM DMA), packed
    # to the K-packing channel width used by conv1.
    x = jnp.transpose(x_nchw, (0, 2, 3, 1)).astype(jnp.bfloat16)
    x = jnp.pad(x, ((0, 0), (0, 0), (0, 0), (0, CK1 - Cin)))

    # conv1 -> BN1 -> ReLU (intermediate kept bf16, packed for conv2's K dim)
    y1, sc1, sh1 = _conv_pre_bn(x, w1, g1, be1)
    a1 = _bn_relu_apply(y1, sc1, sh1, CK2, jnp.bfloat16)

    # conv2 -> BN2 -> ReLU
    y2, sc2, sh2 = _conv_pre_bn(a1, w2, g2, be2)
    out = _bn_relu_apply(y2, sc2, sh2, Cout, jnp.float32)

    # TODO(synk): a real UNet would keep this lane-dense NHWC layout end-to-end;
    # the transpose below only exists to match the PyTorch NCHW interface.
    return jnp.transpose(out, (0, 3, 1, 2))


conv_block_jit = jax.jit(conv_block)


# ----------------------------- pure-JAX reference -----------------------------

def conv_block_ref(x_nchw, params):
    w1, b1, g1, be1, w2, b2, g2, be2 = params

    def conv(x, w, b):  # x NHWC, w HWIO
        y = jax.lax.conv_general_dilated(
            x, w, window_strides=(1, 1), padding='SAME',
            dimension_numbers=('NHWC', 'HWIO', 'NHWC'))
        return y + b.reshape(1, 1, 1, -1)

    def bn_relu(y, g, be):
        mean = jnp.mean(y, axis=(0, 1, 2), keepdims=True)
        var = jnp.mean((y - mean) ** 2, axis=(0, 1, 2), keepdims=True)
        yhat = (y - mean) / jnp.sqrt(var + EPS)
        return jnp.maximum(g.reshape(1, 1, 1, -1) * yhat
                           + be.reshape(1, 1, 1, -1), 0.0)

    x = jnp.transpose(x_nchw, (0, 2, 3, 1))
    y = bn_relu(conv(x, w1, b1), g1, be1)
    y = bn_relu(conv(y, w2, b2), g2, be2)
    return jnp.transpose(y, (0, 3, 1, 2))


# ------------------------------------- main ------------------------------------

if __name__ == "__main__":
    N, Cin, H, W = 2, 4, 16, 16
    Cout = 8

    key = jax.random.PRNGKey(0)
    ks = jax.random.split(key, 9)

    x = jax.random.normal(ks[0], (N, Cin, H, W), jnp.float32)

    # Deterministic synthetic parameters (nn.Conv2d / nn.BatchNorm2d shapes).
    w1 = 0.2 * jax.random.normal(ks[1], (3, 3, Cin, Cout), jnp.float32)   # HWIO
    b1 = 0.1 * jax.random.normal(ks[2], (1, Cout), jnp.float32)
    g1 = 1.0 + 0.1 * jax.random.normal(ks[3], (1, Cout), jnp.float32)     # BN weight
    be1 = 0.1 * jax.random.normal(ks[4], (1, Cout), jnp.float32)          # BN bias

    w2 = 0.2 * jax.random.normal(ks[5], (3, 3, Cout, Cout), jnp.float32)  # HWIO
    b2 = 0.1 * jax.random.normal(ks[6], (1, Cout), jnp.float32)
    g2 = 1.0 + 0.1 * jax.random.normal(ks[7], (1, Cout), jnp.float32)
    be2 = 0.1 * jax.random.normal(ks[8], (1, Cout), jnp.float32)

    params = (w1, b1, g1, be1, w2, b2, g2, be2)

    out = jax.block_until_ready(conv_block_jit(x, params))
    ref = jax.block_until_ready(conv_block_ref(x, params))

    assert out.shape == (N, Cout, H, W), out.shape
    # bf16 MXU operands / bf16 intermediates with f32 accumulation vs all-f32 ref.
    np.testing.assert_allclose(np.asarray(out), np.asarray(ref),
                               rtol=3e-2, atol=3e-2)
    print("KERNEL_OK")
</pallas_src>

<mosaic_0001>
module attributes {stable_mosaic.version = 11 : i64} {
  func.func @_conv_stats_kernel(%arg0: i32, %arg1: i32, %arg2: memref<1x18x18x4xbf16, #tpu.memory_space<vmem>>, %arg3: memref<128x128xbf16, #tpu.memory_space<vmem>>, %arg4: memref<1x8x16x128xbf16, #tpu.memory_space<vmem>>, %arg5: memref<1x1x2x128xf32, #tpu.memory_space<vmem>>, %arg6: memref<1x8x16x128xbf16, #tpu.memory_space<vmem>>) attributes {dimension_semantics = [#tpu.dimension_semantics<parallel>, #tpu.dimension_semantics<parallel>], iteration_bounds = array<i64: 2, 2>, scalar_prefetch = 0 : i64, scratch_operands = 1 : i64, tpu.core_type = #tpu.core_type<tc>, window_params = [{transform_indices = @transform_0, window_bounds = array<i64: 1, 18, 18, 4>}, {pipeline_mode = #tpu.pipeline_mode<synchronous>, transform_indices = @transform_1, window_bounds = array<i64: 128, 128>}, {transform_indices = @transform_2, window_bounds = array<i64: 1, 8, 16, 128>}, {transform_indices = @transform_3, window_bounds = array<i64: 1, 1, 2, 128>}]} {
    %c8_i32 = arith.constant 8 : i32
    %0 = arith.muli %arg1, %c8_i32 : i32
    %1 = tpu.assume_multiple %0, 8 : i32
    %cst = arith.constant 0.000000e+00 : bf16
    %2 = vector.broadcast %cst : bf16 to vector<1x8x16x92xbf16>
    %c0 = arith.constant 0 : index
    %c0_0 = arith.constant 0 : index
    %c0_1 = arith.constant 0 : index
    %c36 = arith.constant 36 : index
    %3 = vector.load %arg6[%c0, %c0_0, %c0_1, %c36] : memref<1x8x16x128xbf16, #tpu.memory_space<vmem>>, vector<1x8x16x92xbf16>
    tpu.vector_store %arg6[%c0, %c0_0, %c0_1, %c36], %2 {strides = array<i32>} : memref<1x8x16x128xbf16, #tpu.memory_space<vmem>>, vector<1x8x16x92xbf16>,
    %c0_i32 = arith.constant 0 : i32
    %4 = arith.addi %1, %c0_i32 : i32
    %c0_2 = arith.constant 0 : index
    %5 = arith.index_cast %4 : i32 to index
    %c0_3 = arith.constant 0 : index
    %c0_4 = arith.constant 0 : index
    %6 = vector.load %arg2[%c0_2, %5, %c0_3, %c0_4] : memref<1x18x18x4xbf16, #tpu.memory_space<vmem>>, vector<1x8x16x4xbf16>
    %c0_5 = arith.constant 0 : index
    %c0_6 = arith.constant 0 : index
    %c0_7 = arith.constant 0 : index
    %c0_8 = arith.constant 0 : index
    %7 = vector.load %arg6[%c0_5, %c0_6, %c0_7, %c0_8] : memref<1x8x16x128xbf16, #tpu.memory_space<vmem>>, vector<1x8x16x4xbf16>
    tpu.vector_store %arg6[%c0_5, %c0_6, %c0_7, %c0_8], %6 {strides = array<i32>} : memref<1x8x16x128xbf16, #tpu.memory_space<vmem>>, vector<1x8x16x4xbf16>,
    %c0_i32_9 = arith.constant 0 : i32
    %8 = arith.addi %1, %c0_i32_9 : i32
    %c0_10 = arith.constant 0 : index
    %9 = arith.index_cast %8 : i32 to index
    %c1 = arith.constant 1 : index
    %c0_11 = arith.constant 0 : index
    %10 = vector.load %arg2[%c0_10, %9, %c1, %c0_11] : memref<1x18x18x4xbf16, #tpu.memory_space<vmem>>, vector<1x8x16x4xbf16>
    %c0_12 = arith.constant 0 : index
    %c0_13 = arith.constant 0 : index
    %c0_14 = arith.constant 0 : index
    %c4 = arith.constant 4 : index
    %11 = vector.load %arg6[%c0_12, %c0_13, %c0_14, %c4] : memref<1x8x16x128xbf16, #tpu.memory_space<vmem>>, vector<1x8x16x4xbf16>
    tpu.vector_store %arg6[%c0_12, %c0_13, %c0_14, %c4], %10 {strides = array<i32>} : memref<1x8x16x128xbf16, #tpu.memory_space<vmem>>, vector<1x8x16x4xbf16>,
    %c0_i32_15 = arith.constant 0 : i32
    %12 = arith.addi %1, %c0_i32_15 : i32
    %c0_16 = arith.constant 0 : index
    %13 = arith.index_cast %12 : i32 to index
    %c2 = arith.constant 2 : index
    %c0_17 = arith.constant 0 : index
    %14 = vector.load %arg2[%c0_16, %13, %c2, %c0_17] : memref<1x18x18x4xbf16, #tpu.memory_space<vmem>>, vector<1x8x16x4xbf16>
    %c0_18 = arith.constant 0 : index
    %c0_19 = arith.constant 0 : index
    %c0_20 = arith.constant 0 : index
    %c8 = arith.constant 8 : index
    %15 = vector.load %arg6[%c0_18, %c0_19, %c0_20, %c8] : memref<1x8x16x128xbf16, #tpu.memory_space<vmem>>, vector<1x8x16x4xbf16>
    tpu.vector_store %arg6[%c0_18, %c0_19, %c0_20, %c8], %14 {strides = array<i32>} : memref<1x8x16x128xbf16, #tpu.memory_space<vmem>>, vector<1x8x16x4xbf16>,
    %c1_i32 = arith.constant 1 : i32
    %16 = arith.addi %1, %c1_i32 : i32
    %c0_21 = arith.constant 0 : index
    %17 = arith.index_cast %16 : i32 to index
    %c0_22 = arith.constant 0 : index
    %c0_23 = arith.constant 0 : index
    %18 = vector.load %arg2[%c0_21, %17, %c0_22, %c0_23] : memref<1x18x18x4xbf16, #tpu.memory_space<vmem>>, vector<1x8x16x4xbf16>
    %c0_24 = arith.constant 0 : index
    %c0_25 = arith.constant 0 : index
    %c0_26 = arith.constant 0 : index
    %c12 = arith.constant 12 : index
    %19 = vector.load %arg6[%c0_24, %c0_25, %c0_26, %c12] : memref<1x8x16x128xbf16, #tpu.memory_space<vmem>>, vector<1x8x16x4xbf16>
    tpu.vector_store %arg6[%c0_24, %c0_25, %c0_26, %c12], %18 {strides = array<i32>} : memref<1x8x16x128xbf16, #tpu.memory_space<vmem>>, vector<1x8x16x4xbf16>,
    %c1_i32_27 = arith.constant 1 : i32
    %20 = arith.addi %1, %c1_i32_27 : i32
    %c0_28 = arith.constant 0 : index
    %21 = arith.index_cast %20 : i32 to index
    %c1_29 = arith.constant 1 : index
    %c0_30 = arith.constant 0 : index
    %22 = vector.load %arg2[%c0_28, %21, %c1_29, %c0_30] : memref<1x18x18x4xbf16, #tpu.memory_space<vmem>>, vector<1x8x16x4xbf16>
    %c0_31 = arith.constant 0 : index
    %c0_32 = arith.constant 0 : index
    %c0_33 = arith.constant 0 : index
    %c16 = arith.constant 16 : index
    %23 = vector.load %arg6[%c0_31, %c0_32, %c0_33, %c16] : memref<1x8x16x128xbf16, #tpu.memory_space<vmem>>, vector<1x8x16x4xbf16>
    tpu.vector_store %arg6[%c0_31, %c0_32, %c0_33, %c16], %22 {strides = array<i32>} : memref<1x8x16x128xbf16, #tpu.memory_space<vmem>>, vector<1x8x16x4xbf16>,
    %c1_i32_34 = arith.constant 1 : i32
    %24 = arith.addi %1, %c1_i32_34 : i32
    %c0_35 = arith.constant 0 : index
    %25 = arith.index_cast %24 : i32 to index
    %c2_36 = arith.constant 2 : index
    %c0_37 = arith.constant 0 : index
    %26 = vector.load %arg2[%c0_35, %25, %c2_36, %c0_37] : memref<1x18x18x4xbf16, #tpu.memory_space<vmem>>, vector<1x8x16x4xbf16>
    %c0_38 = arith.constant 0 : index
    %c0_39 = arith.constant 0 : index
    %c0_40 = arith.constant 0 : index
    %c20 = arith.constant 20 : index
    %27 = vector.load %arg6[%c0_38, %c0_39, %c0_40, %c20] : memref<1x8x16x128xbf16, #tpu.memory_space<vmem>>, vector<1x8x16x4xbf16>
    tpu.vector_store %arg6[%c0_38, %c0_39, %c0_40, %c20], %26 {strides = array<i32>} : memref<1x8x16x128xbf16, #tpu.memory_space<vmem>>, vector<1x8x16x4xbf16>,
    %c2_i32 = arith.constant 2 : i32
    %28 = arith.addi %1, %c2_i32 : i32
    %c0_41 = arith.constant 0 : index
    %29 = arith.index_cast %28 : i32 to index
    %c0_42 = arith.constant 0 : index
    %c0_43 = arith.constant 0 : index
    %30 = vector.load %arg2[%c0_41, %29, %c0_42, %c0_43] : memref<1x18x18x4xbf16, #tpu.memory_space<vmem>>, vector<1x8x16x4xbf16>
    %c0_44 = arith.constant 0 : index
    %c0_45 = arith.constant 0 : index
    %c0_46 = arith.constant 0 : index
    %c24 = arith.constant 24 : index
    %31 = vector.load %arg6[%c0_44, %c0_45, %c0_46, %c24] : memref<1x8x16x128xbf16, #tpu.memory_space<vmem>>, vector<1x8x16x4xbf16>
    tpu.vector_store %arg6[%c0_44, %c0_45, %c0_46, %c24], %30 {strides = array<i32>} : memref<1x8x16x128xbf16, #tpu.memory_space<vmem>>, vector<1x8x16x4xbf16>,
    %c2_i32_47 = arith.constant 2 : i32
    %32 = arith.addi %1, %c2_i32_47 : i32
    %c0_48 = arith.constant 0 : index
    %33 = arith.index_cast %32 : i32 to index
    %c1_49 = arith.constant 1 : index
    %c0_50 = arith.constant 0 : index
    %34 = vector.load %arg2[%c0_48, %33, %c1_49, %c0_50] : memref<1x18x18x4xbf16, #tpu.memory_space<vmem>>, vector<1x8x16x4xbf16>
    %c0_51 = arith.constant 0 : index
    %c0_52 = arith.constant 0 : index
    %c0_53 = arith.constant 0 : index
    %c28 = arith.constant 28 : index
    %35 = vector.load %arg6[%c0_51, %c0_52, %c0_53, %c28] : memref<1x8x16x128xbf16, #tpu.memory_space<vmem>>, vector<1x8x16x4xbf16>
    tpu.vector_store %arg6[%c0_51, %c0_52, %c0_53, %c28], %34 {strides = array<i32>} : memref<1x8x16x128xbf16, #tpu.memory_space<vmem>>, vector<1x8x16x4xbf16>,
    %c2_i32_54 = arith.constant 2 : i32
    %36 = arith.addi %1, %c2_i32_54 : i32
    %c0_55 = arith.constant 0 : index
    %37 = arith.index_cast %36 : i32 to index
    %c2_56 = arith.constant 2 : index
    %c0_57 = arith.constant 0 : index
    %38 = vector.load %arg2[%c0_55, %37, %c2_56, %c0_57] : memref<1x18x18x4xbf16, #tpu.memory_space<vmem>>, vector<1x8x16x4xbf16>
    %c0_58 = arith.constant 0 : index
    %c0_59 = arith.constant 0 : index
    %c0_60 = arith.constant 0 : index
    %c32 = arith.constant 32 : index
    %39 = vector.load %arg6[%c0_58, %c0_59, %c0_60, %c32] : memref<1x8x16x128xbf16, #tpu.memory_space<vmem>>, vector<1x8x16x4xbf16>
    tpu.vector_store %arg6[%c0_58, %c0_59, %c0_60, %c32], %38 {strides = array<i32>} : memref<1x8x16x128xbf16, #tpu.memory_space<vmem>>, vector<1x8x16x4xbf16>,
    %c0_61 = arith.constant 0 : index
    %c0_62 = arith.constant 0 : index
    %c0_63 = arith.constant 0 : index
    %c0_64 = arith.constant 0 : index
    %40 = vector.load %arg6[%c0_61, %c0_62, %c0_63, %c0_64] : memref<1x8x16x128xbf16, #tpu.memory_space<vmem>>, vector<1x8x16x128xbf16>
    %41 = vector.shape_cast %40 : vector<1x8x16x128xbf16> to vector<128x128xbf16>
    %c0_65 = arith.constant 0 : index
    %c0_66 = arith.constant 0 : index
    %42 = vector.load %arg3[%c0_65, %c0_66] : memref<128x128xbf16, #tpu.memory_space<vmem>>, vector<128x128xbf16>
    %cst_67 = arith.constant dense<0.000000e+00> : vector<128x128xf32>
    %43 = tpu.matmul %41, %42, %cst_67 {dimension_numbers = #tpu.dot_dimension_numbers<[1], [0], [0], [1], [0, 0, 1, 1], [], []>} : vector<128x128xbf16>, vector<128x128xbf16>, vector<128x128xf32> -> vector<128x128xf32>
    %cst_68 = arith.constant dense<0.000000e+00> : vector<128xf32>
    %44 = vector.multi_reduction <add>, %43, %cst_68 [0] : vector<128x128xf32> to vector<128xf32>
    %45 = vector.shape_cast %44 : vector<128xf32> to vector<1x128xf32>
    %46 = arith.mulf %43, %43 : vector<128x128xf32>
    %cst_69 = arith.constant dense<0.000000e+00> : vector<128xf32>
    %47 = vector.multi_reduction <add>, %46, %cst_69 [0] : vector<128x128xf32> to vector<128xf32>
    %48 = vector.shape_cast %47 : vector<128xf32> to vector<1x128xf32>
    %49 = tpu.concatenate %45, %48 in 0 : vector<1x128xf32>, vector<1x128xf32> -> vector<2x128xf32>
    %50 = vector.shape_cast %49 : vector<2x128xf32> to vector<1x1x2x128xf32>
    %c0_70 = arith.constant 0 : index
    %c0_71 = arith.constant 0 : index
    %c0_72 = arith.constant 0 : index
    %c0_73 = arith.constant 0 : index
    %51 = vector.load %arg5[%c0_70, %c0_71, %c0_72, %c0_73] : memref<1x1x2x128xf32, #tpu.memory_space<vmem>>, vector<1x1x2x128xf32>
    tpu.vector_store %arg5[%c0_70, %c0_71, %c0_72, %c0_73], %50 {strides = array<i32>} : memref<1x1x2x128xf32, #tpu.memory_space<vmem>>, vector<1x1x2x128xf32>,
    %52 = vector.shape_cast %43 : vector<128x128xf32> to vector<1x8x16x128xf32>
    %53 = arith.truncf %52 : vector<1x8x16x128xf32> to vector<1x8x16x128xbf16>
    %c0_74 = arith.constant 0 : index
    %c0_75 = arith.constant 0 : index
    %c0_76 = arith.constant 0 : index
    %c0_77 = arith.constant 0 : index
    %54 = vector.load %arg4[%c0_74, %c0_75, %c0_76, %c0_77] : memref<1x8x16x128xbf16, #tpu.memory_space<vmem>>, vector<1x8x16x128xbf16>
    tpu.vector_store %arg4[%c0_74, %c0_75, %c0_76, %c0_77], %53 {strides = array<i32>} : memref<1x8x16x128xbf16, #tpu.memory_space<vmem>>, vector<1x8x16x128xbf16>,
    return
  }
  func.func @transform_0(%arg0: i32, %arg1: i32) -> (i32, i32, i32, i32) {
    %c0_i32 = arith.constant 0 : i32
    %c0_i32_0 = arith.constant 0 : i32
    %c0_i32_1 = arith.constant 0 : i32
    %c0_i32_2 = arith.constant 0 : i32
    return %arg0, %c0_i32, %c0_i32_0, %c0_i32_1 : i32, i32, i32, i32
  }
  func.func @transform_1(%arg0: i32, %arg1: i32) -> (i32, i32) {
    %c0_i32 = arith.constant 0 : i32
    %c0_i32_0 = arith.constant 0 : i32
    %c0_i32_1 = arith.constant 0 : i32
    return %c0_i32, %c0_i32_0 : i32, i32
  }
  func.func @transform_2(%arg0: i32, %arg1: i32) -> (i32, i32, i32, i32) {
    %c0_i32 = arith.constant 0 : i32
    %c0_i32_0 = arith.constant 0 : i32
    %c0_i32_1 = arith.constant 0 : i32
    return %arg0, %arg1, %c0_i32, %c0_i32_0 : i32, i32, i32, i32
  }
  func.func @transform_3(%arg0: i32, %arg1: i32) -> (i32, i32, i32, i32) {
    %c0_i32 = arith.constant 0 : i32
    %c0_i32_0 = arith.constant 0 : i32
    %c0_i32_1 = arith.constant 0 : i32
    return %arg0, %arg1, %c0_i32, %c0_i32_0 : i32, i32, i32, i32
  }
}

module attributes {stable_mosaic.version = 11 : i64} {
  func.func @_bn_relu_kernel(%arg0: i32, %arg1: i32, %arg2: memref<1x8x16x128xbf16, #tpu.memory_space<vmem>>, %arg3: memref<1x128xf32, #tpu.memory_space<vmem>>, %arg4: memref<1x128xf32, #tpu.memory_space<vmem>>, %arg5: memref<1x8x16x8xbf16, #tpu.memory_space<vmem>>) attributes {dimension_semantics = [#tpu.dimension_semantics<parallel>, #tpu.dimension_semantics<parallel>], iteration_bounds = array<i64: 2, 2>, scalar_prefetch = 0 : i64, scratch_operands = 0 : i64, tpu.core_type = #tpu.core_type<tc>, window_params = [{transform_indices = @transform_0, window_bounds = array<i64: 1, 8, 16, 128>}, {pipeline_mode = #tpu.pipeline_mode<synchronous>, transform_indices = @transform_1, window_bounds = array<i64: 1, 128>}, {pipeline_mode = #tpu.pipeline_mode<synchronous>, transform_indices = @transform_2, window_bounds = array<i64: 1, 128>}, {transform_indices = @transform_3, window_bounds = array<i64: 1, 8, 16, 8>}]} {
    %c0 = arith.constant 0 : index
    %c0_0 = arith.constant 0 : index
    %c0_1 = arith.constant 0 : index
    %c0_2 = arith.constant 0 : index
    %0 = vector.load %arg2[%c0, %c0_0, %c0_1, %c0_2] : memref<1x8x16x128xbf16, #tpu.memory_space<vmem>>, vector<1x8x16x8xbf16>
    %1 = arith.extf %0 : vector<1x8x16x8xbf16> to vector<1x8x16x8xf32>
    %c0_3 = arith.constant 0 : index
    %c0_4 = arith.constant 0 : index
    %2 = vector.load %arg3[%c0_3, %c0_4] : memref<1x128xf32, #tpu.memory_space<vmem>>, vector<1x8xf32>
    %3 = vector.shape_cast %2 : vector<1x8xf32> to vector<8xf32>
    %4 = vector.shape_cast %3 : vector<8xf32> to vector<1x1x1x8xf32>
    %c0_5 = arith.constant 0 : index
    %c0_6 = arith.constant 0 : index
    %5 = vector.load %arg4[%c0_5, %c0_6] : memref<1x128xf32, #tpu.memory_space<vmem>>, vector<1x8xf32>
    %6 = vector.shape_cast %5 : vector<1x8xf32> to vector<8xf32>
    %7 = vector.shape_cast %6 : vector<8xf32> to vector<1x1x1x8xf32>
    %8 = vector.broadcast %4 : vector<1x1x1x8xf32> to vector<1x8x16x8xf32>
    %9 = arith.mulf %1, %8 : vector<1x8x16x8xf32>
    %10 = vector.broadcast %7 : vector<1x1x1x8xf32> to vector<1x8x16x8xf32>
    %11 = arith.addf %9, %10 : vector<1x8x16x8xf32>
    %cst = arith.constant 0.000000e+00 : f32
    %12 = vector.broadcast %cst : f32 to vector<1x8x16x8xf32>
    %13 = arith.maximumf %11, %12 : vector<1x8x16x8xf32>
    %14 = arith.truncf %13 : vector<1x8x16x8xf32> to vector<1x8x16x8xbf16>
    %c0_7 = arith.constant 0 : index
    %c0_8 = arith.constant 0 : index
    %c0_9 = arith.constant 0 : index
    %c0_10 = arith.constant 0 : index
    %15 = vector.load %arg5[%c0_7, %c0_8, %c0_9, %c0_10] : memref<1x8x16x8xbf16, #tpu.memory_space<vmem>>, vector<1x8x16x8xbf16>
    tpu.vector_store %arg5[%c0_7, %c0_8, %c0_9, %c0_10], %14 {strides = array<i32>} : memref<1x8x16x8xbf16, #tpu.memory_space<vmem>>, vector<1x8x16x8xbf16>,
    return
  }
  func.func @transform_0(%arg0: i32, %arg1: i32) -> (i32, i32, i32, i32) {
    %c0_i32 = arith.constant 0 : i32
    %c0_i32_0 = arith.constant 0 : i32
    %c0_i32_1 = arith.constant 0 : i32
    return %arg0, %arg1, %c0_i32, %c0_i32_0 : i32, i32, i32, i32
  }
  func.func @transform_1(%arg0: i32, %arg1: i32) -> (i32, i32) {
    %c0_i32 = arith.constant 0 : i32
    %c0_i32_0 = arith.constant 0 : i32
    %c0_i32_1 = arith.constant 0 : i32
    return %c0_i32, %c0_i32_0 : i32, i32
  }
  func.func @transform_2(%arg0: i32, %arg1: i32) -> (i32, i32) {
    %c0_i32 = arith.constant 0 : i32
    %c0_i32_0 = arith.constant 0 : i32
    %c0_i32_1 = arith.constant 0 : i32
    return %c0_i32, %c0_i32_0 : i32, i32
  }
  func.func @transform_3(%arg0: i32, %arg1: i32) -> (i32, i32, i32, i32) {
    %c0_i32 = arith.constant 0 : i32
    %c0_i32_0 = arith.constant 0 : i32
    %c0_i32_1 = arith.constant 0 : i32
    return %arg0, %arg1, %c0_i32, %c0_i32_0 : i32, i32, i32, i32
  }
}

module attributes {stable_mosaic.version = 11 : i64} {
  func.func @_conv_stats_kernel(%arg0: i32, %arg1: i32, %arg2: memref<1x18x18x8xbf16, #tpu.memory_space<vmem>>, %arg3: memref<128x128xbf16, #tpu.memory_space<vmem>>, %arg4: memref<1x8x16x128xbf16, #tpu.memory_space<vmem>>, %arg5: memref<1x1x2x128xf32, #tpu.memory_space<vmem>>, %arg6: memref<1x8x16x128xbf16, #tpu.memory_space<vmem>>) attributes {dimension_semantics = [#tpu.dimension_semantics<parallel>, #tpu.dimension_semantics<parallel>], iteration_bounds = array<i64: 2, 2>, scalar_prefetch = 0 : i64, scratch_operands = 1 : i64, tpu.core_type = #tpu.core_type<tc>, window_params = [{transform_indices = @transform_0, window_bounds = array<i64: 1, 18, 18, 8>}, {pipeline_mode = #tpu.pipeline_mode<synchronous>, transform_indices = @transform_1, window_bounds = array<i64: 128, 128>}, {transform_indices = @transform_2, window_bounds = array<i64: 1, 8, 16, 128>}, {transform_indices = @transform_3, window_bounds = array<i64: 1, 1, 2, 128>}]} {
    %c8_i32 = arith.constant 8 : i32
    %0 = arith.muli %arg1, %c8_i32 : i32
    %1 = tpu.assume_multiple %0, 8 : i32
    %cst = arith.constant 0.000000e+00 : bf16
    %2 = vector.broadcast %cst : bf16 to vector<1x8x16x56xbf16>
    %c0 = arith.constant 0 : index
    %c0_0 = arith.constant 0 : index
    %c0_1 = arith.constant 0 : index
    %c72 = arith.constant 72 : index
    %3 = vector.load %arg6[%c0, %c0_0, %c0_1, %c72] : memref<1x8x16x128xbf16, #tpu.memory_space<vmem>>, vector<1x8x16x56xbf16>
    tpu.vector_store %arg6[%c0, %c0_0, %c0_1, %c72], %2 {strides = array<i32>} : memref<1x8x16x128xbf16, #tpu.memory_space<vmem>>, vector<1x8x16x56xbf16>,
    %c0_i32 = arith.constant 0 : i32
    %4 = arith.addi %1, %c0_i32 : i32
    %c0_2 = arith.constant 0 : index
    %5 = arith.index_cast %4 : i32 to index
    %c0_3 = arith.constant 0 : index
    %c0_4 = arith.constant 0 : index
    %6 = vector.load %arg2[%c0_2, %5, %c0_3, %c0_4] : memref<1x18x18x8xbf16, #tpu.memory_space<vmem>>, vector<1x8x16x8xbf16>
    %c0_5 = arith.constant 0 : index
    %c0_6 = arith.constant 0 : index
    %c0_7 = arith.constant 0 : index
    %c0_8 = arith.constant 0 : index
    %7 = vector.load %arg6[%c0_5, %c0_6, %c0_7, %c0_8] : memref<1x8x16x128xbf16, #tpu.memory_space<vmem>>, vector<1x8x16x8xbf16>
    tpu.vector_store %arg6[%c0_5, %c0_6, %c0_7, %c0_8], %6 {strides = array<i32>} : memref<1x8x16x128xbf16, #tpu.memory_space<vmem>>, vector<1x8x16x8xbf16>,
    %c0_i32_9 = arith.constant 0 : i32
    %8 = arith.addi %1, %c0_i32_9 : i32
    %c0_10 = arith.constant 0 : index
    %9 = arith.index_cast %8 : i32 to index
    %c1 = arith.constant 1 : index
    %c0_11 = arith.constant 0 : index
    %10 = vector.load %arg2[%c0_10, %9, %c1, %c0_11] : memref<1x18x18x8xbf16, #tpu.memory_space<vmem>>, vector<1x8x16x8xbf16>
    %c0_12 = arith.constant 0 : index
    %c0_13 = arith.constant 0 : index
    %c0_14 = arith.constant 0 : index
    %c8 = arith.constant 8 : index
    %11 = vector.load %arg6[%c0_12, %c0_13, %c0_14, %c8] : memref<1x8x16x128xbf16, #tpu.memory_space<vmem>>, vector<1x8x16x8xbf16>
    tpu.vector_store %arg6[%c0_12, %c0_13, %c0_14, %c8], %10 {strides = array<i32>} : memref<1x8x16x128xbf16, #tpu.memory_space<vmem>>, vector<1x8x16x8xbf16>,
    %c0_i32_15 = arith.constant 0 : i32
    %12 = arith.addi %1, %c0_i32_15 : i32
    %c0_16 = arith.constant 0 : index
    %13 = arith.index_cast %12 : i32 to index
    %c2 = arith.constant 2 : index
    %c0_17 = arith.constant 0 : index
    %14 = vector.load %arg2[%c0_16, %13, %c2, %c0_17] : memref<1x18x18x8xbf16, #tpu.memory_space<vmem>>, vector<1x8x16x8xbf16>
    %c0_18 = arith.constant 0 : index
    %c0_19 = arith.constant 0 : index
    %c0_20 = arith.constant 0 : index
    %c16 = arith.constant 16 : index
    %15 = vector.load %arg6[%c0_18, %c0_19, %c0_20, %c16] : memref<1x8x16x128xbf16, #tpu.memory_space<vmem>>, vector<1x8x16x8xbf16>
    tpu.vector_store %arg6[%c0_18, %c0_19, %c0_20, %c16], %14 {strides = array<i32>} : memref<1x8x16x128xbf16, #tpu.memory_space<vmem>>, vector<1x8x16x8xbf16>,
    %c1_i32 = arith.constant 1 : i32
    %16 = arith.addi %1, %c1_i32 : i32
    %c0_21 = arith.constant 0 : index
    %17 = arith.index_cast %16 : i32 to index
    %c0_22 = arith.constant 0 : index
    %c0_23 = arith.constant 0 : index
    %18 = vector.load %arg2[%c0_21, %17, %c0_22, %c0_23] : memref<1x18x18x8xbf16, #tpu.memory_space<vmem>>, vector<1x8x16x8xbf16>
    %c0_24 = arith.constant 0 : index
    %c0_25 = arith.constant 0 : index
    %c0_26 = arith.constant 0 : index
    %c24 = arith.constant 24 : index
    %19 = vector.load %arg6[%c0_24, %c0_25, %c0_26, %c24] : memref<1x8x16x128xbf16, #tpu.memory_space<vmem>>, vector<1x8x16x8xbf16>
    tpu.vector_store %arg6[%c0_24, %c0_25, %c0_26, %c24], %18 {strides = array<i32>} : memref<1x8x16x128xbf16, #tpu.memory_space<vmem>>, vector<1x8x16x8xbf16>,
    %c1_i32_27 = arith.constant 1 : i32
    %20 = arith.addi %1, %c1_i32_27 : i32
    %c0_28 = arith.constant 0 : index
    %21 = arith.index_cast %20 : i32 to index
    %c1_29 = arith.constant 1 : index
    %c0_30 = arith.constant 0 : index
    %22 = vector.load %arg2[%c0_28, %21, %c1_29, %c0_30] : memref<1x18x18x8xbf16, #tpu.memory_space<vmem>>, vector<1x8x16x8xbf16>
    %c0_31 = arith.constant 0 : index
    %c0_32 = arith.constant 0 : index
    %c0_33 = arith.constant 0 : index
    %c32 = arith.constant 32 : index
    %23 = vector.load %arg6[%c0_31, %c0_32, %c0_33, %c32] : memref<1x8x16x128xbf16, #tpu.memory_space<vmem>>, vector<1x8x16x8xbf16>
    tpu.vector_store %arg6[%c0_31, %c0_32, %c0_33, %c32], %22 {strides = array<i32>} : memref<1x8x16x128xbf16, #tpu.memory_space<vmem>>, vector<1x8x16x8xbf16>,
    %c1_i32_34 = arith.constant 1 : i32
    %24 = arith.addi %1, %c1_i32_34 : i32
    %c0_35 = arith.constant 0 : index
    %25 = arith.index_cast %24 : i32 to index
    %c2_36 = arith.constant 2 : index
    %c0_37 = arith.constant 0 : index
    %26 = vector.load %arg2[%c0_35, %25, %c2_36, %c0_37] : memref<1x18x18x8xbf16, #tpu.memory_space<vmem>>, vector<1x8x16x8xbf16>
    %c0_38 = arith.constant 0 : index
    %c0_39 = arith.constant 0 : index
    %c0_40 = arith.constant 0 : index
    %c40 = arith.constant 40 : index
    %27 = vector.load %arg6[%c0_38, %c0_39, %c0_40, %c40] : memref<1x8x16x128xbf16, #tpu.memory_space<vmem>>, vector<1x8x16x8xbf16>
    tpu.vector_store %arg6[%c0_38, %c0_39, %c0_40, %c40], %26 {strides = array<i32>} : memref<1x8x16x128xbf16, #tpu.memory_space<vmem>>, vector<1x8x16x8xbf16>,
    %c2_i32 = arith.constant 2 : i32
    %28 = arith.addi %1, %c2_i32 : i32
    %c0_41 = arith.constant 0 : index
    %29 = arith.index_cast %28 : i32 to index
    %c0_42 = arith.constant 0 : index
    %c0_43 = arith.constant 0 : index
    %30 = vector.load %arg2[%c0_41, %29, %c0_42, %c0_43] : memref<1x18x18x8xbf16, #tpu.memory_space<vmem>>, vector<1x8x16x8xbf16>
    %c0_44 = arith.constant 0 : index
    %c0_45 = arith.constant 0 : index
    %c0_46 = arith.constant 0 : index
    %c48 = arith.constant 48 : index
    %31 = vector.load %arg6[%c0_44, %c0_45, %c0_46, %c48] : memref<1x8x16x128xbf16, #tpu.memory_space<vmem>>, vector<1x8x16x8xbf16>
    tpu.vector_store %arg6[%c0_44, %c0_45, %c0_46, %c48], %30 {strides = array<i32>} : memref<1x8x16x128xbf16, #tpu.memory_space<vmem>>, vector<1x8x16x8xbf16>,
    %c2_i32_47 = arith.constant 2 : i32
    %32 = arith.addi %1, %c2_i32_47 : i32
    %c0_48 = arith.constant 0 : index
    %33 = arith.index_cast %32 : i32 to index
    %c1_49 = arith.constant 1 : index
    %c0_50 = arith.constant 0 : index
    %34 = vector.load %arg2[%c0_48, %33, %c1_49, %c0_50] : memref<1x18x18x8xbf16, #tpu.memory_space<vmem>>, vector<1x8x16x8xbf16>
    %c0_51 = arith.constant 0 : index
    %c0_52 = arith.constant 0 : index
    %c0_53 = arith.constant 0 : index
    %c56 = arith.constant 56 : index
    %35 = vector.load %arg6[%c0_51, %c0_52, %c0_53, %c56] : memref<1x8x16x128xbf16, #tpu.memory_space<vmem>>, vector<1x8x16x8xbf16>
    tpu.vector_store %arg6[%c0_51, %c0_52, %c0_53, %c56], %34 {strides = array<i32>} : memref<1x8x16x128xbf16, #tpu.memory_space<vmem>>, vector<1x8x16x8xbf16>,
    %c2_i32_54 = arith.constant 2 : i32
    %36 = arith.addi %1, %c2_i32_54 : i32
    %c0_55 = arith.constant 0 : index
    %37 = arith.index_cast %36 : i32 to index
    %c2_56 = arith.constant 2 : index
    %c0_57 = arith.constant 0 : index
    %38 = vector.load %arg2[%c0_55, %37, %c2_56, %c0_57] : memref<1x18x18x8xbf16, #tpu.memory_space<vmem>>, vector<1x8x16x8xbf16>
    %c0_58 = arith.constant 0 : index
    %c0_59 = arith.constant 0 : index
    %c0_60 = arith.constant 0 : index
    %c64 = arith.constant 64 : index
    %39 = vector.load %arg6[%c0_58, %c0_59, %c0_60, %c64] : memref<1x8x16x128xbf16, #tpu.memory_space<vmem>>, vector<1x8x16x8xbf16>
    tpu.vector_store %arg6[%c0_58, %c0_59, %c0_60, %c64], %38 {strides = array<i32>} : memref<1x8x16x128xbf16, #tpu.memory_space<vmem>>, vector<1x8x16x8xbf16>,
    %c0_61 = arith.constant 0 : index
    %c0_62 = arith.constant 0 : index
    %c0_63 = arith.constant 0 : index
    %c0_64 = arith.constant 0 : index
    %40 = vector.load %arg6[%c0_61, %c0_62, %c0_63, %c0_64] : memref<1x8x16x128xbf16, #tpu.memory_space<vmem>>, vector<1x8x16x128xbf16>
    %41 = vector.shape_cast %40 : vector<1x8x16x128xbf16> to vector<128x128xbf16>
    %c0_65 = arith.constant 0 : index
    %c0_66 = arith.constant 0 : index
    %42 = vector.load %arg3[%c0_65, %c0_66] : memref<128x128xbf16, #tpu.memory_space<vmem>>, vector<128x128xbf16>
    %cst_67 = arith.constant dense<0.000000e+00> : vector<128x128xf32>
    %43 = tpu.matmul %41, %42, %cst_67 {dimension_numbers = #tpu.dot_dimension_numbers<[1], [0], [0], [1], [0, 0, 1, 1], [], []>} : vector<128x128xbf16>, vector<128x128xbf16>, vector<128x128xf32> -> vector<128x128xf32>
    %cst_68 = arith.constant dense<0.000000e+00> : vector<128xf32>
    %44 = vector.multi_reduction <add>, %43, %cst_68 [0] : vector<128x128xf32> to vector<128xf32>
    %45 = vector.shape_cast %44 : vector<128xf32> to vector<1x128xf32>
    %46 = arith.mulf %43, %43 : vector<128x128xf32>
    %cst_69 = arith.constant dense<0.000000e+00> : vector<128xf32>
    %47 = vector.multi_reduction <add>, %46, %cst_69 [0] : vector<128x128xf32> to vector<128xf32>
    %48 = vector.shape_cast %47 : vector<128xf32> to vector<1x128xf32>
    %49 = tpu.concatenate %45, %48 in 0 : vector<1x128xf32>, vector<1x128xf32> -> vector<2x128xf32>
    %50 = vector.shape_cast %49 : vector<2x128xf32> to vector<1x1x2x128xf32>
    %c0_70 = arith.constant 0 : index
    %c0_71 = arith.constant 0 : index
    %c0_72 = arith.constant 0 : index
    %c0_73 = arith.constant 0 : index
    %51 = vector.load %arg5[%c0_70, %c0_71, %c0_72, %c0_73] : memref<1x1x2x128xf32, #tpu.memory_space<vmem>>, vector<1x1x2x128xf32>
    tpu.vector_store %arg5[%c0_70, %c0_71, %c0_72, %c0_73], %50 {strides = array<i32>} : memref<1x1x2x128xf32, #tpu.memory_space<vmem>>, vector<1x1x2x128xf32>,
    %52 = vector.shape_cast %43 : vector<128x128xf32> to vector<1x8x16x128xf32>
    %53 = arith.truncf %52 : vector<1x8x16x128xf32> to vector<1x8x16x128xbf16>
    %c0_74 = arith.constant 0 : index
    %c0_75 = arith.constant 0 : index
    %c0_76 = arith.constant 0 : index
    %c0_77 = arith.constant 0 : index
    %54 = vector.load %arg4[%c0_74, %c0_75, %c0_76, %c0_77] : memref<1x8x16x128xbf16, #tpu.memory_space<vmem>>, vector<1x8x16x128xbf16>
    tpu.vector_store %arg4[%c0_74, %c0_75, %c0_76, %c0_77], %53 {strides = array<i32>} : memref<1x8x16x128xbf16, #tpu.memory_space<vmem>>, vector<1x8x16x128xbf16>,
    return
  }
  func.func @transform_0(%arg0: i32, %arg1: i32) -> (i32, i32, i32, i32) {
    %c0_i32 = arith.constant 0 : i32
    %c0_i32_0 = arith.constant 0 : i32
    %c0_i32_1 = arith.constant 0 : i32
    %c0_i32_2 = arith.constant 0 : i32
    return %arg0, %c0_i32, %c0_i32_0, %c0_i32_1 : i32, i32, i32, i32
  }
  func.func @transform_1(%arg0: i32, %arg1: i32) -> (i32, i32) {
    %c0_i32 = arith.constant 0 : i32
    %c0_i32_0 = arith.constant 0 : i32
    %c0_i32_1 = arith.constant 0 : i32
    return %c0_i32, %c0_i32_0 : i32, i32
  }
  func.func @transform_2(%arg0: i32, %arg1: i32) -> (i32, i32, i32, i32) {
    %c0_i32 = arith.constant 0 : i32
    %c0_i32_0 = arith.constant 0 : i32
    %c0_i32_1 = arith.constant 0 : i32
    return %arg0, %arg1, %c0_i32, %c0_i32_0 : i32, i32, i32, i32
  }
  func.func @transform_3(%arg0: i32, %arg1: i32) -> (i32, i32, i32, i32) {
    %c0_i32 = arith.constant 0 : i32
    %c0_i32_0 = arith.constant 0 : i32
    %c0_i32_1 = arith.constant 0 : i32
    return %arg0, %arg1, %c0_i32, %c0_i32_0 : i32, i32, i32, i32
  }
}

module attributes {stable_mosaic.version = 11 : i64} {
  func.func @_bn_relu_kernel(%arg0: i32, %arg1: i32, %arg2: memref<1x8x16x128xbf16, #tpu.memory_space<vmem>>, %arg3: memref<1x128xf32, #tpu.memory_space<vmem>>, %arg4: memref<1x128xf32, #tpu.memory_space<vmem>>, %arg5: memref<1x8x16x8xf32, #tpu.memory_space<vmem>>) attributes {dimension_semantics = [#tpu.dimension_semantics<parallel>, #tpu.dimension_semantics<parallel>], iteration_bounds = array<i64: 2, 2>, scalar_prefetch = 0 : i64, scratch_operands = 0 : i64, tpu.core_type = #tpu.core_type<tc>, window_params = [{transform_indices = @transform_0, window_bounds = array<i64: 1, 8, 16, 128>}, {pipeline_mode = #tpu.pipeline_mode<synchronous>, transform_indices = @transform_1, window_bounds = array<i64: 1, 128>}, {pipeline_mode = #tpu.pipeline_mode<synchronous>, transform_indices = @transform_2, window_bounds = array<i64: 1, 128>}, {transform_indices = @transform_3, window_bounds = array<i64: 1, 8, 16, 8>}]} {
    %c0 = arith.constant 0 : index
    %c0_0 = arith.constant 0 : index
    %c0_1 = arith.constant 0 : index
    %c0_2 = arith.constant 0 : index
    %0 = vector.load %arg2[%c0, %c0_0, %c0_1, %c0_2] : memref<1x8x16x128xbf16, #tpu.memory_space<vmem>>, vector<1x8x16x8xbf16>
    %1 = arith.extf %0 : vector<1x8x16x8xbf16> to vector<1x8x16x8xf32>
    %c0_3 = arith.constant 0 : index
    %c0_4 = arith.constant 0 : index
    %2 = vector.load %arg3[%c0_3, %c0_4] : memref<1x128xf32, #tpu.memory_space<vmem>>, vector<1x8xf32>
    %3 = vector.shape_cast %2 : vector<1x8xf32> to vector<8xf32>
    %4 = vector.shape_cast %3 : vector<8xf32> to vector<1x1x1x8xf32>
    %c0_5 = arith.constant 0 : index
    %c0_6 = arith.constant 0 : index
    %5 = vector.load %arg4[%c0_5, %c0_6] : memref<1x128xf32, #tpu.memory_space<vmem>>, vector<1x8xf32>
    %6 = vector.shape_cast %5 : vector<1x8xf32> to vector<8xf32>
    %7 = vector.shape_cast %6 : vector<8xf32> to vector<1x1x1x8xf32>
    %8 = vector.broadcast %4 : vector<1x1x1x8xf32> to vector<1x8x16x8xf32>
    %9 = arith.mulf %1, %8 : vector<1x8x16x8xf32>
    %10 = vector.broadcast %7 : vector<1x1x1x8xf32> to vector<1x8x16x8xf32>
    %11 = arith.addf %9, %10 : vector<1x8x16x8xf32>
    %cst = arith.constant 0.000000e+00 : f32
    %12 = vector.broadcast %cst : f32 to vector<1x8x16x8xf32>
    %13 = arith.maximumf %11, %12 : vector<1x8x16x8xf32>
    %c0_7 = arith.constant 0 : index
    %c0_8 = arith.constant 0 : index
    %c0_9 = arith.constant 0 : index
    %c0_10 = arith.constant 0 : index
    %14 = vector.load %arg5[%c0_7, %c0_8, %c0_9, %c0_10] : memref<1x8x16x8xf32, #tpu.memory_space<vmem>>, vector<1x8x16x8xf32>
    tpu.vector_store %arg5[%c0_7, %c0_8, %c0_9, %c0_10], %13 {strides = array<i32>} : memref<1x8x16x8xf32, #tpu.memory_space<vmem>>, vector<1x8x16x8xf32>,
    return
  }
  func.func @transform_0(%arg0: i32, %arg1: i32) -> (i32, i32, i32, i32) {
    %c0_i32 = arith.constant 0 : i32
    %c0_i32_0 = arith.constant 0 : i32
    %c0_i32_1 = arith.constant 0 : i32
    return %arg0, %arg1, %c0_i32, %c0_i32_0 : i32, i32, i32, i32
  }
  func.func @transform_1(%arg0: i32, %arg1: i32) -> (i32, i32) {
    %c0_i32 = arith.constant 0 : i32
    %c0_i32_0 = arith.constant 0 : i32
    %c0_i32_1 = arith.constant 0 : i32
    return %c0_i32, %c0_i32_0 : i32, i32
  }
  func.func @transform_2(%arg0: i32, %arg1: i32) -> (i32, i32) {
    %c0_i32 = arith.constant 0 : i32
    %c0_i32_0 = arith.constant 0 : i32
    %c0_i32_1 = arith.constant 0 : i32
    return %c0_i32, %c0_i32_0 : i32, i32
  }
  func.func @transform_3(%arg0: i32, %arg1: i32) -> (i32, i32, i32, i32) {
    %c0_i32 = arith.constant 0 : i32
    %c0_i32_0 = arith.constant 0 : i32
    %c0_i32_1 = arith.constant 0 : i32
    return %arg0, %arg1, %c0_i32, %c0_i32_0 : i32, i32, i32, i32
  }
}

</mosaic_0001>

<llo_original>
// kernel: conv_block.5
$region0: #{conv_block.5}
  #allocation0 [shape = 'u32[]', space=smem, size = 0x4, offset = 0x4, fixed_abs, tag = 'smem constant byte address 0x4 - core index']
  #allocation1 [shape = 'u32[72,128]{1,0:T(1,128)}', space=vmem, size = 0x9000, scoped, tag = 'internal scratch']
  %s0 = inlined_call_operand.vmem [shape: bf16[2,16,16,128], index: 0, kind: input, shape index: {}]
  %s1 = inlined_call_operand.vmem [shape: f32[1,128], index: 1, kind: input, shape index: {}]
  %s2 = inlined_call_operand.vmem [shape: f32[1,128], index: 2, kind: input, shape index: {}]
  %s3 = inlined_call_operand.vmem [shape: bf16[2,16,16,8], index: 3, kind: output, shape index: {}]
  %s4 = sld [smem:[#allocation0]]
  $region45: #{conv_block.5} parent=0
    _
  %s6 = ssub.s32 1, %s4
  %s7 = scalar_select 0, %s6, %s4
  loop: start=0, step=1, limit=6
  $region2: #{conv_block.5} parent=0 // loop_pre_header
    _
  $region3: #{conv_block.5} parent=0 // loop_header
    %s9 = sphi 0, %s13
    %p10 = scmp.ge.s32.totalorder %s9, 6
    %s16 = sphi 0, %s28
    %s17 = sphi 0, %s24
    %s18 = sphi 0, %s16
    %s19 = sphi 0, %s17
    %s20 = sphi 0, %s18
    %s21 = sphi 0, %s19
    %s33 = sphi 0, %s35
    %s36 = sphi 0, %s33
    %s37 = sphi 0, %s36
    %s53 = sphi 0, %s37
    %s57 = sphi 0, %s57
    %s59 = sphi 0, %s57
    %s60 = sphi 0, %s59
    %s74 = sphi 0, %s60
    %s78 = sphi 0, %s78
    %s80 = sphi 0, %s78
    %s81 = sphi 0, %s80
    %s95 = sphi 0, %s81
    %s103 = sphi 0, %s105
    %s106 = sphi 0, %s103
    %s107 = sphi 0, %s106
    %s123 = sphi 0, %s107
  $region4: #{conv_block.5} parent=0 // loop_header_branch
    %12 = sbr.rel (%p10) target = $region8
  $region5: #{conv_block.5} parent=0 // loop_body
    %s14 = ssub.s32 %s9, 1
    %s15 = ssub.s32 %s9, 2
    %s22 = sadd.s32 1, %s17
    %p23 = scmp.ge.s32.totalorder %s22, 2
    %s24 = scalar_select %p23, 0, %s22
    %s25 = sadd.s32 1, %s16
    %s26 = scalar_select %p23, %s25, %s16
    %p27 = scmp.ge.s32.totalorder %s26, 2
    %s28 = scalar_select %p27, 0, %s26
    %s29 = ssub.s32 %s16, %s28
    %s30 = ssub.s32 %s17, %s24
    %s31 = sor.u32 %s29, %s30
    %p32 = scmp.eq.s32.totalorder %s31, 0
    %s34 = sadd.s32 %s33, 1
    %s35 = scalar_select %p32, %s33, %s34
    %p38 = pneg %p32
    %p39 = scmp.eq.s32.totalorder %s9, 3
    %p40 = por %p38, %p39
    %p41 = scmp.ne.s32.totalorder %s33, %s36
    %p42 = scmp.eq.s32.totalorder %s9, 0
    %p43 = por %p41, %p42
    %p44 = scmp.ne.s32.totalorder %s33, %s36
    %p45 = scmp.eq.s32.totalorder %s14, 3
    %p46 = por %p44, %p45
    %p47 = scmp.ne.s32.totalorder %s36, %s37
    %p48 = scmp.eq.s32.totalorder %s14, 0
    %p49 = por %p47, %p48
    %p50 = scmp.ne.s32.totalorder %s36, %s37
    %p51 = scmp.eq.s32.totalorder %s15, 3
    %p52 = por %p50, %p51
    %p54 = scmp.ne.s32.totalorder %s37, %s53
    %p55 = scmp.eq.s32.totalorder %s15, 0
    %p56 = por %p54, %p55
    %s58 = sadd.s32 %s57, 1
    %p61 = scmp.eq.s32.totalorder %s9, 3
    %p62 = scmp.ne.s32.totalorder %s57, %s59
    %p63 = scmp.eq.s32.totalorder %s9, 0
    %p64 = por %p62, %p63
    %p65 = scmp.ne.s32.totalorder %s57, %s59
    %p66 = scmp.eq.s32.totalorder %s14, 3
    %p67 = por %p65, %p66
    %p68 = scmp.ne.s32.totalorder %s59, %s60
    %p69 = scmp.eq.s32.totalorder %s14, 0
    %p70 = por %p68, %p69
    %p71 = scmp.ne.s32.totalorder %s59, %s60
    %p72 = scmp.eq.s32.totalorder %s15, 3
    %p73 = por %p71, %p72
    %p75 = scmp.ne.s32.totalorder %s60, %s74
    %p76 = scmp.eq.s32.totalorder %s15, 0
    %p77 = por %p75, %p76
    %s79 = sadd.s32 %s78, 1
    %p82 = scmp.eq.s32.totalorder %s9, 3
    %p83 = scmp.ne.s32.totalorder %s78, %s80
    %p84 = scmp.eq.s32.totalorder %s9, 0
    %p85 = por %p83, %p84
    %p86 = scmp.ne.s32.totalorder %s78, %s80
    %p87 = scmp.eq.s32.totalorder %s14, 3
    %p88 = por %p86, %p87
    %p89 = scmp.ne.s32.totalorder %s80, %s81
    %p90 = scmp.eq.s32.totalorder %s14, 0
    %p91 = por %p89, %p90
    %p92 = scmp.ne.s32.totalorder %s80, %s81
    %p93 = scmp.eq.s32.totalorder %s15, 3
    %p94 = por %p92, %p93
    %p96 = scmp.ne.s32.totalorder %s81, %s95
    %p97 = scmp.eq.s32.totalorder %s15, 0
    %p98 = por %p96, %p97
    %s99 = ssub.s32 %s16, %s28
    %s100 = ssub.s32 %s17, %s24
    %s101 = sor.u32 %s99, %s100
    %p102 = scmp.eq.s32.totalorder %s101, 0
    %s104 = sadd.s32 %s103, 1
    %s105 = scalar_select %p102, %s103, %s104
    %p108 = pneg %p102
    %p109 = scmp.eq.s32.totalorder %s9, 3
    %p110 = por %p108, %p109
    %p111 = scmp.ne.s32.totalorder %s103, %s106
    %p112 = scmp.eq.s32.totalorder %s9, 0
    %p113 = por %p111, %p112
    %p114 = scmp.ne.s32.totalorder %s103, %s106
    %p115 = scmp.eq.s32.totalorder %s14, 3
    %p116 = por %p114, %p115
    %p117 = scmp.ne.s32.totalorder %s106, %s107
    %p118 = scmp.eq.s32.totalorder %s14, 0
    %p119 = por %p117, %p118
    %p120 = scmp.ne.s32.totalorder %s106, %s107
    %p121 = scmp.eq.s32.totalorder %s15, 3
    %p122 = por %p120, %p121
    %p124 = scmp.ne.s32.totalorder %s107, %s123
    %p125 = scmp.eq.s32.totalorder %s15, 0
    %p126 = por %p124, %p125
    %p127 = scmp.le.s32.totalorder 1, %s9
    %p128 = scmp.lt.s32.totalorder %s9, 5
    %p129 = pnand %p127, %p128
    %p130 = pneg %p129
    // Predicated region
    $region9: #{conv_block.5} parent=5 // pred_check
      _
    $region10: #{conv_block.5} parent=5 // pred_check_branch
      %132 = sbr.rel (%p129) target = $region12
    $region11: #{conv_block.5} parent=5 // pred_region
      %s133 = ssub.s32 %s9, 1
      // Predicated region
      $region13: #{conv_block.5} parent=11 // pred_check
        %p134 = pneg %p70
      $region14: #{conv_block.5} parent=11 // pred_check_branch
        %136 = sbr.rel (%p134) target = $region16
      $region15: #{conv_block.5} parent=11 // pred_region
        _
      $region16: #{conv_block.5} parent=11 // pred_fallthru
        _
      // Predicated region
      $region17: #{conv_block.5} parent=11 // pred_check
        %p137 = pneg %p91
      $region18: #{conv_block.5} parent=11 // pred_check_branch
        %139 = sbr.rel (%p137) target = $region20
      $region19: #{conv_block.5} parent=11 // pred_region
        _
      $region20: #{conv_block.5} parent=11 // pred_fallthru
        _
    $region12: #{conv_block.5} parent=5 // pred_fallthru
      _
    %p140 = scmp.lt.s32.totalorder %s9, 4
    // Predicated region
    $region21: #{conv_block.5} parent=5 // pred_check
      %p141 = pneg %p140
    $region22: #{conv_block.5} parent=5 // pred_check_branch
      %143 = sbr.rel (%p141) target = $region24
    $region23: #{conv_block.5} parent=5 // pred_region
      // Predicated region
      $region25: #{conv_block.5} parent=23 // pred_check
        %p144 = pneg %p43
      $region26: #{conv_block.5} parent=23 // pred_check_branch
        %146 = sbr.rel (%p144) target = $region28
      $region27: #{conv_block.5} parent=23 // pred_region
        %s147 = smul.u32 8, %s17
        %p148 = scmp.lt.s32.totalorder %s16, 1
        %s149 = scalar_select %p148, %s16, 1
        %p150 = scmp.lt.s32.totalorder %s147, 15
        %s151 = scalar_select %p150, %s147, 15
        %s152 = smul.addr %s151, 2
        %s153 = smul.addr %s149, 32
        %s154 = sadd.s32 %s152, %s153
        %s155 = smul.addr %s154, 4
        %s156 = scalar_lea.vmem %s0, %s155
        %s157 = smul.u32 8, %s17
      $region28: #{conv_block.5} parent=23 // pred_fallthru
        _
    $region24: #{conv_block.5} parent=5 // pred_fallthru
      _
    %p158 = scmp.le.s32.totalorder 1, %s9
    %p159 = scmp.lt.s32.totalorder %s9, 5
    %p160 = pnand %p158, %p159
    %p161 = pneg %p160
    // Predicated region
    $region29: #{conv_block.5} parent=5 // pred_check
      _
    $region30: #{conv_block.5} parent=5 // pred_check_branch
      %163 = sbr.rel (%p160) target = $region32
    $region31: #{conv_block.5} parent=5 // pred_region
      %s164 = ssub.s32 %s9, 1
      %s165 = smul.u32 8, %s19
      %p166 = scmp.lt.s32.totalorder %s18, 1
      %s167 = scalar_select %p166, %s18, 1
      %p168 = scmp.lt.s32.totalorder %s165, 15
      %s169 = scalar_select %p168, %s165, 15
      %s170 = smul.addr %s169, 2
      %s171 = smul.addr %s167, 32
      %s172 = sadd.s32 %s170, %s171
      %s173 = smul.addr %s172, 4
      %s174 = scalar_lea.vmem %s0, %s173
      %p175 = pneg %p49
      %p176 = pneg %p46
      %p177 = pneg %p70
      %p178 = pneg %p67
      %p179 = pneg %p91
      %p180 = pneg %p88
      %p181 = pneg %p119
      %p182 = pneg %p116
      %s183 = smul.u32 8, %s19
      %p184 = scmp.lt.s32.totalorder %s18, 1
      %s185 = scalar_select %p184, %s18, 1
      %p186 = scmp.lt.s32.totalorder %s183, 15
      %s187 = scalar_select %p186, %s183, 15
      %s188 = smul.addr %s187, 2
      %s189 = smul.addr %s185, 32
      %s190 = sadd.s32 %s188, %s189
      %s191 = smul.addr %s190, 4
      %s192 = scalar_lea.vmem %s3, %s191
      %s193 = smul.u32 8, %s19
      %p194 = scmp.lt.s32.totalorder %s18, 1
      %s195 = scalar_select %p194, %s18, 1
      %p196 = scmp.lt.s32.totalorder %s193, 15
      %s197 = scalar_select %p196, %s193, 15
      %s198 = smul.addr %s197, 2
      %s199 = smul.addr %s195, 32
      %s200 = sadd.s32 %s198, %s199
      %s201 = smul.addr %s200, 4
      %s202 = scalar_lea.vmem %s0, %s201
      %s203 = smul.u32 8, %s19
      %s204 = smul.u32 8, %s19
      %p205 = scmp.lt.s32.totalorder %s18, 1
      %s206 = scalar_select %p205, %s18, 1
      %p207 = scmp.lt.s32.totalorder %s204, 15
      %s208 = scalar_select %p207, %s204, 15
      %s209 = smul.addr %s208, 2
      %s210 = smul.addr %s206, 32
      %s211 = sadd.s32 %s209, %s210
      %s212 = smul.addr %s211, 4
      %s213 = scalar_lea.vmem %s3, %s212
      %s214 = smul.u32 8, %s19
      %v215 = vld [vmem:[%s202] sm:$0xf]
      %v216 = vld [vmem:[%s202 + $0x4] sm:$0xf]
      %v217 = vld [vmem:[%s202 + $0x8] sm:$0xf]
      %v218 = vld [vmem:[%s202 + $0xc] sm:$0xf]
      %v219 = vld [vmem:[%s202 + $0x10] sm:$0xf]
      %v220 = vld [vmem:[%s202 + $0x14] sm:$0xf]
      %v221 = vld [vmem:[%s202 + $0x18] sm:$0xf]
      %v222 = vld [vmem:[%s202 + $0x1c] sm:$0xf]
      %v223 = vld [vmem:[%s202 + $0x20] sm:$0xf]
      %v224 = vld [vmem:[%s202 + $0x24] sm:$0xf]
      %v225 = vld [vmem:[%s202 + $0x28] sm:$0xf]
      %v226 = vld [vmem:[%s202 + $0x2c] sm:$0xf]
      %v227 = vld [vmem:[%s202 + $0x30] sm:$0xf]
      %v228 = vld [vmem:[%s202 + $0x34] sm:$0xf]
      %v229 = vld [vmem:[%s202 + $0x38] sm:$0xf]
      %v230 = vld [vmem:[%s202 + $0x3c] sm:$0xf]
      %v231 = vunpack.c.l.bf16 %v215
      %v232 = vunpack.c.l.bf16 %v216
      %v233 = vunpack.c.l.bf16 %v217
      %v234 = vunpack.c.l.bf16 %v218
      %v235 = vunpack.c.l.bf16 %v219
      %v236 = vunpack.c.l.bf16 %v220
      %v237 = vunpack.c.l.bf16 %v221
      %v238 = vunpack.c.l.bf16 %v222
      %v239 = vunpack.c.l.bf16 %v223
      %v240 = vunpack.c.l.bf16 %v224
      %v241 = vunpack.c.l.bf16 %v225
      %v242 = vunpack.c.l.bf16 %v226
      %v243 = vunpack.c.l.bf16 %v227
      %v244 = vunpack.c.l.bf16 %v228
      %v245 = vunpack.c.l.bf16 %v229
      %v246 = vunpack.c.l.bf16 %v230
      %v247 = vld [vmem:[%s1] sm:$0x1]
      %v248 = vld [vmem:[%s2] sm:$0x1]
      %v250 = vperm.slane %v247, 0
      %v252 = vmul.f32 %v231, %v250
      %v253 = vmul.f32 %v232, %v250
      %v254 = vmul.f32 %v233, %v250
      %v255 = vmul.f32 %v234, %v250
      %v256 = vmul.f32 %v235, %v250
      %v257 = vmul.f32 %v236, %v250
      %v258 = vmul.f32 %v237, %v250
      %v259 = vmul.f32 %v238, %v250
      %v260 = vmul.f32 %v239, %v250
      %v261 = vmul.f32 %v240, %v250
      %v262 = vmul.f32 %v241, %v250
      %v263 = vmul.f32 %v242, %v250
      %v264 = vmul.f32 %v243, %v250
      %v265 = vmul.f32 %v244, %v250
      %v266 = vmul.f32 %v245, %v250
      %v267 = vmul.f32 %v246, %v250
      %v269 = vperm.slane %v248, 0
      %v271 = vadd.f32 %v252, %v269
      %v272 = vadd.f32 %v253, %v269
      %v273 = vadd.f32 %v254, %v269
      %v274 = vadd.f32 %v255, %v269
      %v275 = vadd.f32 %v256, %v269
      %v276 = vadd.f32 %v257, %v269
      %v277 = vadd.f32 %v258, %v269
      %v278 = vadd.f32 %v259, %v269
      %v279 = vadd.f32 %v260, %v269
      %v280 = vadd.f32 %v261, %v269
      %v281 = vadd.f32 %v262, %v269
      %v282 = vadd.f32 %v263, %v269
      %v283 = vadd.f32 %v264, %v269
      %v284 = vadd.f32 %v265, %v269
      %v285 = vadd.f32 %v266, %v269
      %v286 = vadd.f32 %v267, %v269
      %v287 = vmax.f32 %v271, 0.0
      %v288 = vmax.f32 %v272, 0.0
      %v289 = vmax.f32 %v273, 0.0
      %v290 = vmax.f32 %v274, 0.0
      %v291 = vmax.f32 %v275, 0.0
      %v292 = vmax.f32 %v276, 0.0
      %v293 = vmax.f32 %v277, 0.0
      %v294 = vmax.f32 %v278, 0.0
      %v295 = vmax.f32 %v279, 0.0
      %v296 = vmax.f32 %v280, 0.0
      %v297 = vmax.f32 %v281, 0.0
      %v298 = vmax.f32 %v282, 0.0
      %v299 = vmax.f32 %v283, 0.0
      %v300 = vmax.f32 %v284, 0.0
      %v301 = vmax.f32 %v285, 0.0
      %v302 = vmax.f32 %v286, 0.0
      %v303 = vpack.c.bf16 %v287, %v287
      %v304 = vpack.c.bf16 %v288, %v288
      %v305 = vpack.c.bf16 %v289, %v289
      %v306 = vpack.c.bf16 %v290, %v290
      %v307 = vpack.c.bf16 %v291, %v291
      %v308 = vpack.c.bf16 %v292, %v292
      %v309 = vpack.c.bf16 %v293, %v293
      %v310 = vpack.c.bf16 %v294, %v294
      %v311 = vpack.c.bf16 %v295, %v295
      %v312 = vpack.c.bf16 %v296, %v296
      %v313 = vpack.c.bf16 %v297, %v297
      %v314 = vpack.c.bf16 %v298, %v298
      %v315 = vpack.c.bf16 %v299, %v299
      %v316 = vpack.c.bf16 %v300, %v300
      %v317 = vpack.c.bf16 %v301, %v301
      %v318 = vpack.c.bf16 %v302, %v302
      %vm319 = vcmask 60416
      %320 = vst.msk [vmem:[%s213] sm:$0xf] %vm319, %v303
      %321 = vst.msk [vmem:[%s213 + $0x4] sm:$0xf] %vm319, %v304
      %322 = vst.msk [vmem:[%s213 + $0x8] sm:$0xf] %vm319, %v305
      %323 = vst.msk [vmem:[%s213 + $0xc] sm:$0xf] %vm319, %v306
      %324 = vst.msk [vmem:[%s213 + $0x10] sm:$0xf] %vm319, %v307
      %325 = vst.msk [vmem:[%s213 + $0x14] sm:$0xf] %vm319, %v308
      %326 = vst.msk [vmem:[%s213 + $0x18] sm:$0xf] %vm319, %v309
      %327 = vst.msk [vmem:[%s213 + $0x1c] sm:$0xf] %vm319, %v310
      %328 = vst.msk [vmem:[%s213 + $0x20] sm:$0xf] %vm319, %v311
      %329 = vst.msk [vmem:[%s213 + $0x24] sm:$0xf] %vm319, %v312
      %330 = vst.msk [vmem:[%s213 + $0x28] sm:$0xf] %vm319, %v313
      %331 = vst.msk [vmem:[%s213 + $0x2c] sm:$0xf] %vm319, %v314
      %332 = vst.msk [vmem:[%s213 + $0x30] sm:$0xf] %vm319, %v315
      %333 = vst.msk [vmem:[%s213 + $0x34] sm:$0xf] %vm319, %v316
      %334 = vst.msk [vmem:[%s213 + $0x38] sm:$0xf] %vm319, %v317
      %335 = vst.msk [vmem:[%s213 + $0x3c] sm:$0xf] %vm319, %v318
      %s336 = smul.u32 8, %s19
      %p337 = scmp.lt.s32.totalorder %s18, 1
      %s338 = scalar_select %p337, %s18, 1
      %p339 = scmp.lt.s32.totalorder %s336, 15
      %s340 = scalar_select %p339, %s336, 15
      %s341 = smul.addr %s340, 2
      %s342 = smul.addr %s338, 32
      %s343 = sadd.s32 %s341, %s342
      %s344 = smul.addr %s343, 4
      %s345 = scalar_lea.vmem %s3, %s344
      // Predicated region
      $region33: #{conv_block.5} parent=31 // pred_check
        %p346 = pneg %p116
      $region34: #{conv_block.5} parent=31 // pred_check_branch
        %348 = sbr.rel (%p346) target = $region36
      $region35: #{conv_block.5} parent=31 // pred_region
        %s349 = smul.u32 8, %s19
      $region36: #{conv_block.5} parent=31 // pred_fallthru
        _
    $region32: #{conv_block.5} parent=5 // pred_fallthru
      _
    %p350 = scmp.le.s32.totalorder 2, %s9
    // Predicated region
    $region37: #{conv_block.5} parent=5 // pred_check
      %p351 = pneg %p350
    $region38: #{conv_block.5} parent=5 // pred_check_branch
      %353 = sbr.rel (%p351) target = $region40
    $region39: #{conv_block.5} parent=5 // pred_region
      %s354 = ssub.s32 %s9, 2
      // Predicated region
      $region41: #{conv_block.5} parent=39 // pred_check
        %p355 = pneg %p122
      $region42: #{conv_block.5} parent=39 // pred_check_branch
        %357 = sbr.rel (%p355) target = $region44
      $region43: #{conv_block.5} parent=39 // pred_region
        %s358 = smul.u32 8, %s21
        %p359 = scmp.lt.s32.totalorder %s20, 1
        %s360 = scalar_select %p359, %s20, 1
        %p361 = scmp.lt.s32.totalorder %s358, 15
        %s362 = scalar_select %p361, %s358, 15
        %s363 = smul.addr %s362, 2
        %s364 = smul.addr %s360, 32
        %s365 = sadd.s32 %s363, %s364
        %s366 = smul.addr %s365, 4
        %s367 = scalar_lea.vmem %s3, %s366
      $region44: #{conv_block.5} parent=39 // pred_fallthru
        _
    $region40: #{conv_block.5} parent=5 // pred_fallthru
      _
  $region6: #{conv_block.5} parent=0 // loop_footer
    %s13 = sadd.s32 1, %s9
  $region7: #{conv_block.5} parent=0 // loop_footer_branch
    %8 = sbr.rel target = $region3
  $region8: #{conv_block.5} parent=0 // loop_exit
    _

// kernel: conv_block.7
$region0: #{conv_block.7}
  #allocation0 [shape = 'u32[]', space=smem, size = 0x4, offset = 0x4, fixed_abs, tag = 'smem constant byte address 0x4 - core index']
  #allocation1 [shape = 'u32[72,128]{1,0:T(1,128)}', space=vmem, size = 0x9000, scoped, tag = 'internal scratch']
  %s0 = inlined_call_operand.vmem [shape: bf16[2,16,16,128], index: 0, kind: input, shape index: {}]
  %s1 = inlined_call_operand.vmem [shape: f32[1,128], index: 1, kind: input, shape index: {}]
  %s2 = inlined_call_operand.vmem [shape: f32[1,128], index: 2, kind: input, shape index: {}]
  %s3 = inlined_call_operand.vmem [shape: f32[2,16,16,8], index: 3, kind: output, shape index: {}]
  %s4 = sld [smem:[#allocation0]]
  $region45: #{conv_block.7} parent=0
    _
  %s6 = ssub.s32 1, %s4
  %s7 = scalar_select 0, %s6, %s4
  loop: start=0, step=1, limit=6
  $region2: #{conv_block.7} parent=0 // loop_pre_header
    _
  $region3: #{conv_block.7} parent=0 // loop_header
    %s9 = sphi 0, %s13
    %p10 = scmp.ge.s32.totalorder %s9, 6
    %s16 = sphi 0, %s28
    %s17 = sphi 0, %s24
    %s18 = sphi 0, %s16
    %s19 = sphi 0, %s17
    %s20 = sphi 0, %s18
    %s21 = sphi 0, %s19
    %s33 = sphi 0, %s35
    %s36 = sphi 0, %s33
    %s37 = sphi 0, %s36
    %s53 = sphi 0, %s37
    %s57 = sphi 0, %s57
    %s59 = sphi 0, %s57
    %s60 = sphi 0, %s59
    %s74 = sphi 0, %s60
    %s78 = sphi 0, %s78
    %s80 = sphi 0, %s78
    %s81 = sphi 0, %s80
    %s95 = sphi 0, %s81
    %s103 = sphi 0, %s105
    %s106 = sphi 0, %s103
    %s107 = sphi 0, %s106
    %s123 = sphi 0, %s107
  $region4: #{conv_block.7} parent=0 // loop_header_branch
    %12 = sbr.rel (%p10) target = $region8
  $region5: #{conv_block.7} parent=0 // loop_body
    %s14 = ssub.s32 %s9, 1
    %s15 = ssub.s32 %s9, 2
    %s22 = sadd.s32 1, %s17
    %p23 = scmp.ge.s32.totalorder %s22, 2
    %s24 = scalar_select %p23, 0, %s22
    %s25 = sadd.s32 1, %s16
    %s26 = scalar_select %p23, %s25, %s16
    %p27 = scmp.ge.s32.totalorder %s26, 2
    %s28 = scalar_select %p27, 0, %s26
    %s29 = ssub.s32 %s16, %s28
    %s30 = ssub.s32 %s17, %s24
    %s31 = sor.u32 %s29, %s30
    %p32 = scmp.eq.s32.totalorder %s31, 0
    %s34 = sadd.s32 %s33, 1
    %s35 = scalar_select %p32, %s33, %s34
    %p38 = pneg %p32
    %p39 = scmp.eq.s32.totalorder %s9, 3
    %p40 = por %p38, %p39
    %p41 = scmp.ne.s32.totalorder %s33, %s36
    %p42 = scmp.eq.s32.totalorder %s9, 0
    %p43 = por %p41, %p42
    %p44 = scmp.ne.s32.totalorder %s33, %s36
    %p45 = scmp.eq.s32.totalorder %s14, 3
    %p46 = por %p44, %p45
    %p47 = scmp.ne.s32.totalorder %s36, %s37
    %p48 = scmp.eq.s32.totalorder %s14, 0
    %p49 = por %p47, %p48
    %p50 = scmp.ne.s32.totalorder %s36, %s37
    %p51 = scmp.eq.s32.totalorder %s15, 3
    %p52 = por %p50, %p51
    %p54 = scmp.ne.s32.totalorder %s37, %s53
    %p55 = scmp.eq.s32.totalorder %s15, 0
    %p56 = por %p54, %p55
    %s58 = sadd.s32 %s57, 1
    %p61 = scmp.eq.s32.totalorder %s9, 3
    %p62 = scmp.ne.s32.totalorder %s57, %s59
    %p63 = scmp.eq.s32.totalorder %s9, 0
    %p64 = por %p62, %p63
    %p65 = scmp.ne.s32.totalorder %s57, %s59
    %p66 = scmp.eq.s32.totalorder %s14, 3
    %p67 = por %p65, %p66
    %p68 = scmp.ne.s32.totalorder %s59, %s60
    %p69 = scmp.eq.s32.totalorder %s14, 0
    %p70 = por %p68, %p69
    %p71 = scmp.ne.s32.totalorder %s59, %s60
    %p72 = scmp.eq.s32.totalorder %s15, 3
    %p73 = por %p71, %p72
    %p75 = scmp.ne.s32.totalorder %s60, %s74
    %p76 = scmp.eq.s32.totalorder %s15, 0
    %p77 = por %p75, %p76
    %s79 = sadd.s32 %s78, 1
    %p82 = scmp.eq.s32.totalorder %s9, 3
    %p83 = scmp.ne.s32.totalorder %s78, %s80
    %p84 = scmp.eq.s32.totalorder %s9, 0
    %p85 = por %p83, %p84
    %p86 = scmp.ne.s32.totalorder %s78, %s80
    %p87 = scmp.eq.s32.totalorder %s14, 3
    %p88 = por %p86, %p87
    %p89 = scmp.ne.s32.totalorder %s80, %s81
    %p90 = scmp.eq.s32.totalorder %s14, 0
    %p91 = por %p89, %p90
    %p92 = scmp.ne.s32.totalorder %s80, %s81
    %p93 = scmp.eq.s32.totalorder %s15, 3
    %p94 = por %p92, %p93
    %p96 = scmp.ne.s32.totalorder %s81, %s95
    %p97 = scmp.eq.s32.totalorder %s15, 0
    %p98 = por %p96, %p97
    %s99 = ssub.s32 %s16, %s28
    %s100 = ssub.s32 %s17, %s24
    %s101 = sor.u32 %s99, %s100
    %p102 = scmp.eq.s32.totalorder %s101, 0
    %s104 = sadd.s32 %s103, 1
    %s105 = scalar_select %p102, %s103, %s104
    %p108 = pneg %p102
    %p109 = scmp.eq.s32.totalorder %s9, 3
    %p110 = por %p108, %p109
    %p111 = scmp.ne.s32.totalorder %s103, %s106
    %p112 = scmp.eq.s32.totalorder %s9, 0
    %p113 = por %p111, %p112
    %p114 = scmp.ne.s32.totalorder %s103, %s106
    %p115 = scmp.eq.s32.totalorder %s14, 3
    %p116 = por %p114, %p115
    %p117 = scmp.ne.s32.totalorder %s106, %s107
    %p118 = scmp.eq.s32.totalorder %s14, 0
    %p119 = por %p117, %p118
    %p120 = scmp.ne.s32.totalorder %s106, %s107
    %p121 = scmp.eq.s32.totalorder %s15, 3
    %p122 = por %p120, %p121
    %p124 = scmp.ne.s32.totalorder %s107, %s123
    %p125 = scmp.eq.s32.totalorder %s15, 0
    %p126 = por %p124, %p125
    %p127 = scmp.le.s32.totalorder 1, %s9
    %p128 = scmp.lt.s32.totalorder %s9, 5
    %p129 = pnand %p127, %p128
    %p130 = pneg %p129
    // Predicated region
    $region9: #{conv_block.7} parent=5 // pred_check
      _
    $region10: #{conv_block.7} parent=5 // pred_check_branch
      %132 = sbr.rel (%p129) target = $region12
    $region11: #{conv_block.7} parent=5 // pred_region
      %s133 = ssub.s32 %s9, 1
      // Predicated region
      $region13: #{conv_block.7} parent=11 // pred_check
        %p134 = pneg %p70
      $region14: #{conv_block.7} parent=11 // pred_check_branch
        %136 = sbr.rel (%p134) target = $region16
      $region15: #{conv_block.7} parent=11 // pred_region
        _
      $region16: #{conv_block.7} parent=11 // pred_fallthru
        _
      // Predicated region
      $region17: #{conv_block.7} parent=11 // pred_check
        %p137 = pneg %p91
      $region18: #{conv_block.7} parent=11 // pred_check_branch
        %139 = sbr.rel (%p137) target = $region20
      $region19: #{conv_block.7} parent=11 // pred_region
        _
      $region20: #{conv_block.7} parent=11 // pred_fallthru
        _
    $region12: #{conv_block.7} parent=5 // pred_fallthru
      _
    %p140 = scmp.lt.s32.totalorder %s9, 4
    // Predicated region
    $region21: #{conv_block.7} parent=5 // pred_check
      %p141 = pneg %p140
    $region22: #{conv_block.7} parent=5 // pred_check_branch
      %143 = sbr.rel (%p141) target = $region24
    $region23: #{conv_block.7} parent=5 // pred_region
      // Predicated region
      $region25: #{conv_block.7} parent=23 // pred_check
        %p144 = pneg %p43
      $region26: #{conv_block.7} parent=23 // pred_check_branch
        %146 = sbr.rel (%p144) target = $region28
      $region27: #{conv_block.7} parent=23 // pred_region
        %s147 = smul.u32 8, %s17
        %p148 = scmp.lt.s32.totalorder %s16, 1
        %s149 = scalar_select %p148, %s16, 1
        %p150 = scmp.lt.s32.totalorder %s147, 15
        %s151 = scalar_select %p150, %s147, 15
        %s152 = smul.addr %s151, 2
        %s153 = smul.addr %s149, 32
        %s154 = sadd.s32 %s152, %s153
        %s155 = smul.addr %s154, 4
        %s156 = scalar_lea.vmem %s0, %s155
        %s157 = smul.u32 8, %s17
      $region28: #{conv_block.7} parent=23 // pred_fallthru
        _
    $region24: #{conv_block.7} parent=5 // pred_fallthru
      _
    %p158 = scmp.le.s32.totalorder 1, %s9
    %p159 = scmp.lt.s32.totalorder %s9, 5
    %p160 = pnand %p158, %p159
    %p161 = pneg %p160
    // Predicated region
    $region29: #{conv_block.7} parent=5 // pred_check
      _
    $region30: #{conv_block.7} parent=5 // pred_check_branch
      %163 = sbr.rel (%p160) target = $region32
    $region31: #{conv_block.7} parent=5 // pred_region
      %s164 = ssub.s32 %s9, 1
      %s165 = smul.u32 8, %s19
      %p166 = scmp.lt.s32.totalorder %s18, 1
      %s167 = scalar_select %p166, %s18, 1
      %p168 = scmp.lt.s32.totalorder %s165, 15
      %s169 = scalar_select %p168, %s165, 15
      %s170 = smul.addr %s169, 2
      %s171 = smul.addr %s167, 32
      %s172 = sadd.s32 %s170, %s171
      %s173 = smul.addr %s172, 4
      %s174 = scalar_lea.vmem %s0, %s173
      %p175 = pneg %p49
      %p176 = pneg %p46
      %p177 = pneg %p70
      %p178 = pneg %p67
      %p179 = pneg %p91
      %p180 = pneg %p88
      %p181 = pneg %p119
      %p182 = pneg %p116
      %s183 = smul.u32 8, %s19
      %p184 = scmp.lt.s32.totalorder %s18, 1
      %s185 = scalar_select %p184, %s18, 1
      %p186 = scmp.lt.s32.totalorder %s183, 15
      %s187 = scalar_select %p186, %s183, 15
      %s188 = smul.addr %s187, 2
      %s189 = smul.addr %s185, 32
      %s190 = sadd.s32 %s188, %s189
      %s191 = smul.addr %s190, 8
      %s192 = scalar_lea.vmem %s3, %s191
      %s193 = smul.u32 8, %s19
      %p194 = scmp.lt.s32.totalorder %s18, 1
      %s195 = scalar_select %p194, %s18, 1
      %p196 = scmp.lt.s32.totalorder %s193, 15
      %s197 = scalar_select %p196, %s193, 15
      %s198 = smul.addr %s197, 2
      %s199 = smul.addr %s195, 32
      %s200 = sadd.s32 %s198, %s199
      %s201 = smul.addr %s200, 4
      %s202 = scalar_lea.vmem %s0, %s201
      %s203 = smul.u32 8, %s19
      %s204 = smul.u32 8, %s19
      %p205 = scmp.lt.s32.totalorder %s18, 1
      %s206 = scalar_select %p205, %s18, 1
      %p207 = scmp.lt.s32.totalorder %s204, 15
      %s208 = scalar_select %p207, %s204, 15
      %s209 = smul.addr %s208, 2
      %s210 = smul.addr %s206, 32
      %s211 = sadd.s32 %s209, %s210
      %s212 = smul.addr %s211, 8
      %s213 = scalar_lea.vmem %s3, %s212
      %s214 = smul.u32 8, %s19
      %v215 = vld [vmem:[%s202] sm:$0xf]
      %v216 = vld [vmem:[%s202 + $0x4] sm:$0xf]
      %v217 = vld [vmem:[%s202 + $0x8] sm:$0xf]
      %v218 = vld [vmem:[%s202 + $0xc] sm:$0xf]
      %v219 = vld [vmem:[%s202 + $0x10] sm:$0xf]
      %v220 = vld [vmem:[%s202 + $0x14] sm:$0xf]
      %v221 = vld [vmem:[%s202 + $0x18] sm:$0xf]
      %v222 = vld [vmem:[%s202 + $0x1c] sm:$0xf]
      %v223 = vld [vmem:[%s202 + $0x20] sm:$0xf]
      %v224 = vld [vmem:[%s202 + $0x24] sm:$0xf]
      %v225 = vld [vmem:[%s202 + $0x28] sm:$0xf]
      %v226 = vld [vmem:[%s202 + $0x2c] sm:$0xf]
      %v227 = vld [vmem:[%s202 + $0x30] sm:$0xf]
      %v228 = vld [vmem:[%s202 + $0x34] sm:$0xf]
      %v229 = vld [vmem:[%s202 + $0x38] sm:$0xf]
      %v230 = vld [vmem:[%s202 + $0x3c] sm:$0xf]
      %v231 = vunpack.c.l.bf16 %v215
      %v232 = vunpack.c.l.bf16 %v216
      %v233 = vunpack.c.l.bf16 %v217
      %v234 = vunpack.c.l.bf16 %v218
      %v235 = vunpack.c.l.bf16 %v219
      %v236 = vunpack.c.l.bf16 %v220
      %v237 = vunpack.c.l.bf16 %v221
      %v238 = vunpack.c.l.bf16 %v222
      %v239 = vunpack.c.l.bf16 %v223
      %v240 = vunpack.c.l.bf16 %v224
      %v241 = vunpack.c.l.bf16 %v225
      %v242 = vunpack.c.l.bf16 %v226
      %v243 = vunpack.c.l.bf16 %v227
      %v244 = vunpack.c.l.bf16 %v228
      %v245 = vunpack.c.l.bf16 %v229
      %v246 = vunpack.c.l.bf16 %v230
      %v247 = vld [vmem:[%s1] sm:$0x1]
      %v248 = vld [vmem:[%s2] sm:$0x1]
      %v250 = vperm.slane %v247, 0
      %v252 = vmul.f32 %v231, %v250
      %v253 = vmul.f32 %v232, %v250
      %v254 = vmul.f32 %v233, %v250
      %v255 = vmul.f32 %v234, %v250
      %v256 = vmul.f32 %v235, %v250
      %v257 = vmul.f32 %v236, %v250
      %v258 = vmul.f32 %v237, %v250
      %v259 = vmul.f32 %v238, %v250
      %v260 = vmul.f32 %v239, %v250
      %v261 = vmul.f32 %v240, %v250
      %v262 = vmul.f32 %v241, %v250
      %v263 = vmul.f32 %v242, %v250
      %v264 = vmul.f32 %v243, %v250
      %v265 = vmul.f32 %v244, %v250
      %v266 = vmul.f32 %v245, %v250
      %v267 = vmul.f32 %v246, %v250
      %v269 = vperm.slane %v248, 0
      %v271 = vadd.f32 %v252, %v269
      %v272 = vadd.f32 %v253, %v269
      %v273 = vadd.f32 %v254, %v269
      %v274 = vadd.f32 %v255, %v269
      %v275 = vadd.f32 %v256, %v269
      %v276 = vadd.f32 %v257, %v269
      %v277 = vadd.f32 %v258, %v269
      %v278 = vadd.f32 %v259, %v269
      %v279 = vadd.f32 %v260, %v269
      %v280 = vadd.f32 %v261, %v269
      %v281 = vadd.f32 %v262, %v269
      %v282 = vadd.f32 %v263, %v269
      %v283 = vadd.f32 %v264, %v269
      %v284 = vadd.f32 %v265, %v269
      %v285 = vadd.f32 %v266, %v269
      %v286 = vadd.f32 %v267, %v269
      %v287 = vmax.f32 %v271, 0.0
      %v288 = vmax.f32 %v272, 0.0
      %v289 = vmax.f32 %v273, 0.0
      %v290 = vmax.f32 %v274, 0.0
      %v291 = vmax.f32 %v275, 0.0
      %v292 = vmax.f32 %v276, 0.0
      %v293 = vmax.f32 %v277, 0.0
      %v294 = vmax.f32 %v278, 0.0
      %v295 = vmax.f32 %v279, 0.0
      %v296 = vmax.f32 %v280, 0.0
      %v297 = vmax.f32 %v281, 0.0
      %v298 = vmax.f32 %v282, 0.0
      %v299 = vmax.f32 %v283, 0.0
      %v300 = vmax.f32 %v284, 0.0
      %v301 = vmax.f32 %v285, 0.0
      %v302 = vmax.f32 %v286, 0.0
      %vm303 = vcmask 64512
      %304 = vst.msk [vmem:[%s213] sm:$0xff] %vm303, %v287
      %305 = vst.msk [vmem:[%s213 + $0x8] sm:$0xff] %vm303, %v288
      %306 = vst.msk [vmem:[%s213 + $0x10] sm:$0xff] %vm303, %v289
      %307 = vst.msk [vmem:[%s213 + $0x18] sm:$0xff] %vm303, %v290
      %308 = vst.msk [vmem:[%s213 + $0x20] sm:$0xff] %vm303, %v291
      %309 = vst.msk [vmem:[%s213 + $0x28] sm:$0xff] %vm303, %v292
      %310 = vst.msk [vmem:[%s213 + $0x30] sm:$0xff] %vm303, %v293
      %311 = vst.msk [vmem:[%s213 + $0x38] sm:$0xff] %vm303, %v294
      %312 = vst.msk [vmem:[%s213 + $0x40] sm:$0xff] %vm303, %v295
      %313 = vst.msk [vmem:[%s213 + $0x48] sm:$0xff] %vm303, %v296
      %314 = vst.msk [vmem:[%s213 + $0x50] sm:$0xff] %vm303, %v297
      %315 = vst.msk [vmem:[%s213 + $0x58] sm:$0xff] %vm303, %v298
      %316 = vst.msk [vmem:[%s213 + $0x60] sm:$0xff] %vm303, %v299
      %317 = vst.msk [vmem:[%s213 + $0x68] sm:$0xff] %vm303, %v300
      %318 = vst.msk [vmem:[%s213 + $0x70] sm:$0xff] %vm303, %v301
      %319 = vst.msk [vmem:[%s213 + $0x78] sm:$0xff] %vm303, %v302
      %s320 = smul.u32 8, %s19
      %p321 = scmp.lt.s32.totalorder %s18, 1
      %s322 = scalar_select %p321, %s18, 1
      %p323 = scmp.lt.s32.totalorder %s320, 15
      %s324 = scalar_select %p323, %s320, 15
      %s325 = smul.addr %s324, 2
      %s326 = smul.addr %s322, 32
      %s327 = sadd.s32 %s325, %s326
      %s328 = smul.addr %s327, 8
      %s329 = scalar_lea.vmem %s3, %s328
      // Predicated region
      $region33: #{conv_block.7} parent=31 // pred_check
        %p330 = pneg %p116
      $region34: #{conv_block.7} parent=31 // pred_check_branch
        %332 = sbr.rel (%p330) target = $region36
      $region35: #{conv_block.7} parent=31 // pred_region
        %s333 = smul.u32 8, %s19
      $region36: #{conv_block.7} parent=31 // pred_fallthru
        _
    $region32: #{conv_block.7} parent=5 // pred_fallthru
      _
    %p334 = scmp.le.s32.totalorder 2, %s9
    // Predicated region
    $region37: #{conv_block.7} parent=5 // pred_check
      %p335 = pneg %p334
    $region38: #{conv_block.7} parent=5 // pred_check_branch
      %337 = sbr.rel (%p335) target = $region40
    $region39: #{conv_block.7} parent=5 // pred_region
      %s338 = ssub.s32 %s9, 2
      // Predicated region
      $region41: #{conv_block.7} parent=39 // pred_check
        %p339 = pneg %p122
      $region42: #{conv_block.7} parent=39 // pred_check_branch
        %341 = sbr.rel (%p339) target = $region44
      $region43: #{conv_block.7} parent=39 // pred_region
        %s342 = smul.u32 8, %s21
        %p343 = scmp.lt.s32.totalorder %s20, 1
        %s344 = scalar_select %p343, %s20, 1
        %p345 = scmp.lt.s32.totalorder %s342, 15
        %s346 = scalar_select %p345, %s342, 15
        %s347 = smul.addr %s346, 2
        %s348 = smul.addr %s344, 32
        %s349 = sadd.s32 %s347, %s348
        %s350 = smul.addr %s349, 8
        %s351 = scalar_lea.vmem %s3, %s350
      $region44: #{conv_block.7} parent=39 // pred_fallthru
        _
    $region40: #{conv_block.7} parent=5 // pred_fallthru
      _
  $region6: #{conv_block.7} parent=0 // loop_footer
    %s13 = sadd.s32 1, %s9
  $region7: #{conv_block.7} parent=0 // loop_footer_branch
    %8 = sbr.rel target = $region3
  $region8: #{conv_block.7} parent=0 // loop_exit
    _

// kernel: conv_block.4
$region0: #{conv_block.4}
  #allocation0 [shape = 'u32[]', space=smem, size = 0x4, offset = 0x4, fixed_abs, tag = 'smem constant byte address 0x4 - core index']
  #allocation1 [shape = 'u32[72,128]{1,0:T(1,128)}', space=vmem, size = 0x9000, scoped, tag = 'internal scratch']
  #allocation2 [shape = 'bf16[1,8,16,128]{3,2,1,0:T(8,128)(2,1)}', space=vmem, size = 0x8000, scoped, tag = 'scratch operand']
  %s0 = inlined_call_operand.vmem [shape: bf16[2,18,18,4], index: 0, kind: input, shape index: {}]
  %s1 = inlined_call_operand.vmem [shape: bf16[128,128], index: 1, kind: input, shape index: {}]
  %s2 = inlined_call_operand.vmem [shape: bf16[2,16,16,128], index: 2, kind: output, shape index: {0}]
  %s3 = inlined_call_operand.vmem [shape: f32[2,2,2,128], index: 3, kind: output, shape index: {1}]
  %4 = xla_tuple %s2, %s3
  %s5 = sld [smem:[#allocation0]]
  $region49: #{conv_block.4} parent=0
    _
  %s7 = ssub.s32 1, %s5
  %s8 = scalar_select 0, %s7, %s5
  loop: start=0, step=1, limit=6
  $region2: #{conv_block.4} parent=0 // loop_pre_header
    _
  $region3: #{conv_block.4} parent=0 // loop_header
    %s10 = sphi 0, %s14
    %p11 = scmp.ge.s32.totalorder %s10, 6
    %s17 = sphi 0, %s29
    %s18 = sphi 0, %s25
    %s19 = sphi 0, %s17
    %s20 = sphi 0, %s18
    %s21 = sphi 0, %s19
    %s22 = sphi 0, %s20
    %s32 = sphi 0, %s34
    %s35 = sphi 0, %s32
    %s36 = sphi 0, %s35
    %s52 = sphi 0, %s36
    %s56 = sphi 0, %s56
    %s58 = sphi 0, %s56
    %s59 = sphi 0, %s58
    %s73 = sphi 0, %s59
    %s81 = sphi 0, %s83
    %s84 = sphi 0, %s81
    %s85 = sphi 0, %s84
    %s101 = sphi 0, %s85
    %s109 = sphi 0, %s111
    %s112 = sphi 0, %s109
    %s113 = sphi 0, %s112
    %s129 = sphi 0, %s113
  $region4: #{conv_block.4} parent=0 // loop_header_branch
    %13 = sbr.rel (%p11) target = $region8
  $region5: #{conv_block.4} parent=0 // loop_body
    %s15 = ssub.s32 %s10, 1
    %s16 = ssub.s32 %s10, 2
    %s23 = sadd.s32 1, %s18
    %p24 = scmp.ge.s32.totalorder %s23, 2
    %s25 = scalar_select %p24, 0, %s23
    %s26 = sadd.s32 1, %s17
    %s27 = scalar_select %p24, %s26, %s17
    %p28 = scmp.ge.s32.totalorder %s27, 2
    %s29 = scalar_select %p28, 0, %s27
    %s30 = ssub.s32 %s17, %s29
    %p31 = scmp.eq.s32.totalorder %s30, 0
    %s33 = sadd.s32 %s32, 1
    %s34 = scalar_select %p31, %s32, %s33
    %p37 = pneg %p31
    %p38 = scmp.eq.s32.totalorder %s10, 3
    %p39 = por %p37, %p38
    %p40 = scmp.ne.s32.totalorder %s32, %s35
    %p41 = scmp.eq.s32.totalorder %s10, 0
    %p42 = por %p40, %p41
    %p43 = scmp.ne.s32.totalorder %s32, %s35
    %p44 = scmp.eq.s32.totalorder %s15, 3
    %p45 = por %p43, %p44
    %p46 = scmp.ne.s32.totalorder %s35, %s36
    %p47 = scmp.eq.s32.totalorder %s15, 0
    %p48 = por %p46, %p47
    %p49 = scmp.ne.s32.totalorder %s35, %s36
    %p50 = scmp.eq.s32.totalorder %s16, 3
    %p51 = por %p49, %p50
    %p53 = scmp.ne.s32.totalorder %s36, %s52
    %p54 = scmp.eq.s32.totalorder %s16, 0
    %p55 = por %p53, %p54
    %s57 = sadd.s32 %s56, 1
    %p60 = scmp.eq.s32.totalorder %s10, 3
    %p61 = scmp.ne.s32.totalorder %s56, %s58
    %p62 = scmp.eq.s32.totalorder %s10, 0
    %p63 = por %p61, %p62
    %p64 = scmp.ne.s32.totalorder %s56, %s58
    %p65 = scmp.eq.s32.totalorder %s15, 3
    %p66 = por %p64, %p65
    %p67 = scmp.ne.s32.totalorder %s58, %s59
    %p68 = scmp.eq.s32.totalorder %s15, 0
    %p69 = por %p67, %p68
    %p70 = scmp.ne.s32.totalorder %s58, %s59
    %p71 = scmp.eq.s32.totalorder %s16, 3
    %p72 = por %p70, %p71
    %p74 = scmp.ne.s32.totalorder %s59, %s73
    %p75 = scmp.eq.s32.totalorder %s16, 0
    %p76 = por %p74, %p75
    %s77 = ssub.s32 %s17, %s29
    %s78 = ssub.s32 %s18, %s25
    %s79 = sor.u32 %s77, %s78
    %p80 = scmp.eq.s32.totalorder %s79, 0
    %s82 = sadd.s32 %s81, 1
    %s83 = scalar_select %p80, %s81, %s82
    %p86 = pneg %p80
    %p87 = scmp.eq.s32.totalorder %s10, 3
    %p88 = por %p86, %p87
    %p89 = scmp.ne.s32.totalorder %s81, %s84
    %p90 = scmp.eq.s32.totalorder %s10, 0
    %p91 = por %p89, %p90
    %p92 = scmp.ne.s32.totalorder %s81, %s84
    %p93 = scmp.eq.s32.totalorder %s15, 3
    %p94 = por %p92, %p93
    %p95 = scmp.ne.s32.totalorder %s84, %s85
    %p96 = scmp.eq.s32.totalorder %s15, 0
    %p97 = por %p95, %p96
    %p98 = scmp.ne.s32.totalorder %s84, %s85
    %p99 = scmp.eq.s32.totalorder %s16, 3
    %p100 = por %p98, %p99
    %p102 = scmp.ne.s32.totalorder %s85, %s101
    %p103 = scmp.eq.s32.totalorder %s16, 0
    %p104 = por %p102, %p103
    %s105 = ssub.s32 %s17, %s29
    %s106 = ssub.s32 %s18, %s25
    %s107 = sor.u32 %s105, %s106
    %p108 = scmp.eq.s32.totalorder %s107, 0
    %s110 = sadd.s32 %s109, 1
    %s111 = scalar_select %p108, %s109, %s110
    %p114 = pneg %p108
    %p115 = scmp.eq.s32.totalorder %s10, 3
    %p116 = por %p114, %p115
    %p117 = scmp.ne.s32.totalorder %s109, %s112
    %p118 = scmp.eq.s32.totalorder %s10, 0
    %p119 = por %p117, %p118
    %p120 = scmp.ne.s32.totalorder %s109, %s112
    %p121 = scmp.eq.s32.totalorder %s15, 3
    %p122 = por %p120, %p121
    %p123 = scmp.ne.s32.totalorder %s112, %s113
    %p124 = scmp.eq.s32.totalorder %s15, 0
    %p125 = por %p123, %p124
    %p126 = scmp.ne.s32.totalorder %s112, %s113
    %p127 = scmp.eq.s32.totalorder %s16, 3
    %p128 = por %p126, %p127
    %p130 = scmp.ne.s32.totalorder %s113, %s129
    %p131 = scmp.eq.s32.totalorder %s16, 0
    %p132 = por %p130, %p131
    %p133 = scmp.le.s32.totalorder 1, %s10
    %p134 = scmp.lt.s32.totalorder %s10, 5
    %p135 = pnand %p133, %p134
    %p136 = pneg %p135
    // Predicated region
    $region9: #{conv_block.4} parent=5 // pred_check
      _
    $region10: #{conv_block.4} parent=5 // pred_check_branch
      %138 = sbr.rel (%p135) target = $region12
    $region11: #{conv_block.4} parent=5 // pred_region
      %s139 = ssub.s32 %s10, 1
      // Predicated region
      $region13: #{conv_block.4} parent=11 // pred_check
        %p140 = pneg %p69
      $region14: #{conv_block.4} parent=11 // pred_check_branch
        %142 = sbr.rel (%p140) target = $region16
      $region15: #{conv_block.4} parent=11 // pred_region
        _
      $region16: #{conv_block.4} parent=11 // pred_fallthru
        _
    $region12: #{conv_block.4} parent=5 // pred_fallthru
      _
    %p143 = scmp.lt.s32.totalorder %s10, 4
    // Predicated region
    $region17: #{conv_block.4} parent=5 // pred_check
      %p144 = pneg %p143
    $region18: #{conv_block.4} parent=5 // pred_check_branch
      %146 = sbr.rel (%p144) target = $region20
    $region19: #{conv_block.4} parent=5 // pred_region
      // Predicated region
      $region21: #{conv_block.4} parent=19 // pred_check
        %p147 = pneg %p42
      $region22: #{conv_block.4} parent=19 // pred_check_branch
        %149 = sbr.rel (%p147) target = $region24
      $region23: #{conv_block.4} parent=19 // pred_region
        %p150 = scmp.lt.s32.totalorder %s17, 1
        %s151 = scalar_select %p150, %s17, 1
        %s152 = smul.addr %s151, 54
        %s153 = smul.addr %s152, 4
        %s154 = scalar_lea.vmem %s0, %s153
      $region24: #{conv_block.4} parent=19 // pred_fallthru
        _
    $region20: #{conv_block.4} parent=5 // pred_fallthru
      _
    %p155 = scmp.le.s32.totalorder 1, %s10
    %p156 = scmp.lt.s32.totalorder %s10, 5
    %p157 = pnand %p155, %p156
    %p158 = pneg %p157
    // Predicated region
    $region25: #{conv_block.4} parent=5 // pred_check
      _
    $region26: #{conv_block.4} parent=5 // pred_check_branch
      %160 = sbr.rel (%p157) target = $region28
    $region27: #{conv_block.4} parent=5 // pred_region
      %s161 = ssub.s32 %s10, 1
      %p162 = scmp.lt.s32.totalorder %s19, 1
      %s163 = scalar_select %p162, %s19, 1
      %s164 = smul.addr %s163, 54
      %s165 = smul.addr %s164, 4
      %s166 = scalar_lea.vmem %s0, %s165
      %p167 = pneg %p48
      %p168 = pneg %p45
      %p169 = pneg %p69
      %p170 = pneg %p66
      %p171 = pneg %p97
      %p172 = pneg %p94
      %s173 = smul.u32 8, %s20
      %p174 = scmp.lt.s32.totalorder %s19, 1
      %s175 = scalar_select %p174, %s19, 1
      %p176 = scmp.lt.s32.totalorder %s173, 15
      %s177 = scalar_select %p176, %s173, 15
      %s178 = smul.addr %s177, 2
      %s179 = smul.addr %s175, 32
      %s180 = sadd.s32 %s178, %s179
      %s181 = smul.addr %s180, 4
      %s182 = scalar_lea.vmem %s2, %s181
      %p183 = pneg %p125
      %p184 = pneg %p122
      %p185 = scmp.lt.s32.totalorder %s19, 1
      %s186 = scalar_select %p185, %s19, 1
      %p187 = scmp.lt.s32.totalorder %s20, 1
      %s188 = scalar_select %p187, %s20, 1
      %s189 = smul.addr %s186, 2
      %s190 = sadd.s32 %s188, %s189
      %s191 = smul.addr %s190, 2
      %s192 = scalar_lea.vmem %s3, %s191
      %p193 = scmp.lt.s32.totalorder %s19, 1
      %s194 = scalar_select %p193, %s19, 1
      %s195 = smul.addr %s194, 54
      %s196 = smul.addr %s195, 4
      %s197 = scalar_lea.vmem %s0, %s196
      %s198 = smul.u32 8, %s20
      %p199 = scmp.lt.s32.totalorder %s19, 1
      %s200 = scalar_select %p199, %s19, 1
      %p201 = scmp.lt.s32.totalorder %s198, 15
      %s202 = scalar_select %p201, %s198, 15
      %s203 = smul.addr %s202, 2
      %s204 = smul.addr %s200, 32
      %s205 = sadd.s32 %s203, %s204
      %s206 = smul.addr %s205, 4
      %s207 = scalar_lea.vmem %s2, %s206
      %s208 = smul.u32 8, %s20
      %p209 = scmp.lt.s32.totalorder %s19, 1
      %s210 = scalar_select %p209, %s19, 1
      %p211 = scmp.lt.s32.totalorder %s20, 1
      %s212 = scalar_select %p211, %s20, 1
      %s213 = smul.addr %s210, 2
      %s214 = sadd.s32 %s212, %s213
      %s215 = smul.addr %s214, 2
      %s216 = scalar_lea.vmem %s3, %s215
      %s218 = smul.u32 %s20, 8
      %vm219 = vcmask 1043744
      %220 = vst.msk [vmem:[#allocation2] sm:$0xf] %vm219, 0
      %221 = vst.msk [vmem:[#allocation2 + $0x4] sm:$0xf] %vm219, 0
      %222 = vst.msk [vmem:[#allocation2 + $0x8] sm:$0xf] %vm219, 0
      %223 = vst.msk [vmem:[#allocation2 + $0xc] sm:$0xf] %vm219, 0
      %224 = vst.msk [vmem:[#allocation2 + $0x10] sm:$0xf] %vm219, 0
      %225 = vst.msk [vmem:[#allocation2 + $0x14] sm:$0xf] %vm219, 0
      %226 = vst.msk [vmem:[#allocation2 + $0x18] sm:$0xf] %vm219, 0
      %227 = vst.msk [vmem:[#allocation2 + $0x1c] sm:$0xf] %vm219, 0
      %228 = vst.msk [vmem:[#allocation2 + $0x20] sm:$0xf] %vm219, 0
      %229 = vst.msk [vmem:[#allocation2 + $0x24] sm:$0xf] %vm219, 0
      %230 = vst.msk [vmem:[#allocation2 + $0x28] sm:$0xf] %vm219, 0
      %231 = vst.msk [vmem:[#allocation2 + $0x2c] sm:$0xf] %vm219, 0
      %232 = vst.msk [vmem:[#allocation2 + $0x30] sm:$0xf] %vm219, 0
      %233 = vst.msk [vmem:[#allocation2 + $0x34] sm:$0xf] %vm219, 0
      %234 = vst.msk [vmem:[#allocation2 + $0x38] sm:$0xf] %vm219, 0
      %235 = vst.msk [vmem:[#allocation2 + $0x3c] sm:$0xf] %vm219, 0
      %s236 = smul.u32 %s218, 3
      %s237 = smul.addr %s236, 4
      %s238 = scalar_lea.vmem %s197, %s237
      %v239 = vld [vmem:[%s238] sm:$0xf]
      %v240 = vld [vmem:[%s238 + $0x4] sm:$0xf]
      %v241 = vld [vmem:[%s238 + $0xc] sm:$0xf]
      %v242 = vld [vmem:[%s238 + $0x10] sm:$0xf]
      %v243 = vld [vmem:[%s238 + $0x18] sm:$0xf]
      %v244 = vld [vmem:[%s238 + $0x1c] sm:$0xf]
      %v245 = vld [vmem:[%s238 + $0x24] sm:$0xf]
      %v246 = vld [vmem:[%s238 + $0x28] sm:$0xf]
      %v247 = vld [vmem:[%s238 + $0x30] sm:$0xf]
      %v248 = vld [vmem:[%s238 + $0x34] sm:$0xf]
      %v249 = vld [vmem:[%s238 + $0x3c] sm:$0xf]
      %v250 = vld [vmem:[%s238 + $0x40] sm:$0xf]
      %v251 = vld [vmem:[%s238 + $0x48] sm:$0xf]
      %v252 = vld [vmem:[%s238 + $0x4c] sm:$0xf]
      %v253 = vld [vmem:[%s238 + $0x54] sm:$0xf]
      %v254 = vld [vmem:[%s238 + $0x58] sm:$0xf]
      %vm255 = vcmask 27648
      %256 = vst.msk [vmem:[#allocation2] sm:$0xf] %vm255, %v239
      %257 = vst.msk [vmem:[#allocation2 + $0x4] sm:$0xf] %vm255, %v240
      %258 = vst.msk [vmem:[#allocation2 + $0x8] sm:$0xf] %vm255, %v241
      %259 = vst.msk [vmem:[#allocation2 + $0xc] sm:$0xf] %vm255, %v242
      %260 = vst.msk [vmem:[#allocation2 + $0x10] sm:$0xf] %vm255, %v243
      %261 = vst.msk [vmem:[#allocation2 + $0x14] sm:$0xf] %vm255, %v244
      %262 = vst.msk [vmem:[#allocation2 + $0x18] sm:$0xf] %vm255, %v245
      %263 = vst.msk [vmem:[#allocation2 + $0x1c] sm:$0xf] %vm255, %v246
      %264 = vst.msk [vmem:[#allocation2 + $0x20] sm:$0xf] %vm255, %v247
      %265 = vst.msk [vmem:[#allocation2 + $0x24] sm:$0xf] %vm255, %v248
      %266 = vst.msk [vmem:[#allocation2 + $0x28] sm:$0xf] %vm255, %v249
      %267 = vst.msk [vmem:[#allocation2 + $0x2c] sm:$0xf] %vm255, %v250
      %268 = vst.msk [vmem:[#allocation2 + $0x30] sm:$0xf] %vm255, %v251
      %269 = vst.msk [vmem:[#allocation2 + $0x34] sm:$0xf] %vm255, %v252
      %270 = vst.msk [vmem:[#allocation2 + $0x38] sm:$0xf] %vm255, %v253
      %271 = vst.msk [vmem:[#allocation2 + $0x3c] sm:$0xf] %vm255, %v254
      %v272 = vld [vmem:[%s238] sm:$0xf]
      %v273 = vld [vmem:[%s238 + $0x4] sm:$0xf]
      %v274 = vld [vmem:[%s238 + $0x8] sm:$0x1]
      %v275 = vld [vmem:[%s238 + $0xc] sm:$0xf]
      %v276 = vld [vmem:[%s238 + $0x10] sm:$0xf]
      %v277 = vld [vmem:[%s238 + $0x14] sm:$0x1]
      %v278 = vld [vmem:[%s238 + $0x18] sm:$0xf]
      %v279 = vld [vmem:[%s238 + $0x1c] sm:$0xf]
      %v280 = vld [vmem:[%s238 + $0x20] sm:$0x1]
      %v281 = vld [vmem:[%s238 + $0x24] sm:$0xf]
      %v282 = vld [vmem:[%s238 + $0x28] sm:$0xf]
      %v283 = vld [vmem:[%s238 + $0x2c] sm:$0x1]
      %v284 = vld [vmem:[%s238 + $0x30] sm:$0xf]
      %v285 = vld [vmem:[%s238 + $0x34] sm:$0xf]
      %v286 = vld [vmem:[%s238 + $0x38] sm:$0x1]
      %v287 = vld [vmem:[%s238 + $0x3c] sm:$0xf]
      %v288 = vld [vmem:[%s238 + $0x40] sm:$0xf]
      %v289 = vld [vmem:[%s238 + $0x44] sm:$0x1]
      %v290 = vld [vmem:[%s238 + $0x48] sm:$0xf]
      %v291 = vld [vmem:[%s238 + $0x4c] sm:$0xf]
      %v292 = vld [vmem:[%s238 + $0x50] sm:$0x1]
      %v293 = vld [vmem:[%s238 + $0x54] sm:$0xf]
      %v294 = vld [vmem:[%s238 + $0x58] sm:$0xf]
      %v295 = vld [vmem:[%s238 + $0x5c] sm:$0x1]
      %vm296 = vsmask.f32 3328
      %vm297 = vsmask.f32 7440
      %vm298 = vmor %vm296, %vm297
      %v300 = vshrl.u32 %v272, 16
      %v302 = vrot.slane %v300, 4
      %v303 = vshll.u32 %v272, 16
      %v305 = vrot.slane %v303, 5
      %v306 = vor.u32 %v302, %v305
      %v307 = vrot.slane %v306, 4
      %v309 = vshll.u32 %v273, 16
      %v311 = vrot.slane %v309, 5
      %v312 = vsel %vm298, %v307, %v311
      %v313 = vshrl.u32 %v273, 16
      %v315 = vrot.slane %v313, 4
      %v316 = vor.u32 %v315, %v311
      %v317 = vrot.slane %v316, 4
      %v319 = vshll.u32 %v274, 16
      %v321 = vrot.slane %v319, 5
      %v322 = vsel %vm298, %v317, %v321
      %v324 = vshrl.u32 %v275, 16
      %v326 = vrot.slane %v324, 4
      %v327 = vshll.u32 %v275, 16
      %v329 = vrot.slane %v327, 5
      %v330 = vor.u32 %v326, %v329
      %v331 = vrot.slane %v330, 4
      %v333 = vshll.u32 %v276, 16
      %v335 = vrot.slane %v333, 5
      %v336 = vsel %vm298, %v331, %v335
      %v337 = vshrl.u32 %v276, 16
      %v339 = vrot.slane %v337, 4
      %v340 = vor.u32 %v339, %v335
      %v341 = vrot.slane %v340, 4
      %v343 = vshll.u32 %v277, 16
      %v345 = vrot.slane %v343, 5
      %v346 = vsel %vm298, %v341, %v345
      %v348 = vshrl.u32 %v278, 16
      %v350 = vrot.slane %v348, 4
      %v351 = vshll.u32 %v278, 16
      %v353 = vrot.slane %v351, 5
      %v354 = vor.u32 %v350, %v353
      %v355 = vrot.slane %v354, 4
      %v357 = vshll.u32 %v279, 16
      %v359 = vrot.slane %v357, 5
      %v360 = vsel %vm298, %v355, %v359
      %v361 = vshrl.u32 %v279, 16
      %v363 = vrot.slane %v361, 4
      %v364 = vor.u32 %v363, %v359
      %v365 = vrot.slane %v364, 4
      %v367 = vshll.u32 %v280, 16
      %v369 = vrot.slane %v367, 5
      %v370 = vsel %vm298, %v365, %v369
      %v372 = vshrl.u32 %v281, 16
      %v374 = vrot.slane %v372, 4
      %v375 = vshll.u32 %v281, 16
      %v377 = vrot.slane %v375, 5
      %v378 = vor.u32 %v374, %v377
      %v379 = vrot.slane %v378, 4
      %v381 = vshll.u32 %v282, 16
      %v383 = vrot.slane %v381, 5
      %v384 = vsel %vm298, %v379, %v383
      %v385 = vshrl.u32 %v282, 16
      %v387 = vrot.slane %v385, 4
      %v388 = vor.u32 %v387, %v383
      %v389 = vrot.slane %v388, 4
      %v391 = vshll.u32 %v283, 16
      %v393 = vrot.slane %v391, 5
      %v394 = vsel %vm298, %v389, %v393
      %v396 = vshrl.u32 %v284, 16
      %v398 = vrot.slane %v396, 4
      %v399 = vshll.u32 %v284, 16
      %v401 = vrot.slane %v399, 5
      %v402 = vor.u32 %v398, %v401
      %v403 = vrot.slane %v402, 4
      %v405 = vshll.u32 %v285, 16
      %v407 = vrot.slane %v405, 5
      %v408 = vsel %vm298, %v403, %v407
      %v409 = vshrl.u32 %v285, 16
      %v411 = vrot.slane %v409, 4
      %v412 = vor.u32 %v411, %v407
      %v413 = vrot.slane %v412, 4
      %v415 = vshll.u32 %v286, 16
      %v417 = vrot.slane %v415, 5
      %v418 = vsel %vm298, %v413, %v417
      %v420 = vshrl.u32 %v287, 16
      %v422 = vrot.slane %v420, 4
      %v423 = vshll.u32 %v287, 16
      %v425 = vrot.slane %v423, 5
      %v426 = vor.u32 %v422, %v425
      %v427 = vrot.slane %v426, 4
      %v429 = vshll.u32 %v288, 16
      %v431 = vrot.slane %v429, 5
      %v432 = vsel %vm298, %v427, %v431
      %v433 = vshrl.u32 %v288, 16
      %v435 = vrot.slane %v433, 4
      %v436 = vor.u32 %v435, %v431
      %v437 = vrot.slane %v436, 4
      %v439 = vshll.u32 %v289, 16
      %v441 = vrot.slane %v439, 5
      %v442 = vsel %vm298, %v437, %v441
      %v444 = vshrl.u32 %v290, 16
      %v446 = vrot.slane %v444, 4
      %v447 = vshll.u32 %v290, 16
      %v449 = vrot.slane %v447, 5
      %v450 = vor.u32 %v446, %v449
      %v451 = vrot.slane %v450, 4
      %v453 = vshll.u32 %v291, 16
      %v455 = vrot.slane %v453, 5
      %v456 = vsel %vm298, %v451, %v455
      %v457 = vshrl.u32 %v291, 16
      %v459 = vrot.slane %v457, 4
      %v460 = vor.u32 %v459, %v455
      %v461 = vrot.slane %v460, 4
      %v463 = vshll.u32 %v292, 16
      %v465 = vrot.slane %v463, 5
      %v466 = vsel %vm298, %v461, %v465
      %v468 = vshrl.u32 %v293, 16
      %v470 = vrot.slane %v468, 4
      %v471 = vshll.u32 %v293, 16
      %v473 = vrot.slane %v471, 5
      %v474 = vor.u32 %v470, %v473
      %v475 = vrot.slane %v474, 4
      %v477 = vshll.u32 %v294, 16
      %v479 = vrot.slane %v477, 5
      %v480 = vsel %vm298, %v475, %v479
      %v481 = vshrl.u32 %v294, 16
      %v483 = vrot.slane %v481, 4
      %v484 = vor.u32 %v483, %v479
      %v485 = vrot.slane %v484, 4
      %v487 = vshll.u32 %v295, 16
      %v489 = vrot.slane %v487, 5
      %v490 = vsel %vm298, %v485, %v489
      %491 = vrot.lane.b32.xlu0 %v312, 4
      %v492 = vpop.permute.xlu0 %491
      %493 = vrot.lane.b32.xlu0 %v322, 4
      %v494 = vpop.permute.xlu0 %493
      %495 = vrot.lane.b32.xlu0 %v336, 4
      %v496 = vpop.permute.xlu0 %495
      %497 = vrot.lane.b32.xlu0 %v346, 4
      %v498 = vpop.permute.xlu0 %497
      %499 = vrot.lane.b32.xlu0 %v360, 4
      %v500 = vpop.permute.xlu0 %499
      %501 = vrot.lane.b32.xlu0 %v370, 4
      %v502 = vpop.permute.xlu0 %501
      %503 = vrot.lane.b32.xlu0 %v384, 4
      %v504 = vpop.permute.xlu0 %503
      %505 = vrot.lane.b32.xlu0 %v394, 4
      %v506 = vpop.permute.xlu0 %505
      %507 = vrot.lane.b32.xlu0 %v408, 4
      %v508 = vpop.permute.xlu0 %507
      %509 = vrot.lane.b32.xlu0 %v418, 4
      %v510 = vpop.permute.xlu0 %509
      %511 = vrot.lane.b32.xlu0 %v432, 4
      %v512 = vpop.permute.xlu0 %511
      %513 = vrot.lane.b32.xlu0 %v442, 4
      %v514 = vpop.permute.xlu0 %513
      %515 = vrot.lane.b32.xlu0 %v456, 4
      %v516 = vpop.permute.xlu0 %515
      %517 = vrot.lane.b32.xlu0 %v466, 4
      %v518 = vpop.permute.xlu0 %517
      %519 = vrot.lane.b32.xlu0 %v480, 4
      %v520 = vpop.permute.xlu0 %519
      %521 = vrot.lane.b32.xlu0 %v490, 4
      %v522 = vpop.permute.xlu0 %521
      %vm539 = vcmask 60448
      %540 = vst.msk [vmem:[#allocation2] sm:$0xf] %vm539, %v492
      %541 = vst.msk [vmem:[#allocation2 + $0x4] sm:$0xf] %vm539, %v494
      %542 = vst.msk [vmem:[#allocation2 + $0x8] sm:$0xf] %vm539, %v496
      %543 = vst.msk [vmem:[#allocation2 + $0xc] sm:$0xf] %vm539, %v498
      %544 = vst.msk [vmem:[#allocation2 + $0x10] sm:$0xf] %vm539, %v500
      %545 = vst.msk [vmem:[#allocation2 + $0x14] sm:$0xf] %vm539, %v502
      %546 = vst.msk [vmem:[#allocation2 + $0x18] sm:$0xf] %vm539, %v504
      %547 = vst.msk [vmem:[#allocation2 + $0x1c] sm:$0xf] %vm539, %v506
      %548 = vst.msk [vmem:[#allocation2 + $0x20] sm:$0xf] %vm539, %v508
      %549 = vst.msk [vmem:[#allocation2 + $0x24] sm:$0xf] %vm539, %v510
      %550 = vst.msk [vmem:[#allocation2 + $0x28] sm:$0xf] %vm539, %v512
      %551 = vst.msk [vmem:[#allocation2 + $0x2c] sm:$0xf] %vm539, %v514
      %552 = vst.msk [vmem:[#allocation2 + $0x30] sm:$0xf] %vm539, %v516
      %553 = vst.msk [vmem:[#allocation2 + $0x34] sm:$0xf] %vm539, %v518
      %554 = vst.msk [vmem:[#allocation2 + $0x38] sm:$0xf] %vm539, %v520
      %555 = vst.msk [vmem:[#allocation2 + $0x3c] sm:$0xf] %vm539, %v522
      %v556 = vld [vmem:[%s238] sm:$0xe]
      %v557 = vld [vmem:[%s238 + $0x4] sm:$0xf]
      %v558 = vld [vmem:[%s238 + $0x8] sm:$0x1]
      %v559 = vld [vmem:[%s238 + $0xc] sm:$0xe]
      %v560 = vld [vmem:[%s238 + $0x10] sm:$0xf]
      %v561 = vld [vmem:[%s238 + $0x14] sm:$0x1]
      %v562 = vld [vmem:[%s238 + $0x18] sm:$0xe]
      %v563 = vld [vmem:[%s238 + $0x1c] sm:$0xf]
      %v564 = vld [vmem:[%s238 + $0x20] sm:$0x1]
      %v565 = vld [vmem:[%s238 + $0x24] sm:$0xe]
      %v566 = vld [vmem:[%s238 + $0x28] sm:$0xf]
      %v567 = vld [vmem:[%s238 + $0x2c] sm:$0x1]
      %v568 = vld [vmem:[%s238 + $0x30] sm:$0xe]
      %v569 = vld [vmem:[%s238 + $0x34] sm:$0xf]
      %v570 = vld [vmem:[%s238 + $0x38] sm:$0x1]
      %v571 = vld [vmem:[%s238 + $0x3c] sm:$0xe]
      %v572 = vld [vmem:[%s238 + $0x40] sm:$0xf]
      %v573 = vld [vmem:[%s238 + $0x44] sm:$0x1]
      %v574 = vld [vmem:[%s238 + $0x48] sm:$0xe]
      %v575 = vld [vmem:[%s238 + $0x4c] sm:$0xf]
      %v576 = vld [vmem:[%s238 + $0x50] sm:$0x1]
      %v577 = vld [vmem:[%s238 + $0x54] sm:$0xe]
      %v578 = vld [vmem:[%s238 + $0x58] sm:$0xf]
      %v579 = vld [vmem:[%s238 + $0x5c] sm:$0x1]
      %vm604 = vcmask 1042432
      %vm605 = vcmask 1046532
      %vm606 = vmor %vm604, %vm605
      %v607 = vrot.slane %v556, 5
      %v608 = vrot.slane %v607, 4
      %v609 = vrot.slane %v557, 5
      %v610 = vsel %vm606, %v608, %v609
      %v611 = vrot.slane %v609, 4
      %v612 = vrot.slane %v558, 5
      %v613 = vsel %vm606, %v611, %v612
      %v614 = vrot.slane %v559, 5
      %v615 = vrot.slane %v614, 4
      %v616 = vrot.slane %v560, 5
      %v617 = vsel %vm606, %v615, %v616
      %v618 = vrot.slane %v616, 4
      %v619 = vrot.slane %v561, 5
      %v620 = vsel %vm606, %v618, %v619
      %v621 = vrot.slane %v562, 5
      %v622 = vrot.slane %v621, 4
      %v623 = vrot.slane %v563, 5
      %v624 = vsel %vm606, %v622, %v623
      %v625 = vrot.slane %v623, 4
      %v626 = vrot.slane %v564, 5
      %v627 = vsel %vm606, %v625, %v626
      %v628 = vrot.slane %v565, 5
      %v629 = vrot.slane %v628, 4
      %v630 = vrot.slane %v566, 5
      %v631 = vsel %vm606, %v629, %v630
      %v632 = vrot.slane %v630, 4
      %v633 = vrot.slane %v567, 5
      %v634 = vsel %vm606, %v632, %v633
      %v635 = vrot.slane %v568, 5
      %v636 = vrot.slane %v635, 4
      %v637 = vrot.slane %v569, 5
      %v638 = vsel %vm606, %v636, %v637
      %v639 = vrot.slane %v637, 4
      %v640 = vrot.slane %v570, 5
      %v641 = vsel %vm606, %v639, %v640
      %v642 = vrot.slane %v571, 5
      %v643 = vrot.slane %v642, 4
      %v644 = vrot.slane %v572, 5
      %v645 = vsel %vm606, %v643, %v644
      %v646 = vrot.slane %v644, 4
      %v647 = vrot.slane %v573, 5
      %v648 = vsel %vm606, %v646, %v647
      %v649 = vrot.slane %v574, 5
      %v650 = vrot.slane %v649, 4
      %v651 = vrot.slane %v575, 5
      %v652 = vsel %vm606, %v650, %v651
      %v653 = vrot.slane %v651, 4
      %v654 = vrot.slane %v576, 5
      %v655 = vsel %vm606, %v653, %v654
      %v656 = vrot.slane %v577, 5
      %v657 = vrot.slane %v656, 4
      %v658 = vrot.slane %v578, 5
      %v659 = vsel %vm606, %v657, %v658
      %v660 = vrot.slane %v658, 4
      %v661 = vrot.slane %v579, 5
      %v662 = vsel %vm606, %v660, %v661
      %663 = vrot.lane.b32.xlu0 %v610, 8
      %v664 = vpop.permute.xlu0 %663
      %665 = vrot.lane.b32.xlu0 %v613, 8
      %v666 = vpop.permute.xlu0 %665
      %667 = vrot.lane.b32.xlu0 %v617, 8
      %v668 = vpop.permute.xlu0 %667
      %669 = vrot.lane.b32.xlu0 %v620, 8
      %v670 = vpop.permute.xlu0 %669
      %671 = vrot.lane.b32.xlu0 %v624, 8
      %v672 = vpop.permute.xlu0 %671
      %673 = vrot.lane.b32.xlu0 %v627, 8
      %v674 = vpop.permute.xlu0 %673
      %675 = vrot.lane.b32.xlu0 %v631, 8
      %v676 = vpop.permute.xlu0 %675
      %677 = vrot.lane.b32.xlu0 %v634, 8
      %v678 = vpop.permute.xlu0 %677
      %679 = vrot.lane.b32.xlu0 %v638, 8
      %v680 = vpop.permute.xlu0 %679
      %681 = vrot.lane.b32.xlu0 %v641, 8
      %v682 = vpop.permute.xlu0 %681
      %683 = vrot.lane.b32.xlu0 %v645, 8
      %v684 = vpop.permute.xlu0 %683
      %685 = vrot.lane.b32.xlu0 %v648, 8
      %v686 = vpop.permute.xlu0 %685
      %687 = vrot.lane.b32.xlu0 %v652, 8
      %v688 = vpop.permute.xlu0 %687
      %689 = vrot.lane.b32.xlu0 %v655, 8
      %v690 = vpop.permute.xlu0 %689
      %691 = vrot.lane.b32.xlu0 %v659, 8
      %v692 = vpop.permute.xlu0 %691
      %693 = vrot.lane.b32.xlu0 %v662, 8
      %v694 = vpop.permute.xlu0 %693
      %vm711 = vcmask 93248
      %712 = vst.msk [vmem:[#allocation2] sm:$0xf] %vm711, %v664
      %713 = vst.msk [vmem:[#allocation2 + $0x4] sm:$0xf] %vm711, %v666
      %714 = vst.msk [vmem:[#allocation2 + $0x8] sm:$0xf] %vm711, %v668
      %715 = vst.msk [vmem:[#allocation2 + $0xc] sm:$0xf] %vm711, %v670
      %716 = vst.msk [vmem:[#allocation2 + $0x10] sm:$0xf] %vm711, %v672
      %717 = vst.msk [vmem:[#allocation2 + $0x14] sm:$0xf] %vm711, %v674
      %718 = vst.msk [vmem:[#allocation2 + $0x18] sm:$0xf] %vm711, %v676
      %719 = vst.msk [vmem:[#allocation2 + $0x1c] sm:$0xf] %vm711, %v678
      %720 = vst.msk [vmem:[#allocation2 + $0x20] sm:$0xf] %vm711, %v680
      %721 = vst.msk [vmem:[#allocation2 + $0x24] sm:$0xf] %vm711, %v682
      %722 = vst.msk [vmem:[#allocation2 + $0x28] sm:$0xf] %vm711, %v684
      %723 = vst.msk [vmem:[#allocation2 + $0x2c] sm:$0xf] %vm711, %v686
      %724 = vst.msk [vmem:[#allocation2 + $0x30] sm:$0xf] %vm711, %v688
      %725 = vst.msk [vmem:[#allocation2 + $0x34] sm:$0xf] %vm711, %v690
      %726 = vst.msk [vmem:[#allocation2 + $0x38] sm:$0xf] %vm711, %v692
      %727 = vst.msk [vmem:[#allocation2 + $0x3c] sm:$0xf] %vm711, %v694
      %s728 = sadd.s32 %s218, 1
      %s729 = smul.u32 %s728, 3
      %s730 = smul.addr %s729, 4
      %s731 = scalar_lea.vmem %s197, %s730
      %v732 = vld [vmem:[%s731] sm:$0xf]
      %v733 = vld [vmem:[%s731 + $0x4] sm:$0xf]
      %v734 = vld [vmem:[%s731 + $0xc] sm:$0xf]
      %v735 = vld [vmem:[%s731 + $0x10] sm:$0xf]
      %v736 = vld [vmem:[%s731 + $0x18] sm:$0xf]
      %v737 = vld [vmem:[%s731 + $0x1c] sm:$0xf]
      %v738 = vld [vmem:[%s731 + $0x24] sm:$0xf]
      %v739 = vld [vmem:[%s731 + $0x28] sm:$0xf]
      %v740 = vld [vmem:[%s731 + $0x30] sm:$0xf]
      %v741 = vld [vmem:[%s731 + $0x34] sm:$0xf]
      %v742 = vld [vmem:[%s731 + $0x3c] sm:$0xf]
      %v743 = vld [vmem:[%s731 + $0x40] sm:$0xf]
      %v744 = vld [vmem:[%s731 + $0x48] sm:$0xf]
      %v745 = vld [vmem:[%s731 + $0x4c] sm:$0xf]
      %v746 = vld [vmem:[%s731 + $0x54] sm:$0xf]
      %v747 = vld [vmem:[%s731 + $0x58] sm:$0xf]
      %764 = vrot.lane.b32.xlu0 %v732, 12
      %v765 = vpop.permute.xlu0 %764
      %766 = vrot.lane.b32.xlu0 %v733, 12
      %v767 = vpop.permute.xlu0 %766
      %768 = vrot.lane.b32.xlu0 %v734, 12
      %v769 = vpop.permute.xlu0 %768
      %770 = vrot.lane.b32.xlu0 %v735, 12
      %v771 = vpop.permute.xlu0 %770
      %772 = vrot.lane.b32.xlu0 %v736, 12
      %v773 = vpop.permute.xlu0 %772
      %774 = vrot.lane.b32.xlu0 %v737, 12
      %v775 = vpop.permute.xlu0 %774
      %776 = vrot.lane.b32.xlu0 %v738, 12
      %v777 = vpop.permute.xlu0 %776
      %778 = vrot.lane.b32.xlu0 %v739, 12
      %v779 = vpop.permute.xlu0 %778
      %780 = vrot.lane.b32.xlu0 %v740, 12
      %v781 = vpop.permute.xlu0 %780
      %782 = vrot.lane.b32.xlu0 %v741, 12
      %v783 = vpop.permute.xlu0 %782
      %784 = vrot.lane.b32.xlu0 %v742, 12
      %v785 = vpop.permute.xlu0 %784
      %786 = vrot.lane.b32.xlu0 %v743, 12
      %v787 = vpop.permute.xlu0 %786
      %788 = vrot.lane.b32.xlu0 %v744, 12
      %v789 = vpop.permute.xlu0 %788
      %790 = vrot.lane.b32.xlu0 %v745, 12
      %v791 = vpop.permute.xlu0 %790
      %792 = vrot.lane.b32.xlu0 %v746, 12
      %v793 = vpop.permute.xlu0 %792
      %794 = vrot.lane.b32.xlu0 %v747, 12
      %v795 = vpop.permute.xlu0 %794
      %vm812 = vcmask 126048
      %813 = vst.msk [vmem:[#allocation2] sm:$0xf] %vm812, %v765
      %814 = vst.msk [vmem:[#allocation2 + $0x4] sm:$0xf] %vm812, %v767
      %815 = vst.msk [vmem:[#allocation2 + $0x8] sm:$0xf] %vm812, %v769
      %816 = vst.msk [vmem:[#allocation2 + $0xc] sm:$0xf] %vm812, %v771
      %817 = vst.msk [vmem:[#allocation2 + $0x10] sm:$0xf] %vm812, %v773
      %818 = vst.msk [vmem:[#allocation2 + $0x14] sm:$0xf] %vm812, %v775
      %819 = vst.msk [vmem:[#allocation2 + $0x18] sm:$0xf] %vm812, %v777
      %820 = vst.msk [vmem:[#allocation2 + $0x1c] sm:$0xf] %vm812, %v779
      %821 = vst.msk [vmem:[#allocation2 + $0x20] sm:$0xf] %vm812, %v781
      %822 = vst.msk [vmem:[#allocation2 + $0x24] sm:$0xf] %vm812, %v783
      %823 = vst.msk [vmem:[#allocation2 + $0x28] sm:$0xf] %vm812, %v785
      %824 = vst.msk [vmem:[#allocation2 + $0x2c] sm:$0xf] %vm812, %v787
      %825 = vst.msk [vmem:[#allocation2 + $0x30] sm:$0xf] %vm812, %v789
      %826 = vst.msk [vmem:[#allocation2 + $0x34] sm:$0xf] %vm812, %v791
      %827 = vst.msk [vmem:[#allocation2 + $0x38] sm:$0xf] %vm812, %v793
      %828 = vst.msk [vmem:[#allocation2 + $0x3c] sm:$0xf] %vm812, %v795
      %v829 = vld [vmem:[%s731] sm:$0xf]
      %v830 = vld [vmem:[%s731 + $0x4] sm:$0xf]
      %v831 = vld [vmem:[%s731 + $0x8] sm:$0x1]
      %v832 = vld [vmem:[%s731 + $0xc] sm:$0xf]
      %v833 = vld [vmem:[%s731 + $0x10] sm:$0xf]
      %v834 = vld [vmem:[%s731 + $0x14] sm:$0x1]
      %v835 = vld [vmem:[%s731 + $0x18] sm:$0xf]
      %v836 = vld [vmem:[%s731 + $0x1c] sm:$0xf]
      %v837 = vld [vmem:[%s731 + $0x20] sm:$0x1]
      %v838 = vld [vmem:[%s731 + $0x24] sm:$0xf]
      %v839 = vld [vmem:[%s731 + $0x28] sm:$0xf]
      %v840 = vld [vmem:[%s731 + $0x2c] sm:$0x1]
      %v841 = vld [vmem:[%s731 + $0x30] sm:$0xf]
      %v842 = vld [vmem:[%s731 + $0x34] sm:$0xf]
      %v843 = vld [vmem:[%s731 + $0x38] sm:$0x1]
      %v844 = vld [vmem:[%s731 + $0x3c] sm:$0xf]
      %v845 = vld [vmem:[%s731 + $0x40] sm:$0xf]
      %v846 = vld [vmem:[%s731 + $0x44] sm:$0x1]
      %v847 = vld [vmem:[%s731 + $0x48] sm:$0xf]
      %v848 = vld [vmem:[%s731 + $0x4c] sm:$0xf]
      %v849 = vld [vmem:[%s731 + $0x50] sm:$0x1]
      %v850 = vld [vmem:[%s731 + $0x54] sm:$0xf]
      %v851 = vld [vmem:[%s731 + $0x58] sm:$0xf]
      %v852 = vld [vmem:[%s731 + $0x5c] sm:$0x1]
      %v854 = vshrl.u32 %v829, 16
      %v856 = vrot.slane %v854, 4
      %v857 = vshll.u32 %v829, 16
      %v859 = vrot.slane %v857, 5
      %v860 = vor.u32 %v856, %v859
      %v861 = vrot.slane %v860, 4
      %v863 = vshll.u32 %v830, 16
      %v865 = vrot.slane %v863, 5
      %v866 = vsel %vm298, %v861, %v865
      %v867 = vshrl.u32 %v830, 16
      %v869 = vrot.slane %v867, 4
      %v870 = vor.u32 %v869, %v865
      %v871 = vrot.slane %v870, 4
      %v873 = vshll.u32 %v831, 16
      %v875 = vrot.slane %v873, 5
      %v876 = vsel %vm298, %v871, %v875
      %v878 = vshrl.u32 %v832, 16
      %v880 = vrot.slane %v878, 4
      %v881 = vshll.u32 %v832, 16
      %v883 = vrot.slane %v881, 5
      %v884 = vor.u32 %v880, %v883
      %v885 = vrot.slane %v884, 4
      %v887 = vshll.u32 %v833, 16
      %v889 = vrot.slane %v887, 5
      %v890 = vsel %vm298, %v885, %v889
      %v891 = vshrl.u32 %v833, 16
      %v893 = vrot.slane %v891, 4
      %v894 = vor.u32 %v893, %v889
      %v895 = vrot.slane %v894, 4
      %v897 = vshll.u32 %v834, 16
      %v899 = vrot.slane %v897, 5
      %v900 = vsel %vm298, %v895, %v899
      %v902 = vshrl.u32 %v835, 16
      %v904 = vrot.slane %v902, 4
      %v905 = vshll.u32 %v835, 16
      %v907 = vrot.slane %v905, 5
      %v908 = vor.u32 %v904, %v907
      %v909 = vrot.slane %v908, 4
      %v911 = vshll.u32 %v836, 16
      %v913 = vrot.slane %v911, 5
      %v914 = vsel %vm298, %v909, %v913
      %v915 = vshrl.u32 %v836, 16
      %v917 = vrot.slane %v915, 4
      %v918 = vor.u32 %v917, %v913
      %v919 = vrot.slane %v918, 4
      %v921 = vshll.u32 %v837, 16
      %v923 = vrot.slane %v921, 5
      %v924 = vsel %vm298, %v919, %v923
      %v926 = vshrl.u32 %v838, 16
      %v928 = vrot.slane %v926, 4
      %v929 = vshll.u32 %v838, 16
      %v931 = vrot.slane %v929, 5
      %v932 = vor.u32 %v928, %v931
      %v933 = vrot.slane %v932, 4
      %v935 = vshll.u32 %v839, 16
      %v937 = vrot.slane %v935, 5
      %v938 = vsel %vm298, %v933, %v937
      %v939 = vshrl.u32 %v839, 16
      %v941 = vrot.slane %v939, 4
      %v942 = vor.u32 %v941, %v937
      %v943 = vrot.slane %v942, 4
      %v945 = vshll.u32 %v840, 16
      %v947 = vrot.slane %v945, 5
      %v948 = vsel %vm298, %v943, %v947
      %v950 = vshrl.u32 %v841, 16
      %v952 = vrot.slane %v950, 4
      %v953 = vshll.u32 %v841, 16
      %v955 = vrot.slane %v953, 5
      %v956 = vor.u32 %v952, %v955
      %v957 = vrot.slane %v956, 4
      %v959 = vshll.u32 %v842, 16
      %v961 = vrot.slane %v959, 5
      %v962 = vsel %vm298, %v957, %v961
      %v963 = vshrl.u32 %v842, 16
      %v965 = vrot.slane %v963, 4
      %v966 = vor.u32 %v965, %v961
      %v967 = vrot.slane %v966, 4
      %v969 = vshll.u32 %v843, 16
      %v971 = vrot.slane %v969, 5
      %v972 = vsel %vm298, %v967, %v971
      %v974 = vshrl.u32 %v844, 16
      %v976 = vrot.slane %v974, 4
      %v977 = vshll.u32 %v844, 16
      %v979 = vrot.slane %v977, 5
      %v980 = vor.u32 %v976, %v979
      %v981 = vrot.slane %v980, 4
      %v983 = vshll.u32 %v845, 16
      %v985 = vrot.slane %v983, 5
      %v986 = vsel %vm298, %v981, %v985
      %v987 = vshrl.u32 %v845, 16
      %v989 = vrot.slane %v987, 4
      %v990 = vor.u32 %v989, %v985
      %v991 = vrot.slane %v990, 4
      %v993 = vshll.u32 %v846, 16
      %v995 = vrot.slane %v993, 5
      %v996 = vsel %vm298, %v991, %v995
      %v998 = vshrl.u32 %v847, 16
      %v1000 = vrot.slane %v998, 4
      %v1001 = vshll.u32 %v847, 16
      %v1003 = vrot.slane %v1001, 5
      %v1004 = vor.u32 %v1000, %v1003
      %v1005 = vrot.slane %v1004, 4
      %v1007 = vshll.u32 %v848, 16
      %v1009 = vrot.slane %v1007, 5
      %v1010 = vsel %vm298, %v1005, %v1009
      %v1011 = vshrl.u32 %v848, 16
      %v1013 = vrot.slane %v1011, 4
      %v1014 = vor.u32 %v1013, %v1009
      %v1015 = vrot.slane %v1014, 4
      %v1017 = vshll.u32 %v849, 16
      %v1019 = vrot.slane %v1017, 5
      %v1020 = vsel %vm298, %v1015, %v1019
      %v1022 = vshrl.u32 %v850, 16
      %v1024 = vrot.slane %v1022, 4
      %v1025 = vshll.u32 %v850, 16
      %v1027 = vrot.slane %v1025, 5
      %v1028 = vor.u32 %v1024, %v1027
      %v1029 = vrot.slane %v1028, 4
      %v1031 = vshll.u32 %v851, 16
      %v1033 = vrot.slane %v1031, 5
      %v1034 = vsel %vm298, %v1029, %v1033
      %v1035 = vshrl.u32 %v851, 16
      %v1037 = vrot.slane %v1035, 4
      %v1038 = vor.u32 %v1037, %v1033
      %v1039 = vrot.slane %v1038, 4
      %v1041 = vshll.u32 %v852, 16
      %v1043 = vrot.slane %v1041, 5
      %v1044 = vsel %vm298, %v1039, %v1043
      %1045 = vrot.lane.b32.xlu0 %v866, 16
      %v1046 = vpop.permute.xlu0 %1045
      %1047 = vrot.lane.b32.xlu0 %v876, 16
      %v1048 = vpop.permute.xlu0 %1047
      %1049 = vrot.lane.b32.xlu0 %v890, 16
      %v1050 = vpop.permute.xlu0 %1049
      %1051 = vrot.lane.b32.xlu0 %v900, 16
      %v1052 = vpop.permute.xlu0 %1051
      %1053 = vrot.lane.b32.xlu0 %v914, 16
      %v1054 = vpop.permute.xlu0 %1053
      %1055 = vrot.lane.b32.xlu0 %v924, 16
      %v1056 = vpop.permute.xlu0 %1055
      %1057 = vrot.lane.b32.xlu0 %v938, 16
      %v1058 = vpop.permute.xlu0 %1057
      %1059 = vrot.lane.b32.xlu0 %v948, 16
      %v1060 = vpop.permute.xlu0 %1059
      %1061 = vrot.lane.b32.xlu0 %v962, 16
      %v1062 = vpop.permute.xlu0 %1061
      %1063 = vrot.lane.b32.xlu0 %v972, 16
      %v1064 = vpop.permute.xlu0 %1063
      %1065 = vrot.lane.b32.xlu0 %v986, 16
      %v1066 = vpop.permute.xlu0 %1065
      %1067 = vrot.lane.b32.xlu0 %v996, 16
      %v1068 = vpop.permute.xlu0 %1067
      %1069 = vrot.lane.b32.xlu0 %v1010, 16
      %v1070 = vpop.permute.xlu0 %1069
      %1071 = vrot.lane.b32.xlu0 %v1020, 16
      %v1072 = vpop.permute.xlu0 %1071
      %1073 = vrot.lane.b32.xlu0 %v1034, 16
      %v1074 = vpop.permute.xlu0 %1073
      %1075 = vrot.lane.b32.xlu0 %v1044, 16
      %v1076 = vpop.permute.xlu0 %1075
      %vm1093 = vcmask 158848
      %1094 = vst.msk [vmem:[#allocation2] sm:$0xf] %vm1093, %v1046
      %1095 = vst.msk [vmem:[#allocation2 + $0x4] sm:$0xf] %vm1093, %v1048
      %1096 = vst.msk [vmem:[#allocation2 + $0x8] sm:$0xf] %vm1093, %v1050
      %1097 = vst.msk [vmem:[#allocation2 + $0xc] sm:$0xf] %vm1093, %v1052
      %1098 = vst.msk [vmem:[#allocation2 + $0x10] sm:$0xf] %vm1093, %v1054
      %1099 = vst.msk [vmem:[#allocation2 + $0x14] sm:$0xf] %vm1093, %v1056
      %1100 = vst.msk [vmem:[#allocation2 + $0x18] sm:$0xf] %vm1093, %v1058
      %1101 = vst.msk [vmem:[#allocation2 + $0x1c] sm:$0xf] %vm1093, %v1060
      %1102 = vst.msk [vmem:[#allocation2 + $0x20] sm:$0xf] %vm1093, %v1062
      %1103 = vst.msk [vmem:[#allocation2 + $0x24] sm:$0xf] %vm1093, %v1064
      %1104 = vst.msk [vmem:[#allocation2 + $0x28] sm:$0xf] %vm1093, %v1066
      %1105 = vst.msk [vmem:[#allocation2 + $0x2c] sm:$0xf] %vm1093, %v1068
      %1106 = vst.msk [vmem:[#allocation2 + $0x30] sm:$0xf] %vm1093, %v1070
      %1107 = vst.msk [vmem:[#allocation2 + $0x34] sm:$0xf] %vm1093, %v1072
      %1108 = vst.msk [vmem:[#allocation2 + $0x38] sm:$0xf] %vm1093, %v1074
      %1109 = vst.msk [vmem:[#allocation2 + $0x3c] sm:$0xf] %vm1093, %v1076
      %v1110 = vld [vmem:[%s731] sm:$0xe]
      %v1111 = vld [vmem:[%s731 + $0x4] sm:$0xf]
      %v1112 = vld [vmem:[%s731 + $0x8] sm:$0x1]
      %v1113 = vld [vmem:[%s731 + $0xc] sm:$0xe]
      %v1114 = vld [vmem:[%s731 + $0x10] sm:$0xf]
      %v1115 = vld [vmem:[%s731 + $0x14] sm:$0x1]
      %v1116 = vld [vmem:[%s731 + $0x18] sm:$0xe]
      %v1117 = vld [vmem:[%s731 + $0x1c] sm:$0xf]
      %v1118 = vld [vmem:[%s731 + $0x20] sm:$0x1]
      %v1119 = vld [vmem:[%s731 + $0x24] sm:$0xe]
      %v1120 = vld [vmem:[%s731 + $0x28] sm:$0xf]
      %v1121 = vld [vmem:[%s731 + $0x2c] sm:$0x1]
      %v1122 = vld [vmem:[%s731 + $0x30] sm:$0xe]
      %v1123 = vld [vmem:[%s731 + $0x34] sm:$0xf]
      %v1124 = vld [vmem:[%s731 + $0x38] sm:$0x1]
      %v1125 = vld [vmem:[%s731 + $0x3c] sm:$0xe]
      %v1126 = vld [vmem:[%s731 + $0x40] sm:$0xf]
      %v1127 = vld [vmem:[%s731 + $0x44] sm:$0x1]
      %v1128 = vld [vmem:[%s731 + $0x48] sm:$0xe]
      %v1129 = vld [vmem:[%s731 + $0x4c] sm:$0xf]
      %v1130 = vld [vmem:[%s731 + $0x50] sm:$0x1]
      %v1131 = vld [vmem:[%s731 + $0x54] sm:$0xe]
      %v1132 = vld [vmem:[%s731 + $0x58] sm:$0xf]
      %v1133 = vld [vmem:[%s731 + $0x5c] sm:$0x1]
      %v1158 = vrot.slane %v1110, 5
      %v1159 = vrot.slane %v1158, 4
      %v1160 = vrot.slane %v1111, 5
      %v1161 = vsel %vm606, %v1159, %v1160
      %v1162 = vrot.slane %v1160, 4
      %v1163 = vrot.slane %v1112, 5
      %v1164 = vsel %vm606, %v1162, %v1163
      %v1165 = vrot.slane %v1113, 5
      %v1166 = vrot.slane %v1165, 4
      %v1167 = vrot.slane %v1114, 5
      %v1168 = vsel %vm606, %v1166, %v1167
      %v1169 = vrot.slane %v1167, 4
      %v1170 = vrot.slane %v1115, 5
      %v1171 = vsel %vm606, %v1169, %v1170
      %v1172 = vrot.slane %v1116, 5
      %v1173 = vrot.slane %v1172, 4
      %v1174 = vrot.slane %v1117, 5
      %v1175 = vsel %vm606, %v1173, %v1174
      %v1176 = vrot.slane %v1174, 4
      %v1177 = vrot.slane %v1118, 5
      %v1178 = vsel %vm606, %v1176, %v1177
      %v1179 = vrot.slane %v1119, 5
      %v1180 = vrot.slane %v1179, 4
      %v1181 = vrot.slane %v1120, 5
      %v1182 = vsel %vm606, %v1180, %v1181
      %v1183 = vrot.slane %v1181, 4
      %v1184 = vrot.slane %v1121, 5
      %v1185 = vsel %vm606, %v1183, %v1184
      %v1186 = vrot.slane %v1122, 5
      %v1187 = vrot.slane %v1186, 4
      %v1188 = vrot.slane %v1123, 5
      %v1189 = vsel %vm606, %v1187, %v1188
      %v1190 = vrot.slane %v1188, 4
      %v1191 = vrot.slane %v1124, 5
      %v1192 = vsel %vm606, %v1190, %v1191
      %v1193 = vrot.slane %v1125, 5
      %v1194 = vrot.slane %v1193, 4
      %v1195 = vrot.slane %v1126, 5
      %v1196 = vsel %vm606, %v1194, %v1195
      %v1197 = vrot.slane %v1195, 4
      %v1198 = vrot.slane %v1127, 5
      %v1199 = vsel %vm606, %v1197, %v1198
      %v1200 = vrot.slane %v1128, 5
      %v1201 = vrot.slane %v1200, 4
      %v1202 = vrot.slane %v1129, 5
      %v1203 = vsel %vm606, %v1201, %v1202
      %v1204 = vrot.slane %v1202, 4
      %v1205 = vrot.slane %v1130, 5
      %v1206 = vsel %vm606, %v1204, %v1205
      %v1207 = vrot.slane %v1131, 5
      %v1208 = vrot.slane %v1207, 4
      %v1209 = vrot.slane %v1132, 5
      %v1210 = vsel %vm606, %v1208, %v1209
      %v1211 = vrot.slane %v1209, 4
      %v1212 = vrot.slane %v1133, 5
      %v1213 = vsel %vm606, %v1211, %v1212
      %1214 = vrot.lane.b32.xlu0 %v1161, 20
      %v1215 = vpop.permute.xlu0 %1214
      %1216 = vrot.lane.b32.xlu0 %v1164, 20
      %v1217 = vpop.permute.xlu0 %1216
      %1218 = vrot.lane.b32.xlu0 %v1168, 20
      %v1219 = vpop.permute.xlu0 %1218
      %1220 = vrot.lane.b32.xlu0 %v1171, 20
      %v1221 = vpop.permute.xlu0 %1220
      %1222 = vrot.lane.b32.xlu0 %v1175, 20
      %v1223 = vpop.permute.xlu0 %1222
      %1224 = vrot.lane.b32.xlu0 %v1178, 20
      %v1225 = vpop.permute.xlu0 %1224
      %1226 = vrot.lane.b32.xlu0 %v1182, 20
      %v1227 = vpop.permute.xlu0 %1226
      %1228 = vrot.lane.b32.xlu0 %v1185, 20
      %v1229 = vpop.permute.xlu0 %1228
      %1230 = vrot.lane.b32.xlu0 %v1189, 20
      %v1231 = vpop.permute.xlu0 %1230
      %1232 = vrot.lane.b32.xlu0 %v1192, 20
      %v1233 = vpop.permute.xlu0 %1232
      %1234 = vrot.lane.b32.xlu0 %v1196, 20
      %v1235 = vpop.permute.xlu0 %1234
      %1236 = vrot.lane.b32.xlu0 %v1199, 20
      %v1237 = vpop.permute.xlu0 %1236
      %1238 = vrot.lane.b32.xlu0 %v1203, 20
      %v1239 = vpop.permute.xlu0 %1238
      %1240 = vrot.lane.b32.xlu0 %v1206, 20
      %v1241 = vpop.permute.xlu0 %1240
      %1242 = vrot.lane.b32.xlu0 %v1210, 20
      %v1243 = vpop.permute.xlu0 %1242
      %1244 = vrot.lane.b32.xlu0 %v1213, 20
      %v1245 = vpop.permute.xlu0 %1244
      %vm1262 = vcmask 191648
      %1263 = vst.msk [vmem:[#allocation2] sm:$0xf] %vm1262, %v1215
      %1264 = vst.msk [vmem:[#allocation2 + $0x4] sm:$0xf] %vm1262, %v1217
      %1265 = vst.msk [vmem:[#allocation2 + $0x8] sm:$0xf] %vm1262, %v1219
      %1266 = vst.msk [vmem:[#allocation2 + $0xc] sm:$0xf] %vm1262, %v1221
      %1267 = vst.msk [vmem:[#allocation2 + $0x10] sm:$0xf] %vm1262, %v1223
      %1268 = vst.msk [vmem:[#allocation2 + $0x14] sm:$0xf] %vm1262, %v1225
      %1269 = vst.msk [vmem:[#allocation2 + $0x18] sm:$0xf] %vm1262, %v1227
      %1270 = vst.msk [vmem:[#allocation2 + $0x1c] sm:$0xf] %vm1262, %v1229
      %1271 = vst.msk [vmem:[#allocation2 + $0x20] sm:$0xf] %vm1262, %v1231
      %1272 = vst.msk [vmem:[#allocation2 + $0x24] sm:$0xf] %vm1262, %v1233
      %1273 = vst.msk [vmem:[#allocation2 + $0x28] sm:$0xf] %vm1262, %v1235
      %1274 = vst.msk [vmem:[#allocation2 + $0x2c] sm:$0xf] %vm1262, %v1237
      %1275 = vst.msk [vmem:[#allocation2 + $0x30] sm:$0xf] %vm1262, %v1239
      %1276 = vst.msk [vmem:[#allocation2 + $0x34] sm:$0xf] %vm1262, %v1241
      %1277 = vst.msk [vmem:[#allocation2 + $0x38] sm:$0xf] %vm1262, %v1243
      %1278 = vst.msk [vmem:[#allocation2 + $0x3c] sm:$0xf] %vm1262, %v1245
      %s1279 = sadd.s32 %s218, 2
      %s1280 = smul.u32 %s1279, 3
      %s1281 = smul.addr %s1280, 4
      %s1282 = scalar_lea.vmem %s197, %s1281
      %v1283 = vld [vmem:[%s1282] sm:$0xf]
      %v1284 = vld [vmem:[%s1282 + $0x4] sm:$0xf]
      %v1285 = vld [vmem:[%s1282 + $0xc] sm:$0xf]
      %v1286 = vld [vmem:[%s1282 + $0x10] sm:$0xf]
      %v1287 = vld [vmem:[%s1282 + $0x18] sm:$0xf]
      %v1288 = vld [vmem:[%s1282 + $0x1c] sm:$0xf]
      %v1289 = vld [vmem:[%s1282 + $0x24] sm:$0xf]
      %v1290 = vld [vmem:[%s1282 + $0x28] sm:$0xf]
      %v1291 = vld [vmem:[%s1282 + $0x30] sm:$0xf]
      %v1292 = vld [vmem:[%s1282 + $0x34] sm:$0xf]
      %v1293 = vld [vmem:[%s1282 + $0x3c] sm:$0xf]
      %v1294 = vld [vmem:[%s1282 + $0x40] sm:$0xf]
      %v1295 = vld [vmem:[%s1282 + $0x48] sm:$0xf]
      %v1296 = vld [vmem:[%s1282 + $0x4c] sm:$0xf]
      %v1297 = vld [vmem:[%s1282 + $0x54] sm:$0xf]
      %v1298 = vld [vmem:[%s1282 + $0x58] sm:$0xf]
      %1315 = vrot.lane.b32.xlu0 %v1283, 24
      %v1316 = vpop.permute.xlu0 %1315
      %1317 = vrot.lane.b32.xlu0 %v1284, 24
      %v1318 = vpop.permute.xlu0 %1317
      %1319 = vrot.lane.b32.xlu0 %v1285, 24
      %v1320 = vpop.permute.xlu0 %1319
      %1321 = vrot.lane.b32.xlu0 %v1286, 24
      %v1322 = vpop.permute.xlu0 %1321
      %1323 = vrot.lane.b32.xlu0 %v1287, 24
      %v1324 = vpop.permute.xlu0 %1323
      %1325 = vrot.lane.b32.xlu0 %v1288, 24
      %v1326 = vpop.permute.xlu0 %1325
      %1327 = vrot.lane.b32.xlu0 %v1289, 24
      %v1328 = vpop.permute.xlu0 %1327
      %1329 = vrot.lane.b32.xlu0 %v1290, 24
      %v1330 = vpop.permute.xlu0 %1329
      %1331 = vrot.lane.b32.xlu0 %v1291, 24
      %v1332 = vpop.permute.xlu0 %1331
      %1333 = vrot.lane.b32.xlu0 %v1292, 24
      %v1334 = vpop.permute.xlu0 %1333
      %1335 = vrot.lane.b32.xlu0 %v1293, 24
      %v1336 = vpop.permute.xlu0 %1335
      %1337 = vrot.lane.b32.xlu0 %v1294, 24
      %v1338 = vpop.permute.xlu0 %1337
      %1339 = vrot.lane.b32.xlu0 %v1295, 24
      %v1340 = vpop.permute.xlu0 %1339
      %1341 = vrot.lane.b32.xlu0 %v1296, 24
      %v1342 = vpop.permute.xlu0 %1341
      %1343 = vrot.lane.b32.xlu0 %v1297, 24
      %v1344 = vpop.permute.xlu0 %1343
      %1345 = vrot.lane.b32.xlu0 %v1298, 24
      %v1346 = vpop.permute.xlu0 %1345
      %vm1363 = vcmask 224448
      %1364 = vst.msk [vmem:[#allocation2] sm:$0xf] %vm1363, %v1316
      %1365 = vst.msk [vmem:[#allocation2 + $0x4] sm:$0xf] %vm1363, %v1318
      %1366 = vst.msk [vmem:[#allocation2 + $0x8] sm:$0xf] %vm1363, %v1320
      %1367 = vst.msk [vmem:[#allocation2 + $0xc] sm:$0xf] %vm1363, %v1322
      %1368 = vst.msk [vmem:[#allocation2 + $0x10] sm:$0xf] %vm1363, %v1324
      %1369 = vst.msk [vmem:[#allocation2 + $0x14] sm:$0xf] %vm1363, %v1326
      %1370 = vst.msk [vmem:[#allocation2 + $0x18] sm:$0xf] %vm1363, %v1328
      %1371 = vst.msk [vmem:[#allocation2 + $0x1c] sm:$0xf] %vm1363, %v1330
      %1372 = vst.msk [vmem:[#allocation2 + $0x20] sm:$0xf] %vm1363, %v1332
      %1373 = vst.msk [vmem:[#allocation2 + $0x24] sm:$0xf] %vm1363, %v1334
      %1374 = vst.msk [vmem:[#allocation2 + $0x28] sm:$0xf] %vm1363, %v1336
      %1375 = vst.msk [vmem:[#allocation2 + $0x2c] sm:$0xf] %vm1363, %v1338
      %1376 = vst.msk [vmem:[#allocation2 + $0x30] sm:$0xf] %vm1363, %v1340
      %1377 = vst.msk [vmem:[#allocation2 + $0x34] sm:$0xf] %vm1363, %v1342
      %1378 = vst.msk [vmem:[#allocation2 + $0x38] sm:$0xf] %vm1363, %v1344
      %1379 = vst.msk [vmem:[#allocation2 + $0x3c] sm:$0xf] %vm1363, %v1346
      %v1380 = vld [vmem:[%s1282] sm:$0xf]
      %v1381 = vld [vmem:[%s1282 + $0x4] sm:$0xf]
      %v1382 = vld [vmem:[%s1282 + $0x8] sm:$0x1]
      %v1383 = vld [vmem:[%s1282 + $0xc] sm:$0xf]
      %v1384 = vld [vmem:[%s1282 + $0x10] sm:$0xf]
      %v1385 = vld [vmem:[%s1282 + $0x14] sm:$0x1]
      %v1386 = vld [vmem:[%s1282 + $0x18] sm:$0xf]
      %v1387 = vld [vmem:[%s1282 + $0x1c] sm:$0xf]
      %v1388 = vld [vmem:[%s1282 + $0x20] sm:$0x1]
      %v1389 = vld [vmem:[%s1282 + $0x24] sm:$0xf]
      %v1390 = vld [vmem:[%s1282 + $0x28] sm:$0xf]
      %v1391 = vld [vmem:[%s1282 + $0x2c] sm:$0x1]
      %v1392 = vld [vmem:[%s1282 + $0x30] sm:$0xf]
      %v1393 = vld [vmem:[%s1282 + $0x34] sm:$0xf]
      %v1394 = vld [vmem:[%s1282 + $0x38] sm:$0x1]
      %v1395 = vld [vmem:[%s1282 + $0x3c] sm:$0xf]
      %v1396 = vld [vmem:[%s1282 + $0x40] sm:$0xf]
      %v1397 = vld [vmem:[%s1282 + $0x44] sm:$0x1]
      %v1398 = vld [vmem:[%s1282 + $0x48] sm:$0xf]
      %v1399 = vld [vmem:[%s1282 + $0x4c] sm:$0xf]
      %v1400 = vld [vmem:[%s1282 + $0x50] sm:$0x1]
      %v1401 = vld [vmem:[%s1282 + $0x54] sm:$0xf]
      %v1402 = vld [vmem:[%s1282 + $0x58] sm:$0xf]
      %v1403 = vld [vmem:[%s1282 + $0x5c] sm:$0x1]
      %v1405 = vshrl.u32 %v1380, 16
      %v1407 = vrot.slane %v1405, 4
      %v1408 = vshll.u32 %v1380, 16
      %v1410 = vrot.slane %v1408, 5
      %v1411 = vor.u32 %v1407, %v1410
      %v1412 = vrot.slane %v1411, 4
      %v1414 = vshll.u32 %v1381, 16
      %v1416 = vrot.slane %v1414, 5
      %v1417 = vsel %vm298, %v1412, %v1416
      %v1418 = vshrl.u32 %v1381, 16
      %v1420 = vrot.slane %v1418, 4
      %v1421 = vor.u32 %v1420, %v1416
      %v1422 = vrot.slane %v1421, 4
      %v1424 = vshll.u32 %v1382, 16
      %v1426 = vrot.slane %v1424, 5
      %v1427 = vsel %vm298, %v1422, %v1426
      %v1429 = vshrl.u32 %v1383, 16
      %v1431 = vrot.slane %v1429, 4
      %v1432 = vshll.u32 %v1383, 16
      %v1434 = vrot.slane %v1432, 5
      %v1435 = vor.u32 %v1431, %v1434
      %v1436 = vrot.slane %v1435, 4
      %v1438 = vshll.u32 %v1384, 16
      %v1440 = vrot.slane %v1438, 5
      %v1441 = vsel %vm298, %v1436, %v1440
      %v1442 = vshrl.u32 %v1384, 16
      %v1444 = vrot.slane %v1442, 4
      %v1445 = vor.u32 %v1444, %v1440
      %v1446 = vrot.slane %v1445, 4
      %v1448 = vshll.u32 %v1385, 16
      %v1450 = vrot.slane %v1448, 5
      %v1451 = vsel %vm298, %v1446, %v1450
      %v1453 = vshrl.u32 %v1386, 16
      %v1455 = vrot.slane %v1453, 4
      %v1456 = vshll.u32 %v1386, 16
      %v1458 = vrot.slane %v1456, 5
      %v1459 = vor.u32 %v1455, %v1458
      %v1460 = vrot.slane %v1459, 4
      %v1462 = vshll.u32 %v1387, 16
      %v1464 = vrot.slane %v1462, 5
      %v1465 = vsel %vm298, %v1460, %v1464
      %v1466 = vshrl.u32 %v1387, 16
      %v1468 = vrot.slane %v1466, 4
      %v1469 = vor.u32 %v1468, %v1464
      %v1470 = vrot.slane %v1469, 4
      %v1472 = vshll.u32 %v1388, 16
      %v1474 = vrot.slane %v1472, 5
      %v1475 = vsel %vm298, %v1470, %v1474
      %v1477 = vshrl.u32 %v1389, 16
      %v1479 = vrot.slane %v1477, 4
      %v1480 = vshll.u32 %v1389, 16
      %v1482 = vrot.slane %v1480, 5
      %v1483 = vor.u32 %v1479, %v1482
      %v1484 = vrot.slane %v1483, 4
      %v1486 = vshll.u32 %v1390, 16
      %v1488 = vrot.slane %v1486, 5
      %v1489 = vsel %vm298, %v1484, %v1488
      %v1490 = vshrl.u32 %v1390, 16
      %v1492 = vrot.slane %v1490, 4
      %v1493 = vor.u32 %v1492, %v1488
      %v1494 = vrot.slane %v1493, 4
      %v1496 = vshll.u32 %v1391, 16
      %v1498 = vrot.slane %v1496, 5
      %v1499 = vsel %vm298, %v1494, %v1498
      %v1501 = vshrl.u32 %v1392, 16
      %v1503 = vrot.slane %v1501, 4
      %v1504 = vshll.u32 %v1392, 16
      %v1506 = vrot.slane %v1504, 5
      %v1507 = vor.u32 %v1503, %v1506
      %v1508 = vrot.slane %v1507, 4
      %v1510 = vshll.u32 %v1393, 16
      %v1512 = vrot.slane %v1510, 5
      %v1513 = vsel %vm298, %v1508, %v1512
      %v1514 = vshrl.u32 %v1393, 16
      %v1516 = vrot.slane %v1514, 4
      %v1517 = vor.u32 %v1516, %v1512
      %v1518 = vrot.slane %v1517, 4
      %v1520 = vshll.u32 %v1394, 16
      %v1522 = vrot.slane %v1520, 5
      %v1523 = vsel %vm298, %v1518, %v1522
      %v1525 = vshrl.u32 %v1395, 16
      %v1527 = vrot.slane %v1525, 4
      %v1528 = vshll.u32 %v1395, 16
      %v1530 = vrot.slane %v1528, 5
      %v1531 = vor.u32 %v1527, %v1530
      %v1532 = vrot.slane %v1531, 4
      %v1534 = vshll.u32 %v1396, 16
      %v1536 = vrot.slane %v1534, 5
      %v1537 = vsel %vm298, %v1532, %v1536
      %v1538 = vshrl.u32 %v1396, 16
      %v1540 = vrot.slane %v1538, 4
      %v1541 = vor.u32 %v1540, %v1536
      %v1542 = vrot.slane %v1541, 4
      %v1544 = vshll.u32 %v1397, 16
      %v1546 = vrot.slane %v1544, 5
      %v1547 = vsel %vm298, %v1542, %v1546
      %v1549 = vshrl.u32 %v1398, 16
      %v1551 = vrot.slane %v1549, 4
      %v1552 = vshll.u32 %v1398, 16
      %v1554 = vrot.slane %v1552, 5
      %v1555 = vor.u32 %v1551, %v1554
      %v1556 = vrot.slane %v1555, 4
      %v1558 = vshll.u32 %v1399, 16
      %v1560 = vrot.slane %v1558, 5
      %v1561 = vsel %vm298, %v1556, %v1560
      %v1562 = vshrl.u32 %v1399, 16
      %v1564 = vrot.slane %v1562, 4
      %v1565 = vor.u32 %v1564, %v1560
      %v1566 = vrot.slane %v1565, 4
      %v1568 = vshll.u32 %v1400, 16
      %v1570 = vrot.slane %v1568, 5
      %v1571 = vsel %vm298, %v1566, %v1570
      %v1573 = vshrl.u32 %v1401, 16
      %v1575 = vrot.slane %v1573, 4
      %v1576 = vshll.u32 %v1401, 16
      %v1578 = vrot.slane %v1576, 5
      %v1579 = vor.u32 %v1575, %v1578
      %v1580 = vrot.slane %v1579, 4
      %v1582 = vshll.u32 %v1402, 16
      %v1584 = vrot.slane %v1582, 5
      %v1585 = vsel %vm298, %v1580, %v1584
      %v1586 = vshrl.u32 %v1402, 16
      %v1588 = vrot.slane %v1586, 4
      %v1589 = vor.u32 %v1588, %v1584
      %v1590 = vrot.slane %v1589, 4
      %v1592 = vshll.u32 %v1403, 16
      %v1594 = vrot.slane %v1592, 5
      %v1595 = vsel %vm298, %v1590, %v1594
      %1596 = vrot.lane.b32.xlu0 %v1417, 28
      %v1597 = vpop.permute.xlu0 %1596
      %1598 = vrot.lane.b32.xlu0 %v1427, 28
      %v1599 = vpop.permute.xlu0 %1598
      %1600 = vrot.lane.b32.xlu0 %v1441, 28
      %v1601 = vpop.permute.xlu0 %1600
      %1602 = vrot.lane.b32.xlu0 %v1451, 28
      %v1603 = vpop.permute.xlu0 %1602
      %1604 = vrot.lane.b32.xlu0 %v1465, 28
      %v1605 = vpop.permute.xlu0 %1604
      %1606 = vrot.lane.b32.xlu0 %v1475, 28
      %v1607 = vpop.permute.xlu0 %1606
      %1608 = vrot.lane.b32.xlu0 %v1489, 28
      %v1609 = vpop.permute.xlu0 %1608
      %1610 = vrot.lane.b32.xlu0 %v1499, 28
      %v1611 = vpop.permute.xlu0 %1610
      %1612 = vrot.lane.b32.xlu0 %v1513, 28
      %v1613 = vpop.permute.xlu0 %1612
      %1614 = vrot.lane.b32.xlu0 %v1523, 28
      %v1615 = vpop.permute.xlu0 %1614
      %1616 = vrot.lane.b32.xlu0 %v1537, 28
      %v1617 = vpop.permute.xlu0 %1616
      %1618 = vrot.lane.b32.xlu0 %v1547, 28
      %v1619 = vpop.permute.xlu0 %1618
      %1620 = vrot.lane.b32.xlu0 %v1561, 28
      %v1621 = vpop.permute.xlu0 %1620
      %1622 = vrot.lane.b32.xlu0 %v1571, 28
      %v1623 = vpop.permute.xlu0 %1622
      %1624 = vrot.lane.b32.xlu0 %v1585, 28
      %v1625 = vpop.permute.xlu0 %1624
      %1626 = vrot.lane.b32.xlu0 %v1595, 28
      %v1627 = vpop.permute.xlu0 %1626
      %vm1644 = vcmask 257248
      %1645 = vst.msk [vmem:[#allocation2] sm:$0xf] %vm1644, %v1597
      %1646 = vst.msk [vmem:[#allocation2 + $0x4] sm:$0xf] %vm1644, %v1599
      %1647 = vst.msk [vmem:[#allocation2 + $0x8] sm:$0xf] %vm1644, %v1601
      %1648 = vst.msk [vmem:[#allocation2 + $0xc] sm:$0xf] %vm1644, %v1603
      %1649 = vst.msk [vmem:[#allocation2 + $0x10] sm:$0xf] %vm1644, %v1605
      %1650 = vst.msk [vmem:[#allocation2 + $0x14] sm:$0xf] %vm1644, %v1607
      %1651 = vst.msk [vmem:[#allocation2 + $0x18] sm:$0xf] %vm1644, %v1609
      %1652 = vst.msk [vmem:[#allocation2 + $0x1c] sm:$0xf] %vm1644, %v1611
      %1653 = vst.msk [vmem:[#allocation2 + $0x20] sm:$0xf] %vm1644, %v1613
      %1654 = vst.msk [vmem:[#allocation2 + $0x24] sm:$0xf] %vm1644, %v1615
      %1655 = vst.msk [vmem:[#allocation2 + $0x28] sm:$0xf] %vm1644, %v1617
      %1656 = vst.msk [vmem:[#allocation2 + $0x2c] sm:$0xf] %vm1644, %v1619
      %1657 = vst.msk [vmem:[#allocation2 + $0x30] sm:$0xf] %vm1644, %v1621
      %1658 = vst.msk [vmem:[#allocation2 + $0x34] sm:$0xf] %vm1644, %v1623
      %1659 = vst.msk [vmem:[#allocation2 + $0x38] sm:$0xf] %vm1644, %v1625
      %1660 = vst.msk [vmem:[#allocation2 + $0x3c] sm:$0xf] %vm1644, %v1627
      %v1661 = vld [vmem:[%s1282] sm:$0xe]
      %v1662 = vld [vmem:[%s1282 + $0x4] sm:$0xf]
      %v1663 = vld [vmem:[%s1282 + $0x8] sm:$0x1]
      %v1664 = vld [vmem:[%s1282 + $0xc] sm:$0xe]
      %v1665 = vld [vmem:[%s1282 + $0x10] sm:$0xf]
      %v1666 = vld [vmem:[%s1282 + $0x14] sm:$0x1]
      %v1667 = vld [vmem:[%s1282 + $0x18] sm:$0xe]
      %v1668 = vld [vmem:[%s1282 + $0x1c] sm:$0xf]
      %v1669 = vld [vmem:[%s1282 + $0x20] sm:$0x1]
      %v1670 = vld [vmem:[%s1282 + $0x24] sm:$0xe]
      %v1671 = vld [vmem:[%s1282 + $0x28] sm:$0xf]
      %v1672 = vld [vmem:[%s1282 + $0x2c] sm:$0x1]
      %v1673 = vld [vmem:[%s1282 + $0x30] sm:$0xe]
      %v1674 = vld [vmem:[%s1282 + $0x34] sm:$0xf]
      %v1675 = vld [vmem:[%s1282 + $0x38] sm:$0x1]
      %v1676 = vld [vmem:[%s1282 + $0x3c] sm:$0xe]
      %v1677 = vld [vmem:[%s1282 + $0x40] sm:$0xf]
      %v1678 = vld [vmem:[%s1282 + $0x44] sm:$0x1]
      %v1679 = vld [vmem:[%s1282 + $0x48] sm:$0xe]
      %v1680 = vld [vmem:[%s1282 + $0x4c] sm:$0xf]
      %v1681 = vld [vmem:[%s1282 + $0x50] sm:$0x1]
      %v1682 = vld [vmem:[%s1282 + $0x54] sm:$0xe]
      %v1683 = vld [vmem:[%s1282 + $0x58] sm:$0xf]
      %v1684 = vld [vmem:[%s1282 + $0x5c] sm:$0x1]
      %v1709 = vrot.slane %v1661, 5
      %v1710 = vrot.slane %v1709, 4
      %v1711 = vrot.slane %v1662, 5
      %v1712 = vsel %vm606, %v1710, %v1711
      %v1713 = vrot.slane %v1711, 4
      %v1714 = vrot.slane %v1663, 5
      %v1715 = vsel %vm606, %v1713, %v1714
      %v1716 = vrot.slane %v1664, 5
      %v1717 = vrot.slane %v1716, 4
      %v1718 = vrot.slane %v1665, 5
      %v1719 = vsel %vm606, %v1717, %v1718
      %v1720 = vrot.slane %v1718, 4
      %v1721 = vrot.slane %v1666, 5
      %v1722 = vsel %vm606, %v1720, %v1721
      %v1723 = vrot.slane %v1667, 5
      %v1724 = vrot.slane %v1723, 4
      %v1725 = vrot.slane %v1668, 5
      %v1726 = vsel %vm606, %v1724, %v1725
      %v1727 = vrot.slane %v1725, 4
      %v1728 = vrot.slane %v1669, 5
      %v1729 = vsel %vm606, %v1727, %v1728
      %v1730 = vrot.slane %v1670, 5
      %v1731 = vrot.slane %v1730, 4
      %v1732 = vrot.slane %v1671, 5
      %v1733 = vsel %vm606, %v1731, %v1732
      %v1734 = vrot.slane %v1732, 4
      %v1735 = vrot.slane %v1672, 5
      %v1736 = vsel %vm606, %v1734, %v1735
      %v1737 = vrot.slane %v1673, 5
      %v1738 = vrot.slane %v1737, 4
      %v1739 = vrot.slane %v1674, 5
      %v1740 = vsel %vm606, %v1738, %v1739
      %v1741 = vrot.slane %v1739, 4
      %v1742 = vrot.slane %v1675, 5
      %v1743 = vsel %vm606, %v1741, %v1742
      %v1744 = vrot.slane %v1676, 5
      %v1745 = vrot.slane %v1744, 4
      %v1746 = vrot.slane %v1677, 5
      %v1747 = vsel %vm606, %v1745, %v1746
      %v1748 = vrot.slane %v1746, 4
      %v1749 = vrot.slane %v1678, 5
      %v1750 = vsel %vm606, %v1748, %v1749
      %v1751 = vrot.slane %v1679, 5
      %v1752 = vrot.slane %v1751, 4
      %v1753 = vrot.slane %v1680, 5
      %v1754 = vsel %vm606, %v1752, %v1753
      %v1755 = vrot.slane %v1753, 4
      %v1756 = vrot.slane %v1681, 5
      %v1757 = vsel %vm606, %v1755, %v1756
      %v1758 = vrot.slane %v1682, 5
      %v1759 = vrot.slane %v1758, 4
      %v1760 = vrot.slane %v1683, 5
      %v1761 = vsel %vm606, %v1759, %v1760
      %v1762 = vrot.slane %v1760, 4
      %v1763 = vrot.slane %v1684, 5
      %v1764 = vsel %vm606, %v1762, %v1763
      %1765 = vrot.lane.b32.xlu0 %v1712, 32
      %v1766 = vpop.permute.xlu0 %1765
      %1767 = vrot.lane.b32.xlu0 %v1715, 32
      %v1768 = vpop.permute.xlu0 %1767
      %1769 = vrot.lane.b32.xlu0 %v1719, 32
      %v1770 = vpop.permute.xlu0 %1769
      %1771 = vrot.lane.b32.xlu0 %v1722, 32
      %v1772 = vpop.permute.xlu0 %1771
      %1773 = vrot.lane.b32.xlu0 %v1726, 32
      %v1774 = vpop.permute.xlu0 %1773
      %1775 = vrot.lane.b32.xlu0 %v1729, 32
      %v1776 = vpop.permute.xlu0 %1775
      %1777 = vrot.lane.b32.xlu0 %v1733, 32
      %v1778 = vpop.permute.xlu0 %1777
      %1779 = vrot.lane.b32.xlu0 %v1736, 32
      %v1780 = vpop.permute.xlu0 %1779
      %1781 = vrot.lane.b32.xlu0 %v1740, 32
      %v1782 = vpop.permute.xlu0 %1781
      %1783 = vrot.lane.b32.xlu0 %v1743, 32
      %v1784 = vpop.permute.xlu0 %1783
      %1785 = vrot.lane.b32.xlu0 %v1747, 32
      %v1786 = vpop.permute.xlu0 %1785
      %1787 = vrot.lane.b32.xlu0 %v1750, 32
      %v1788 = vpop.permute.xlu0 %1787
      %1789 = vrot.lane.b32.xlu0 %v1754, 32
      %v1790 = vpop.permute.xlu0 %1789
      %1791 = vrot.lane.b32.xlu0 %v1757, 32
      %v1792 = vpop.permute.xlu0 %1791
      %1793 = vrot.lane.b32.xlu0 %v1761, 32
      %v1794 = vpop.permute.xlu0 %1793
      %1795 = vrot.lane.b32.xlu0 %v1764, 32
      %v1796 = vpop.permute.xlu0 %1795
      %vm1813 = vcmask 290048
      %1814 = vst.msk [vmem:[#allocation2] sm:$0xf] %vm1813, %v1766
      %1815 = vst.msk [vmem:[#allocation2 + $0x4] sm:$0xf] %vm1813, %v1768
      %1816 = vst.msk [vmem:[#allocation2 + $0x8] sm:$0xf] %vm1813, %v1770
      %1817 = vst.msk [vmem:[#allocation2 + $0xc] sm:$0xf] %vm1813, %v1772
      %1818 = vst.msk [vmem:[#allocation2 + $0x10] sm:$0xf] %vm1813, %v1774
      %1819 = vst.msk [vmem:[#allocation2 + $0x14] sm:$0xf] %vm1813, %v1776
      %1820 = vst.msk [vmem:[#allocation2 + $0x18] sm:$0xf] %vm1813, %v1778
      %1821 = vst.msk [vmem:[#allocation2 + $0x1c] sm:$0xf] %vm1813, %v1780
      %1822 = vst.msk [vmem:[#allocation2 + $0x20] sm:$0xf] %vm1813, %v1782
      %1823 = vst.msk [vmem:[#allocation2 + $0x24] sm:$0xf] %vm1813, %v1784
      %1824 = vst.msk [vmem:[#allocation2 + $0x28] sm:$0xf] %vm1813, %v1786
      %1825 = vst.msk [vmem:[#allocation2 + $0x2c] sm:$0xf] %vm1813, %v1788
      %1826 = vst.msk [vmem:[#allocation2 + $0x30] sm:$0xf] %vm1813, %v1790
      %1827 = vst.msk [vmem:[#allocation2 + $0x34] sm:$0xf] %vm1813, %v1792
      %1828 = vst.msk [vmem:[#allocation2 + $0x38] sm:$0xf] %vm1813, %v1794
      %1829 = vst.msk [vmem:[#allocation2 + $0x3c] sm:$0xf] %vm1813, %v1796
      %v1830 = vld [vmem:[#allocation2] sm:$0xf]
      %v1831 = vld [vmem:[#allocation2 + $0x4] sm:$0xf]
      %v1832 = vld [vmem:[#allocation2 + $0x8] sm:$0xf]
      %v1833 = vld [vmem:[#allocation2 + $0xc] sm:$0xf]
      %v1834 = vld [vmem:[#allocation2 + $0x10] sm:$0xf]
      %v1835 = vld [vmem:[#allocation2 + $0x14] sm:$0xf]
      %v1836 = vld [vmem:[#allocation2 + $0x18] sm:$0xf]
      %v1837 = vld [vmem:[#allocation2 + $0x1c] sm:$0xf]
      %v1838 = vld [vmem:[#allocation2 + $0x20] sm:$0xf]
      %v1839 = vld [vmem:[#allocation2 + $0x24] sm:$0xf]
      %v1840 = vld [vmem:[#allocation2 + $0x28] sm:$0xf]
      %v1841 = vld [vmem:[#allocation2 + $0x2c] sm:$0xf]
      %v1842 = vld [vmem:[#allocation2 + $0x30] sm:$0xf]
      %v1843 = vld [vmem:[#allocation2 + $0x34] sm:$0xf]
      %v1844 = vld [vmem:[#allocation2 + $0x38] sm:$0xf]
      %v1845 = vld [vmem:[#allocation2 + $0x3c] sm:$0xf]
      %v1846 = vld [vmem:[%s1] sm:$0xf]
      %v1847 = vld [vmem:[%s1 + $0x4] sm:$0xf]
      %v1848 = vld [vmem:[%s1 + $0x8] sm:$0xf]
      %v1849 = vld [vmem:[%s1 + $0xc] sm:$0xf]
      %v1850 = vld [vmem:[%s1 + $0x10] sm:$0xf]
      %v1851 = vld [vmem:[%s1 + $0x14] sm:$0xf]
      %v1852 = vld [vmem:[%s1 + $0x18] sm:$0xf]
      %v1853 = vld [vmem:[%s1 + $0x1c] sm:$0xf]
      %v1854 = vld [vmem:[%s1 + $0x20] sm:$0xf]
      %v1855 = vld [vmem:[%s1 + $0x24] sm:$0xf]
      %v1856 = vld [vmem:[%s1 + $0x28] sm:$0xf]
      %v1857 = vld [vmem:[%s1 + $0x2c] sm:$0xf]
      %v1858 = vld [vmem:[%s1 + $0x30] sm:$0xf]
      %v1859 = vld [vmem:[%s1 + $0x34] sm:$0xf]
      %v1860 = vld [vmem:[%s1 + $0x38] sm:$0xf]
      %v1861 = vld [vmem:[%s1 + $0x3c] sm:$0xf]
      %v1878 = vunpack.c.l.b16 %v1830
      %v1879 = vunpack.c.l.b16 %v1831
      %v1880 = vunpack.c.l.b16 %v1832
      %v1881 = vunpack.c.l.b16 %v1833
      %v1882 = vunpack.c.l.b16 %v1834
      %v1883 = vunpack.c.l.b16 %v1835
      %v1884 = vunpack.c.l.b16 %v1836
      %v1885 = vunpack.c.l.b16 %v1837
      %v1886 = vunpack.c.l.b16 %v1838
      %v1887 = vunpack.c.l.b16 %v1839
      %v1888 = vunpack.c.l.b16 %v1840
      %v1889 = vunpack.c.l.b16 %v1841
      %v1890 = vunpack.c.l.b16 %v1842
      %v1891 = vunpack.c.l.b16 %v1843
      %v1892 = vunpack.c.l.b16 %v1844
      %v1893 = vunpack.c.l.b16 %v1845
      %v1894 = vpack.c.b16 %v1879, %v1878
      %v1895 = vpack.c.b16 %v1881, %v1880
      %v1896 = vpack.c.b16 %v1883, %v1882
      %v1897 = vpack.c.b16 %v1885, %v1884
      %v1898 = vpack.c.b16 %v1887, %v1886
      %v1899 = vpack.c.b16 %v1889, %v1888
      %v1900 = vpack.c.b16 %v1891, %v1890
      %v1901 = vpack.c.b16 %v1893, %v1892
      %v1926 = vunpack.c.l.b16 %v1846
      %v1927 = vunpack.c.l.b16 %v1847
      %v1928 = vunpack.c.l.b16 %v1848
      %v1929 = vunpack.c.l.b16 %v1849
      %v1930 = vunpack.c.l.b16 %v1850
      %v1931 = vunpack.c.l.b16 %v1851
      %v1932 = vunpack.c.l.b16 %v1852
      %v1933 = vunpack.c.l.b16 %v1853
      %v1934 = vunpack.c.l.b16 %v1854
      %v1935 = vunpack.c.l.b16 %v1855
      %v1936 = vunpack.c.l.b16 %v1856
      %v1937 = vunpack.c.l.b16 %v1857
      %v1938 = vunpack.c.l.b16 %v1858
      %v1939 = vunpack.c.l.b16 %v1859
      %v1940 = vunpack.c.l.b16 %v1860
      %v1941 = vunpack.c.l.b16 %v1861
      %v1942 = vpack.c.b16 %v1927, %v1926
      %v1943 = vpack.c.b16 %v1929, %v1928
      %v1944 = vpack.c.b16 %v1931, %v1930
      %v1945 = vpack.c.b16 %v1933, %v1932
      %v1946 = vpack.c.b16 %v1935, %v1934
      %v1947 = vpack.c.b16 %v1937, %v1936
      %v1948 = vpack.c.b16 %v1939, %v1938
      %v1949 = vpack.c.b16 %v1941, %v1940
      %1958 = vmatpush.bf16.msra.mxu0 %v1949
      %1959 = vmatpush.bf16.msra.mxu0 %v1948
      %1960 = vmatpush.bf16.msra.mxu0 %v1947
      %1961 = vmatpush.bf16.msra.mxu0 %v1946
      %1962 = vmatpush.bf16.msra.mxu0 %v1945
      %1963 = vmatpush.bf16.msra.mxu0 %v1944
      %1964 = vmatpush.bf16.msra.mxu0 %v1943
      %1965 = vmatpush.bf16.msra.mxu0 %v1942
      %1966 = vmatmul.bf16.gmra.mxu0 %v1894
      %v1967 = vpop.f32.mrf.mxu0
      %v1968 = vadd.f32 0.0, %v1967
      %v1969 = vpop.f32.mrf.mxu0
      %v1970 = vadd.f32 0.0, %v1969
      %1971 = vmatmul.bf16.gmra.mxu0 %v1895
      %v1972 = vpop.f32.mrf.mxu0
      %v1973 = vadd.f32 0.0, %v1972
      %v1974 = vpop.f32.mrf.mxu0
      %v1975 = vadd.f32 0.0, %v1974
      %1976 = vmatmul.bf16.gmra.mxu0 %v1896
      %v1977 = vpop.f32.mrf.mxu0
      %v1978 = vadd.f32 0.0, %v1977
      %v1979 = vpop.f32.mrf.mxu0
      %v1980 = vadd.f32 0.0, %v1979
      %1981 = vmatmul.bf16.gmra.mxu0 %v1897
      %v1982 = vpop.f32.mrf.mxu0
      %v1983 = vadd.f32 0.0, %v1982
      %v1984 = vpop.f32.mrf.mxu0
      %v1985 = vadd.f32 0.0, %v1984
      %1986 = vmatmul.bf16.gmra.mxu0 %v1898
      %v1987 = vpop.f32.mrf.mxu0
      %v1988 = vadd.f32 0.0, %v1987
      %v1989 = vpop.f32.mrf.mxu0
      %v1990 = vadd.f32 0.0, %v1989
      %1991 = vmatmul.bf16.gmra.mxu0 %v1899
      %v1992 = vpop.f32.mrf.mxu0
      %v1993 = vadd.f32 0.0, %v1992
      %v1994 = vpop.f32.mrf.mxu0
      %v1995 = vadd.f32 0.0, %v1994
      %1996 = vmatmul.bf16.gmra.mxu0 %v1900
      %v1997 = vpop.f32.mrf.mxu0
      %v1998 = vadd.f32 0.0, %v1997
      %v1999 = vpop.f32.mrf.mxu0
      %v2000 = vadd.f32 0.0, %v1999
      %2001 = vmatmul.bf16.gmra.mxu0 %v1901
      %v2002 = vpop.f32.mrf.mxu0
      %v2003 = vadd.f32 0.0, %v2002
      %v2004 = vpop.f32.mrf.mxu0
      %v2005 = vadd.f32 0.0, %v2004
      %2006 = vdwg.mxu0
      %v2007 = vadd.f32 %v1968, %v1970
      %v2008 = vadd.f32 %v2007, %v1973
      %v2009 = vadd.f32 %v2008, %v1975
      %v2010 = vadd.f32 %v2009, %v1978
      %v2011 = vadd.f32 %v2010, %v1980
      %v2012 = vadd.f32 %v2011, %v1983
      %v2013 = vadd.f32 %v2012, %v1985
      %v2014 = vadd.f32 %v2013, %v1988
      %v2015 = vadd.f32 %v2014, %v1990
      %v2016 = vadd.f32 %v2015, %v1993
      %v2017 = vadd.f32 %v2016, %v1995
      %v2018 = vadd.f32 %v2017, %v1998
      %v2019 = vadd.f32 %v2018, %v2000
      %v2020 = vadd.f32 %v2019, %v2003
      %v2021 = vadd.f32 %v2020, %v2005
      %v2022 = vrot.slane %v2021, 4
      %v2023 = vadd.f32 %v2021, %v2022
      %v2024 = vrot.slane %v2023, 2
      %v2025 = vadd.f32 %v2023, %v2024
      %v2026 = vrot.slane %v2025, 1
      %v2027 = vadd.f32 %v2025, %v2026
      %v2028 = vmul.f32 %v1968, %v1968
      %v2029 = vmul.f32 %v1970, %v1970
      %v2030 = vmul.f32 %v1973, %v1973
      %v2031 = vmul.f32 %v1975, %v1975
      %v2032 = vmul.f32 %v1978, %v1978
      %v2033 = vmul.f32 %v1980, %v1980
      %v2034 = vmul.f32 %v1983, %v1983
      %v2035 = vmul.f32 %v1985, %v1985
      %v2036 = vmul.f32 %v1988, %v1988
      %v2037 = vmul.f32 %v1990, %v1990
      %v2038 = vmul.f32 %v1993, %v1993
      %v2039 = vmul.f32 %v1995, %v1995
      %v2040 = vmul.f32 %v1998, %v1998
      %v2041 = vmul.f32 %v2000, %v2000
      %v2042 = vmul.f32 %v2003, %v2003
      %v2043 = vmul.f32 %v2005, %v2005
      %v2044 = vadd.f32 %v2028, %v2029
      %v2045 = vadd.f32 %v2044, %v2030
      %v2046 = vadd.f32 %v2045, %v2031
      %v2047 = vadd.f32 %v2046, %v2032
      %v2048 = vadd.f32 %v2047, %v2033
      %v2049 = vadd.f32 %v2048, %v2034
      %v2050 = vadd.f32 %v2049, %v2035
      %v2051 = vadd.f32 %v2050, %v2036
      %v2052 = vadd.f32 %v2051, %v2037
      %v2053 = vadd.f32 %v2052, %v2038
      %v2054 = vadd.f32 %v2053, %v2039
      %v2055 = vadd.f32 %v2054, %v2040
      %v2056 = vadd.f32 %v2055, %v2041
      %v2057 = vadd.f32 %v2056, %v2042
      %v2058 = vadd.f32 %v2057, %v2043
      %v2059 = vrot.slane %v2058, 4
      %v2060 = vadd.f32 %v2058, %v2059
      %v2061 = vrot.slane %v2060, 2
      %v2062 = vadd.f32 %v2060, %v2061
      %v2063 = vrot.slane %v2062, 1
      %v2064 = vadd.f32 %v2062, %v2063
      %vm2065 = vcmask 1040384
      %v2066 = vsel %vm2065, %v2027, %v2064
      %2067 = vst [vmem:[%s216] sm:$0x3] %v2066
      %v2068 = vpack.c.bf16 %v1968, %v1968
      %v2069 = vpack.c.bf16 %v1970, %v1970
      %v2070 = vpack.c.bf16 %v1973, %v1973
      %v2071 = vpack.c.bf16 %v1975, %v1975
      %v2072 = vpack.c.bf16 %v1978, %v1978
      %v2073 = vpack.c.bf16 %v1980, %v1980
      %v2074 = vpack.c.bf16 %v1983, %v1983
      %v2075 = vpack.c.bf16 %v1985, %v1985
      %v2076 = vpack.c.bf16 %v1988, %v1988
      %v2077 = vpack.c.bf16 %v1990, %v1990
      %v2078 = vpack.c.bf16 %v1993, %v1993
      %v2079 = vpack.c.bf16 %v1995, %v1995
      %v2080 = vpack.c.bf16 %v1998, %v1998
      %v2081 = vpack.c.bf16 %v2000, %v2000
      %v2082 = vpack.c.bf16 %v2003, %v2003
      %v2083 = vpack.c.bf16 %v2005, %v2005
      %2084 = vst [vmem:[%s207] sm:$0xf] %v2068
      %2085 = vst [vmem:[%s207 + $0x4] sm:$0xf] %v2069
      %2086 = vst [vmem:[%s207 + $0x8] sm:$0xf] %v2070
      %2087 = vst [vmem:[%s207 + $0xc] sm:$0xf] %v2071
      %2088 = vst [vmem:[%s207 + $0x10] sm:$0xf] %v2072
      %2089 = vst [vmem:[%s207 + $0x14] sm:$0xf] %v2073
      %2090 = vst [vmem:[%s207 + $0x18] sm:$0xf] %v2074
      %2091 = vst [vmem:[%s207 + $0x1c] sm:$0xf] %v2075
      %2092 = vst [vmem:[%s207 + $0x20] sm:$0xf] %v2076
      %2093 = vst [vmem:[%s207 + $0x24] sm:$0xf] %v2077
      %2094 = vst [vmem:[%s207 + $0x28] sm:$0xf] %v2078
      %2095 = vst [vmem:[%s207 + $0x2c] sm:$0xf] %v2079
      %2096 = vst [vmem:[%s207 + $0x30] sm:$0xf] %v2080
      %2097 = vst [vmem:[%s207 + $0x34] sm:$0xf] %v2081
      %2098 = vst [vmem:[%s207 + $0x38] sm:$0xf] %v2082
      %2099 = vst [vmem:[%s207 + $0x3c] sm:$0xf] %v2083
      %s2100 = smul.u32 8, %s20
      %p2101 = scmp.lt.s32.totalorder %s19, 1
      %s2102 = scalar_select %p2101, %s19, 1
      %p2103 = scmp.lt.s32.totalorder %s2100, 15
      %s2104 = scalar_select %p2103, %s2100, 15
      %s2105 = smul.addr %s2104, 2
      %s2106 = smul.addr %s2102, 32
      %s2107 = sadd.s32 %s2105, %s2106
      %s2108 = smul.addr %s2107, 4
      %s2109 = scalar_lea.vmem %s2, %s2108
      %p2110 = scmp.lt.s32.totalorder %s19, 1
      %s2111 = scalar_select %p2110, %s19, 1
      %p2112 = scmp.lt.s32.totalorder %s20, 1
      %s2113 = scalar_select %p2112, %s20, 1
      %s2114 = smul.addr %s2111, 2
      %s2115 = sadd.s32 %s2113, %s2114
      %s2116 = smul.addr %s2115, 2
      %s2117 = scalar_lea.vmem %s3, %s2116
      // Predicated region
      $region29: #{conv_block.4} parent=27 // pred_check
        %p2118 = pneg %p94
      $region30: #{conv_block.4} parent=27 // pred_check_branch
        %2120 = sbr.rel (%p2118) target = $region32
      $region31: #{conv_block.4} parent=27 // pred_region
        %s2121 = smul.u32 8, %s20
      $region32: #{conv_block.4} parent=27 // pred_fallthru
        _
      // Predicated region
      $region33: #{conv_block.4} parent=27 // pred_check
        %p2122 = pneg %p122
      $region34: #{conv_block.4} parent=27 // pred_check_branch
        %2124 = sbr.rel (%p2122) target = $region36
      $region35: #{conv_block.4} parent=27 // pred_region
        _
      $region36: #{conv_block.4} parent=27 // pred_fallthru
        _
    $region28: #{conv_block.4} parent=5 // pred_fallthru
      _
    %p2125 = scmp.le.s32.totalorder 2, %s10
    // Predicated region
    $region37: #{conv_block.4} parent=5 // pred_check
      %p2126 = pneg %p2125
    $region38: #{conv_block.4} parent=5 // pred_check_branch
      %2128 = sbr.rel (%p2126) target = $region40
    $region39: #{conv_block.4} parent=5 // pred_region
      %s2129 = ssub.s32 %s10, 2
      // Predicated region
      $region41: #{conv_block.4} parent=39 // pred_check
        %p2130 = pneg %p100
      $region42: #{conv_block.4} parent=39 // pred_check_branch
        %2132 = sbr.rel (%p2130) target = $region44
      $region43: #{conv_block.4} parent=39 // pred_region
        %s2133 = smul.u32 8, %s22
        %p2134 = scmp.lt.s32.totalorder %s21, 1
        %s2135 = scalar_select %p2134, %s21, 1
        %p2136 = scmp.lt.s32.totalorder %s2133, 15
        %s2137 = scalar_select %p2136, %s2133, 15
        %s2138 = smul.addr %s2137, 2
        %s2139 = smul.addr %s2135, 32
        %s2140 = sadd.s32 %s2138, %s2139
        %s2141 = smul.addr %s2140, 4
        %s2142 = scalar_lea.vmem %s2, %s2141
      $region44: #{conv_block.4} parent=39 // pred_fallthru
        _
      // Predicated region
      $region45: #{conv_block.4} parent=39 // pred_check
        %p2143 = pneg %p128
      $region46: #{conv_block.4} parent=39 // pred_check_branch
        %2145 = sbr.rel (%p2143) target = $region48
      $region47: #{conv_block.4} parent=39 // pred_region
        %p2146 = scmp.lt.s32.totalorder %s21, 1
        %s2147 = scalar_select %p2146, %s21, 1
        %p2148 = scmp.lt.s32.totalorder %s22, 1
        %s2149 = scalar_select %p2148, %s22, 1
        %s2150 = smul.addr %s2147, 2
        %s2151 = sadd.s32 %s2149, %s2150
        %s2152 = smul.addr %s2151, 2
        %s2153 = scalar_lea.vmem %s3, %s2152
      $region48: #{conv_block.4} parent=39 // pred_fallthru
        _
    $region40: #{conv_block.4} parent=5 // pred_fallthru
      _
  $region6: #{conv_block.4} parent=0 // loop_footer
    %s14 = sadd.s32 1, %s10
  $region7: #{conv_block.4} parent=0 // loop_footer_branch
    %9 = sbr.rel target = $region3
  $region8: #{conv_block.4} parent=0 // loop_exit
    _

// kernel: conv_block.6
$region0: #{conv_block.6}
  #allocation0 [shape = 'u32[]', space=smem, size = 0x4, offset = 0x4, fixed_abs, tag = 'smem constant byte address 0x4 - core index']
  #allocation1 [shape = 'u32[72,128]{1,0:T(1,128)}', space=vmem, size = 0x9000, scoped, tag = 'internal scratch']
  #allocation2 [shape = 'bf16[1,8,16,128]{3,2,1,0:T(8,128)(2,1)}', space=vmem, size = 0x8000, scoped, tag = 'scratch operand']
  %s0 = inlined_call_operand.vmem [shape: bf16[2,18,18,8], index: 0, kind: input, shape index: {}]
  %s1 = inlined_call_operand.vmem [shape: bf16[128,128], index: 1, kind: input, shape index: {}]
  %s2 = inlined_call_operand.vmem [shape: bf16[2,16,16,128], index: 2, kind: output, shape index: {0}]
  %s3 = inlined_call_operand.vmem [shape: f32[2,2,2,128], index: 3, kind: output, shape index: {1}]
  %4 = xla_tuple %s2, %s3
  %s5 = sld [smem:[#allocation0]]
  $region49: #{conv_block.6} parent=0
    _
  %s7 = ssub.s32 1, %s5
  %s8 = scalar_select 0, %s7, %s5
  loop: start=0, step=1, limit=6
  $region2: #{conv_block.6} parent=0 // loop_pre_header
    _
  $region3: #{conv_block.6} parent=0 // loop_header
    %s10 = sphi 0, %s14
    %p11 = scmp.ge.s32.totalorder %s10, 6
    %s17 = sphi 0, %s29
    %s18 = sphi 0, %s25
    %s19 = sphi 0, %s17
    %s20 = sphi 0, %s18
    %s21 = sphi 0, %s19
    %s22 = sphi 0, %s20
    %s32 = sphi 0, %s34
    %s35 = sphi 0, %s32
    %s36 = sphi 0, %s35
    %s52 = sphi 0, %s36
    %s56 = sphi 0, %s56
    %s58 = sphi 0, %s56
    %s59 = sphi 0, %s58
    %s73 = sphi 0, %s59
    %s81 = sphi 0, %s83
    %s84 = sphi 0, %s81
    %s85 = sphi 0, %s84
    %s101 = sphi 0, %s85
    %s109 = sphi 0, %s111
    %s112 = sphi 0, %s109
    %s113 = sphi 0, %s112
    %s129 = sphi 0, %s113
  $region4: #{conv_block.6} parent=0 // loop_header_branch
    %13 = sbr.rel (%p11) target = $region8
  $region5: #{conv_block.6} parent=0 // loop_body
    %s15 = ssub.s32 %s10, 1
    %s16 = ssub.s32 %s10, 2
    %s23 = sadd.s32 1, %s18
    %p24 = scmp.ge.s32.totalorder %s23, 2
    %s25 = scalar_select %p24, 0, %s23
    %s26 = sadd.s32 1, %s17
    %s27 = scalar_select %p24, %s26, %s17
    %p28 = scmp.ge.s32.totalorder %s27, 2
    %s29 = scalar_select %p28, 0, %s27
    %s30 = ssub.s32 %s17, %s29
    %p31 = scmp.eq.s32.totalorder %s30, 0
    %s33 = sadd.s32 %s32, 1
    %s34 = scalar_select %p31, %s32, %s33
    %p37 = pneg %p31
    %p38 = scmp.eq.s32.totalorder %s10, 3
    %p39 = por %p37, %p38
    %p40 = scmp.ne.s32.totalorder %s32, %s35
    %p41 = scmp.eq.s32.totalorder %s10, 0
    %p42 = por %p40, %p41
    %p43 = scmp.ne.s32.totalorder %s32, %s35
    %p44 = scmp.eq.s32.totalorder %s15, 3
    %p45 = por %p43, %p44
    %p46 = scmp.ne.s32.totalorder %s35, %s36
    %p47 = scmp.eq.s32.totalorder %s15, 0
    %p48 = por %p46, %p47
    %p49 = scmp.ne.s32.totalorder %s35, %s36
    %p50 = scmp.eq.s32.totalorder %s16, 3
    %p51 = por %p49, %p50
    %p53 = scmp.ne.s32.totalorder %s36, %s52
    %p54 = scmp.eq.s32.totalorder %s16, 0
    %p55 = por %p53, %p54
    %s57 = sadd.s32 %s56, 1
    %p60 = scmp.eq.s32.totalorder %s10, 3
    %p61 = scmp.ne.s32.totalorder %s56, %s58
    %p62 = scmp.eq.s32.totalorder %s10, 0
    %p63 = por %p61, %p62
    %p64 = scmp.ne.s32.totalorder %s56, %s58
    %p65 = scmp.eq.s32.totalorder %s15, 3
    %p66 = por %p64, %p65
    %p67 = scmp.ne.s32.totalorder %s58, %s59
    %p68 = scmp.eq.s32.totalorder %s15, 0
    %p69 = por %p67, %p68
    %p70 = scmp.ne.s32.totalorder %s58, %s59
    %p71 = scmp.eq.s32.totalorder %s16, 3
    %p72 = por %p70, %p71
    %p74 = scmp.ne.s32.totalorder %s59, %s73
    %p75 = scmp.eq.s32.totalorder %s16, 0
    %p76 = por %p74, %p75
    %s77 = ssub.s32 %s17, %s29
    %s78 = ssub.s32 %s18, %s25
    %s79 = sor.u32 %s77, %s78
    %p80 = scmp.eq.s32.totalorder %s79, 0
    %s82 = sadd.s32 %s81, 1
    %s83 = scalar_select %p80, %s81, %s82
    %p86 = pneg %p80
    %p87 = scmp.eq.s32.totalorder %s10, 3
    %p88 = por %p86, %p87
    %p89 = scmp.ne.s32.totalorder %s81, %s84
    %p90 = scmp.eq.s32.totalorder %s10, 0
    %p91 = por %p89, %p90
    %p92 = scmp.ne.s32.totalorder %s81, %s84
    %p93 = scmp.eq.s32.totalorder %s15, 3
    %p94 = por %p92, %p93
    %p95 = scmp.ne.s32.totalorder %s84, %s85
    %p96 = scmp.eq.s32.totalorder %s15, 0
    %p97 = por %p95, %p96
    %p98 = scmp.ne.s32.totalorder %s84, %s85
    %p99 = scmp.eq.s32.totalorder %s16, 3
    %p100 = por %p98, %p99
    %p102 = scmp.ne.s32.totalorder %s85, %s101
    %p103 = scmp.eq.s32.totalorder %s16, 0
    %p104 = por %p102, %p103
    %s105 = ssub.s32 %s17, %s29
    %s106 = ssub.s32 %s18, %s25
    %s107 = sor.u32 %s105, %s106
    %p108 = scmp.eq.s32.totalorder %s107, 0
    %s110 = sadd.s32 %s109, 1
    %s111 = scalar_select %p108, %s109, %s110
    %p114 = pneg %p108
    %p115 = scmp.eq.s32.totalorder %s10, 3
    %p116 = por %p114, %p115
    %p117 = scmp.ne.s32.totalorder %s109, %s112
    %p118 = scmp.eq.s32.totalorder %s10, 0
    %p119 = por %p117, %p118
    %p120 = scmp.ne.s32.totalorder %s109, %s112
    %p121 = scmp.eq.s32.totalorder %s15, 3
    %p122 = por %p120, %p121
    %p123 = scmp.ne.s32.totalorder %s112, %s113
    %p124 = scmp.eq.s32.totalorder %s15, 0
    %p125 = por %p123, %p124
    %p126 = scmp.ne.s32.totalorder %s112, %s113
    %p127 = scmp.eq.s32.totalorder %s16, 3
    %p128 = por %p126, %p127
    %p130 = scmp.ne.s32.totalorder %s113, %s129
    %p131 = scmp.eq.s32.totalorder %s16, 0
    %p132 = por %p130, %p131
    %p133 = scmp.le.s32.totalorder 1, %s10
    %p134 = scmp.lt.s32.totalorder %s10, 5
    %p135 = pnand %p133, %p134
    %p136 = pneg %p135
    // Predicated region
    $region9: #{conv_block.6} parent=5 // pred_check
      _
    $region10: #{conv_block.6} parent=5 // pred_check_branch
      %138 = sbr.rel (%p135) target = $region12
    $region11: #{conv_block.6} parent=5 // pred_region
      %s139 = ssub.s32 %s10, 1
      // Predicated region
      $region13: #{conv_block.6} parent=11 // pred_check
        %p140 = pneg %p69
      $region14: #{conv_block.6} parent=11 // pred_check_branch
        %142 = sbr.rel (%p140) target = $region16
      $region15: #{conv_block.6} parent=11 // pred_region
        _
      $region16: #{conv_block.6} parent=11 // pred_fallthru
        _
    $region12: #{conv_block.6} parent=5 // pred_fallthru
      _
    %p143 = scmp.lt.s32.totalorder %s10, 4
    // Predicated region
    $region17: #{conv_block.6} parent=5 // pred_check
      %p144 = pneg %p143
    $region18: #{conv_block.6} parent=5 // pred_check_branch
      %146 = sbr.rel (%p144) target = $region20
    $region19: #{conv_block.6} parent=5 // pred_region
      // Predicated region
      $region21: #{conv_block.6} parent=19 // pred_check
        %p147 = pneg %p42
      $region22: #{conv_block.6} parent=19 // pred_check_branch
        %149 = sbr.rel (%p147) target = $region24
      $region23: #{conv_block.6} parent=19 // pred_region
        %p150 = scmp.lt.s32.totalorder %s17, 1
        %s151 = scalar_select %p150, %s17, 1
        %s152 = smul.addr %s151, 54
        %s153 = smul.addr %s152, 4
        %s154 = scalar_lea.vmem %s0, %s153
      $region24: #{conv_block.6} parent=19 // pred_fallthru
        _
    $region20: #{conv_block.6} parent=5 // pred_fallthru
      _
    %p155 = scmp.le.s32.totalorder 1, %s10
    %p156 = scmp.lt.s32.totalorder %s10, 5
    %p157 = pnand %p155, %p156
    %p158 = pneg %p157
    // Predicated region
    $region25: #{conv_block.6} parent=5 // pred_check
      _
    $region26: #{conv_block.6} parent=5 // pred_check_branch
      %160 = sbr.rel (%p157) target = $region28
    $region27: #{conv_block.6} parent=5 // pred_region
      %s161 = ssub.s32 %s10, 1
      %p162 = scmp.lt.s32.totalorder %s19, 1
      %s163 = scalar_select %p162, %s19, 1
      %s164 = smul.addr %s163, 54
      %s165 = smul.addr %s164, 4
      %s166 = scalar_lea.vmem %s0, %s165
      %p167 = pneg %p48
      %p168 = pneg %p45
      %p169 = pneg %p69
      %p170 = pneg %p66
      %p171 = pneg %p97
      %p172 = pneg %p94
      %s173 = smul.u32 8, %s20
      %p174 = scmp.lt.s32.totalorder %s19, 1
      %s175 = scalar_select %p174, %s19, 1
      %p176 = scmp.lt.s32.totalorder %s173, 15
      %s177 = scalar_select %p176, %s173, 15
      %s178 = smul.addr %s177, 2
      %s179 = smul.addr %s175, 32
      %s180 = sadd.s32 %s178, %s179
      %s181 = smul.addr %s180, 4
      %s182 = scalar_lea.vmem %s2, %s181
      %p183 = pneg %p125
      %p184 = pneg %p122
      %p185 = scmp.lt.s32.totalorder %s19, 1
      %s186 = scalar_select %p185, %s19, 1
      %p187 = scmp.lt.s32.totalorder %s20, 1
      %s188 = scalar_select %p187, %s20, 1
      %s189 = smul.addr %s186, 2
      %s190 = sadd.s32 %s188, %s189
      %s191 = smul.addr %s190, 2
      %s192 = scalar_lea.vmem %s3, %s191
      %p193 = scmp.lt.s32.totalorder %s19, 1
      %s194 = scalar_select %p193, %s19, 1
      %s195 = smul.addr %s194, 54
      %s196 = smul.addr %s195, 4
      %s197 = scalar_lea.vmem %s0, %s196
      %s198 = smul.u32 8, %s20
      %p199 = scmp.lt.s32.totalorder %s19, 1
      %s200 = scalar_select %p199, %s19, 1
      %p201 = scmp.lt.s32.totalorder %s198, 15
      %s202 = scalar_select %p201, %s198, 15
      %s203 = smul.addr %s202, 2
      %s204 = smul.addr %s200, 32
      %s205 = sadd.s32 %s203, %s204
      %s206 = smul.addr %s205, 4
      %s207 = scalar_lea.vmem %s2, %s206
      %s208 = smul.u32 8, %s20
      %p209 = scmp.lt.s32.totalorder %s19, 1
      %s210 = scalar_select %p209, %s19, 1
      %p211 = scmp.lt.s32.totalorder %s20, 1
      %s212 = scalar_select %p211, %s20, 1
      %s213 = smul.addr %s210, 2
      %s214 = sadd.s32 %s212, %s213
      %s215 = smul.addr %s214, 2
      %s216 = scalar_lea.vmem %s3, %s215
      %s218 = smul.u32 %s20, 8
      %vm219 = vcmask 1044032
      %220 = vst.msk [vmem:[#allocation2] sm:$0xf] %vm219, 0
      %221 = vst.msk [vmem:[#allocation2 + $0x4] sm:$0xf] %vm219, 0
      %222 = vst.msk [vmem:[#allocation2 + $0x8] sm:$0xf] %vm219, 0
      %223 = vst.msk [vmem:[#allocation2 + $0xc] sm:$0xf] %vm219, 0
      %224 = vst.msk [vmem:[#allocation2 + $0x10] sm:$0xf] %vm219, 0
      %225 = vst.msk [vmem:[#allocation2 + $0x14] sm:$0xf] %vm219, 0
      %226 = vst.msk [vmem:[#allocation2 + $0x18] sm:$0xf] %vm219, 0
      %227 = vst.msk [vmem:[#allocation2 + $0x1c] sm:$0xf] %vm219, 0
      %228 = vst.msk [vmem:[#allocation2 + $0x20] sm:$0xf] %vm219, 0
      %229 = vst.msk [vmem:[#allocation2 + $0x24] sm:$0xf] %vm219, 0
      %230 = vst.msk [vmem:[#allocation2 + $0x28] sm:$0xf] %vm219, 0
      %231 = vst.msk [vmem:[#allocation2 + $0x2c] sm:$0xf] %vm219, 0
      %232 = vst.msk [vmem:[#allocation2 + $0x30] sm:$0xf] %vm219, 0
      %233 = vst.msk [vmem:[#allocation2 + $0x34] sm:$0xf] %vm219, 0
      %234 = vst.msk [vmem:[#allocation2 + $0x38] sm:$0xf] %vm219, 0
      %235 = vst.msk [vmem:[#allocation2 + $0x3c] sm:$0xf] %vm219, 0
      %s236 = smul.u32 %s218, 3
      %s237 = smul.addr %s236, 4
      %s238 = scalar_lea.vmem %s197, %s237
      %v239 = vld [vmem:[%s238] sm:$0xf]
      %v240 = vld [vmem:[%s238 + $0x4] sm:$0xf]
      %v241 = vld [vmem:[%s238 + $0xc] sm:$0xf]
      %v242 = vld [vmem:[%s238 + $0x10] sm:$0xf]
      %v243 = vld [vmem:[%s238 + $0x18] sm:$0xf]
      %v244 = vld [vmem:[%s238 + $0x1c] sm:$0xf]
      %v245 = vld [vmem:[%s238 + $0x24] sm:$0xf]
      %v246 = vld [vmem:[%s238 + $0x28] sm:$0xf]
      %v247 = vld [vmem:[%s238 + $0x30] sm:$0xf]
      %v248 = vld [vmem:[%s238 + $0x34] sm:$0xf]
      %v249 = vld [vmem:[%s238 + $0x3c] sm:$0xf]
      %v250 = vld [vmem:[%s238 + $0x40] sm:$0xf]
      %v251 = vld [vmem:[%s238 + $0x48] sm:$0xf]
      %v252 = vld [vmem:[%s238 + $0x4c] sm:$0xf]
      %v253 = vld [vmem:[%s238 + $0x54] sm:$0xf]
      %v254 = vld [vmem:[%s238 + $0x58] sm:$0xf]
      %vm255 = vcmask 60416
      %256 = vst.msk [vmem:[#allocation2] sm:$0xf] %vm255, %v239
      %257 = vst.msk [vmem:[#allocation2 + $0x4] sm:$0xf] %vm255, %v240
      %258 = vst.msk [vmem:[#allocation2 + $0x8] sm:$0xf] %vm255, %v241
      %259 = vst.msk [vmem:[#allocation2 + $0xc] sm:$0xf] %vm255, %v242
      %260 = vst.msk [vmem:[#allocation2 + $0x10] sm:$0xf] %vm255, %v243
      %261 = vst.msk [vmem:[#allocation2 + $0x14] sm:$0xf] %vm255, %v244
      %262 = vst.msk [vmem:[#allocation2 + $0x18] sm:$0xf] %vm255, %v245
      %263 = vst.msk [vmem:[#allocation2 + $0x1c] sm:$0xf] %vm255, %v246
      %264 = vst.msk [vmem:[#allocation2 + $0x20] sm:$0xf] %vm255, %v247
      %265 = vst.msk [vmem:[#allocation2 + $0x24] sm:$0xf] %vm255, %v248
      %266 = vst.msk [vmem:[#allocation2 + $0x28] sm:$0xf] %vm255, %v249
      %267 = vst.msk [vmem:[#allocation2 + $0x2c] sm:$0xf] %vm255, %v250
      %268 = vst.msk [vmem:[#allocation2 + $0x30] sm:$0xf] %vm255, %v251
      %269 = vst.msk [vmem:[#allocation2 + $0x34] sm:$0xf] %vm255, %v252
      %270 = vst.msk [vmem:[#allocation2 + $0x38] sm:$0xf] %vm255, %v253
      %271 = vst.msk [vmem:[#allocation2 + $0x3c] sm:$0xf] %vm255, %v254
      %v272 = vld [vmem:[%s238] sm:$0xf]
      %v273 = vld [vmem:[%s238 + $0x4] sm:$0xf]
      %v274 = vld [vmem:[%s238 + $0x8] sm:$0x1]
      %v275 = vld [vmem:[%s238 + $0xc] sm:$0xf]
      %v276 = vld [vmem:[%s238 + $0x10] sm:$0xf]
      %v277 = vld [vmem:[%s238 + $0x14] sm:$0x1]
      %v278 = vld [vmem:[%s238 + $0x18] sm:$0xf]
      %v279 = vld [vmem:[%s238 + $0x1c] sm:$0xf]
      %v280 = vld [vmem:[%s238 + $0x20] sm:$0x1]
      %v281 = vld [vmem:[%s238 + $0x24] sm:$0xf]
      %v282 = vld [vmem:[%s238 + $0x28] sm:$0xf]
      %v283 = vld [vmem:[%s238 + $0x2c] sm:$0x1]
      %v284 = vld [vmem:[%s238 + $0x30] sm:$0xf]
      %v285 = vld [vmem:[%s238 + $0x34] sm:$0xf]
      %v286 = vld [vmem:[%s238 + $0x38] sm:$0x1]
      %v287 = vld [vmem:[%s238 + $0x3c] sm:$0xf]
      %v288 = vld [vmem:[%s238 + $0x40] sm:$0xf]
      %v289 = vld [vmem:[%s238 + $0x44] sm:$0x1]
      %v290 = vld [vmem:[%s238 + $0x48] sm:$0xf]
      %v291 = vld [vmem:[%s238 + $0x4c] sm:$0xf]
      %v292 = vld [vmem:[%s238 + $0x50] sm:$0x1]
      %v293 = vld [vmem:[%s238 + $0x54] sm:$0xf]
      %v294 = vld [vmem:[%s238 + $0x58] sm:$0xf]
      %v295 = vld [vmem:[%s238 + $0x5c] sm:$0x1]
      %vm296 = vsmask.f32 3328
      %vm297 = vsmask.f32 7440
      %vm298 = vmor %vm296, %vm297
      %v300 = vshrl.u32 %v272, 16
      %v302 = vrot.slane %v300, 4
      %v303 = vshll.u32 %v272, 16
      %v305 = vrot.slane %v303, 5
      %v306 = vor.u32 %v302, %v305
      %v307 = vrot.slane %v306, 4
      %v309 = vshll.u32 %v273, 16
      %v311 = vrot.slane %v309, 5
      %v312 = vsel %vm298, %v307, %v311
      %v313 = vshrl.u32 %v273, 16
      %v315 = vrot.slane %v313, 4
      %v316 = vor.u32 %v315, %v311
      %v317 = vrot.slane %v316, 4
      %v319 = vshll.u32 %v274, 16
      %v321 = vrot.slane %v319, 5
      %v322 = vsel %vm298, %v317, %v321
      %v324 = vshrl.u32 %v275, 16
      %v326 = vrot.slane %v324, 4
      %v327 = vshll.u32 %v275, 16
      %v329 = vrot.slane %v327, 5
      %v330 = vor.u32 %v326, %v329
      %v331 = vrot.slane %v330, 4
      %v333 = vshll.u32 %v276, 16
      %v335 = vrot.slane %v333, 5
      %v336 = vsel %vm298, %v331, %v335
      %v337 = vshrl.u32 %v276, 16
      %v339 = vrot.slane %v337, 4
      %v340 = vor.u32 %v339, %v335
      %v341 = vrot.slane %v340, 4
      %v343 = vshll.u32 %v277, 16
      %v345 = vrot.slane %v343, 5
      %v346 = vsel %vm298, %v341, %v345
      %v348 = vshrl.u32 %v278, 16
      %v350 = vrot.slane %v348, 4
      %v351 = vshll.u32 %v278, 16
      %v353 = vrot.slane %v351, 5
      %v354 = vor.u32 %v350, %v353
      %v355 = vrot.slane %v354, 4
      %v357 = vshll.u32 %v279, 16
      %v359 = vrot.slane %v357, 5
      %v360 = vsel %vm298, %v355, %v359
      %v361 = vshrl.u32 %v279, 16
      %v363 = vrot.slane %v361, 4
      %v364 = vor.u32 %v363, %v359
      %v365 = vrot.slane %v364, 4
      %v367 = vshll.u32 %v280, 16
      %v369 = vrot.slane %v367, 5
      %v370 = vsel %vm298, %v365, %v369
      %v372 = vshrl.u32 %v281, 16
      %v374 = vrot.slane %v372, 4
      %v375 = vshll.u32 %v281, 16
      %v377 = vrot.slane %v375, 5
      %v378 = vor.u32 %v374, %v377
      %v379 = vrot.slane %v378, 4
      %v381 = vshll.u32 %v282, 16
      %v383 = vrot.slane %v381, 5
      %v384 = vsel %vm298, %v379, %v383
      %v385 = vshrl.u32 %v282, 16
      %v387 = vrot.slane %v385, 4
      %v388 = vor.u32 %v387, %v383
      %v389 = vrot.slane %v388, 4
      %v391 = vshll.u32 %v283, 16
      %v393 = vrot.slane %v391, 5
      %v394 = vsel %vm298, %v389, %v393
      %v396 = vshrl.u32 %v284, 16
      %v398 = vrot.slane %v396, 4
      %v399 = vshll.u32 %v284, 16
      %v401 = vrot.slane %v399, 5
      %v402 = vor.u32 %v398, %v401
      %v403 = vrot.slane %v402, 4
      %v405 = vshll.u32 %v285, 16
      %v407 = vrot.slane %v405, 5
      %v408 = vsel %vm298, %v403, %v407
      %v409 = vshrl.u32 %v285, 16
      %v411 = vrot.slane %v409, 4
      %v412 = vor.u32 %v411, %v407
      %v413 = vrot.slane %v412, 4
      %v415 = vshll.u32 %v286, 16
      %v417 = vrot.slane %v415, 5
      %v418 = vsel %vm298, %v413, %v417
      %v420 = vshrl.u32 %v287, 16
      %v422 = vrot.slane %v420, 4
      %v423 = vshll.u32 %v287, 16
      %v425 = vrot.slane %v423, 5
      %v426 = vor.u32 %v422, %v425
      %v427 = vrot.slane %v426, 4
      %v429 = vshll.u32 %v288, 16
      %v431 = vrot.slane %v429, 5
      %v432 = vsel %vm298, %v427, %v431
      %v433 = vshrl.u32 %v288, 16
      %v435 = vrot.slane %v433, 4
      %v436 = vor.u32 %v435, %v431
      %v437 = vrot.slane %v436, 4
      %v439 = vshll.u32 %v289, 16
      %v441 = vrot.slane %v439, 5
      %v442 = vsel %vm298, %v437, %v441
      %v444 = vshrl.u32 %v290, 16
      %v446 = vrot.slane %v444, 4
      %v447 = vshll.u32 %v290, 16
      %v449 = vrot.slane %v447, 5
      %v450 = vor.u32 %v446, %v449
      %v451 = vrot.slane %v450, 4
      %v453 = vshll.u32 %v291, 16
      %v455 = vrot.slane %v453, 5
      %v456 = vsel %vm298, %v451, %v455
      %v457 = vshrl.u32 %v291, 16
      %v459 = vrot.slane %v457, 4
      %v460 = vor.u32 %v459, %v455
      %v461 = vrot.slane %v460, 4
      %v463 = vshll.u32 %v292, 16
      %v465 = vrot.slane %v463, 5
      %v466 = vsel %vm298, %v461, %v465
      %v468 = vshrl.u32 %v293, 16
      %v470 = vrot.slane %v468, 4
      %v471 = vshll.u32 %v293, 16
      %v473 = vrot.slane %v471, 5
      %v474 = vor.u32 %v470, %v473
      %v475 = vrot.slane %v474, 4
      %v477 = vshll.u32 %v294, 16
      %v479 = vrot.slane %v477, 5
      %v480 = vsel %vm298, %v475, %v479
      %v481 = vshrl.u32 %v294, 16
      %v483 = vrot.slane %v481, 4
      %v484 = vor.u32 %v483, %v479
      %v485 = vrot.slane %v484, 4
      %v487 = vshll.u32 %v295, 16
      %v489 = vrot.slane %v487, 5
      %v490 = vsel %vm298, %v485, %v489
      %491 = vrot.lane.b32.xlu0 %v312, 8
      %v492 = vpop.permute.xlu0 %491
      %493 = vrot.lane.b32.xlu0 %v322, 8
      %v494 = vpop.permute.xlu0 %493
      %495 = vrot.lane.b32.xlu0 %v336, 8
      %v496 = vpop.permute.xlu0 %495
      %497 = vrot.lane.b32.xlu0 %v346, 8
      %v498 = vpop.permute.xlu0 %497
      %499 = vrot.lane.b32.xlu0 %v360, 8
      %v500 = vpop.permute.xlu0 %499
      %501 = vrot.lane.b32.xlu0 %v370, 8
      %v502 = vpop.permute.xlu0 %501
      %503 = vrot.lane.b32.xlu0 %v384, 8
      %v504 = vpop.permute.xlu0 %503
      %505 = vrot.lane.b32.xlu0 %v394, 8
      %v506 = vpop.permute.xlu0 %505
      %507 = vrot.lane.b32.xlu0 %v408, 8
      %v508 = vpop.permute.xlu0 %507
      %509 = vrot.lane.b32.xlu0 %v418, 8
      %v510 = vpop.permute.xlu0 %509
      %511 = vrot.lane.b32.xlu0 %v432, 8
      %v512 = vpop.permute.xlu0 %511
      %513 = vrot.lane.b32.xlu0 %v442, 8
      %v514 = vpop.permute.xlu0 %513
      %515 = vrot.lane.b32.xlu0 %v456, 8
      %v516 = vpop.permute.xlu0 %515
      %517 = vrot.lane.b32.xlu0 %v466, 8
      %v518 = vpop.permute.xlu0 %517
      %519 = vrot.lane.b32.xlu0 %v480, 8
      %v520 = vpop.permute.xlu0 %519
      %521 = vrot.lane.b32.xlu0 %v490, 8
      %v522 = vpop.permute.xlu0 %521
      %vm539 = vcmask 126016
      %540 = vst.msk [vmem:[#allocation2] sm:$0xf] %vm539, %v492
      %541 = vst.msk [vmem:[#allocation2 + $0x4] sm:$0xf] %vm539, %v494
      %542 = vst.msk [vmem:[#allocation2 + $0x8] sm:$0xf] %vm539, %v496
      %543 = vst.msk [vmem:[#allocation2 + $0xc] sm:$0xf] %vm539, %v498
      %544 = vst.msk [vmem:[#allocation2 + $0x10] sm:$0xf] %vm539, %v500
      %545 = vst.msk [vmem:[#allocation2 + $0x14] sm:$0xf] %vm539, %v502
      %546 = vst.msk [vmem:[#allocation2 + $0x18] sm:$0xf] %vm539, %v504
      %547 = vst.msk [vmem:[#allocation2 + $0x1c] sm:$0xf] %vm539, %v506
      %548 = vst.msk [vmem:[#allocation2 + $0x20] sm:$0xf] %vm539, %v508
      %549 = vst.msk [vmem:[#allocation2 + $0x24] sm:$0xf] %vm539, %v510
      %550 = vst.msk [vmem:[#allocation2 + $0x28] sm:$0xf] %vm539, %v512
      %551 = vst.msk [vmem:[#allocation2 + $0x2c] sm:$0xf] %vm539, %v514
      %552 = vst.msk [vmem:[#allocation2 + $0x30] sm:$0xf] %vm539, %v516
      %553 = vst.msk [vmem:[#allocation2 + $0x34] sm:$0xf] %vm539, %v518
      %554 = vst.msk [vmem:[#allocation2 + $0x38] sm:$0xf] %vm539, %v520
      %555 = vst.msk [vmem:[#allocation2 + $0x3c] sm:$0xf] %vm539, %v522
      %v556 = vld [vmem:[%s238] sm:$0xe]
      %v557 = vld [vmem:[%s238 + $0x4] sm:$0xf]
      %v558 = vld [vmem:[%s238 + $0x8] sm:$0x1]
      %v559 = vld [vmem:[%s238 + $0xc] sm:$0xe]
      %v560 = vld [vmem:[%s238 + $0x10] sm:$0xf]
      %v561 = vld [vmem:[%s238 + $0x14] sm:$0x1]
      %v562 = vld [vmem:[%s238 + $0x18] sm:$0xe]
      %v563 = vld [vmem:[%s238 + $0x1c] sm:$0xf]
      %v564 = vld [vmem:[%s238 + $0x20] sm:$0x1]
      %v565 = vld [vmem:[%s238 + $0x24] sm:$0xe]
      %v566 = vld [vmem:[%s238 + $0x28] sm:$0xf]
      %v567 = vld [vmem:[%s238 + $0x2c] sm:$0x1]
      %v568 = vld [vmem:[%s238 + $0x30] sm:$0xe]
      %v569 = vld [vmem:[%s238 + $0x34] sm:$0xf]
      %v570 = vld [vmem:[%s238 + $0x38] sm:$0x1]
      %v571 = vld [vmem:[%s238 + $0x3c] sm:$0xe]
      %v572 = vld [vmem:[%s238 + $0x40] sm:$0xf]
      %v573 = vld [vmem:[%s238 + $0x44] sm:$0x1]
      %v574 = vld [vmem:[%s238 + $0x48] sm:$0xe]
      %v575 = vld [vmem:[%s238 + $0x4c] sm:$0xf]
      %v576 = vld [vmem:[%s238 + $0x50] sm:$0x1]
      %v577 = vld [vmem:[%s238 + $0x54] sm:$0xe]
      %v578 = vld [vmem:[%s238 + $0x58] sm:$0xf]
      %v579 = vld [vmem:[%s238 + $0x5c] sm:$0x1]
      %vm604 = vcmask 1042432
      %vm605 = vcmask 1046532
      %vm606 = vmor %vm604, %vm605
      %v607 = vrot.slane %v556, 5
      %v608 = vrot.slane %v607, 4
      %v609 = vrot.slane %v557, 5
      %v610 = vsel %vm606, %v608, %v609
      %v611 = vrot.slane %v609, 4
      %v612 = vrot.slane %v558, 5
      %v613 = vsel %vm606, %v611, %v612
      %v614 = vrot.slane %v559, 5
      %v615 = vrot.slane %v614, 4
      %v616 = vrot.slane %v560, 5
      %v617 = vsel %vm606, %v615, %v616
      %v618 = vrot.slane %v616, 4
      %v619 = vrot.slane %v561, 5
      %v620 = vsel %vm606, %v618, %v619
      %v621 = vrot.slane %v562, 5
      %v622 = vrot.slane %v621, 4
      %v623 = vrot.slane %v563, 5
      %v624 = vsel %vm606, %v622, %v623
      %v625 = vrot.slane %v623, 4
      %v626 = vrot.slane %v564, 5
      %v627 = vsel %vm606, %v625, %v626
      %v628 = vrot.slane %v565, 5
      %v629 = vrot.slane %v628, 4
      %v630 = vrot.slane %v566, 5
      %v631 = vsel %vm606, %v629, %v630
      %v632 = vrot.slane %v630, 4
      %v633 = vrot.slane %v567, 5
      %v634 = vsel %vm606, %v632, %v633
      %v635 = vrot.slane %v568, 5
      %v636 = vrot.slane %v635, 4
      %v637 = vrot.slane %v569, 5
      %v638 = vsel %vm606, %v636, %v637
      %v639 = vrot.slane %v637, 4
      %v640 = vrot.slane %v570, 5
      %v641 = vsel %vm606, %v639, %v640
      %v642 = vrot.slane %v571, 5
      %v643 = vrot.slane %v642, 4
      %v644 = vrot.slane %v572, 5
      %v645 = vsel %vm606, %v643, %v644
      %v646 = vrot.slane %v644, 4
      %v647 = vrot.slane %v573, 5
      %v648 = vsel %vm606, %v646, %v647
      %v649 = vrot.slane %v574, 5
      %v650 = vrot.slane %v649, 4
      %v651 = vrot.slane %v575, 5
      %v652 = vsel %vm606, %v650, %v651
      %v653 = vrot.slane %v651, 4
      %v654 = vrot.slane %v576, 5
      %v655 = vsel %vm606, %v653, %v654
      %v656 = vrot.slane %v577, 5
      %v657 = vrot.slane %v656, 4
      %v658 = vrot.slane %v578, 5
      %v659 = vsel %vm606, %v657, %v658
      %v660 = vrot.slane %v658, 4
      %v661 = vrot.slane %v579, 5
      %v662 = vsel %vm606, %v660, %v661
      %663 = vrot.lane.b32.xlu0 %v610, 16
      %v664 = vpop.permute.xlu0 %663
      %665 = vrot.lane.b32.xlu0 %v613, 16
      %v666 = vpop.permute.xlu0 %665
      %667 = vrot.lane.b32.xlu0 %v617, 16
      %v668 = vpop.permute.xlu0 %667
      %669 = vrot.lane.b32.xlu0 %v620, 16
      %v670 = vpop.permute.xlu0 %669
      %671 = vrot.lane.b32.xlu0 %v624, 16
      %v672 = vpop.permute.xlu0 %671
      %673 = vrot.lane.b32.xlu0 %v627, 16
      %v674 = vpop.permute.xlu0 %673
      %675 = vrot.lane.b32.xlu0 %v631, 16
      %v676 = vpop.permute.xlu0 %675
      %677 = vrot.lane.b32.xlu0 %v634, 16
      %v678 = vpop.permute.xlu0 %677
      %679 = vrot.lane.b32.xlu0 %v638, 16
      %v680 = vpop.permute.xlu0 %679
      %681 = vrot.lane.b32.xlu0 %v641, 16
      %v682 = vpop.permute.xlu0 %681
      %683 = vrot.lane.b32.xlu0 %v645, 16
      %v684 = vpop.permute.xlu0 %683
      %685 = vrot.lane.b32.xlu0 %v648, 16
      %v686 = vpop.permute.xlu0 %685
      %687 = vrot.lane.b32.xlu0 %v652, 16
      %v688 = vpop.permute.xlu0 %687
      %689 = vrot.lane.b32.xlu0 %v655, 16
      %v690 = vpop.permute.xlu0 %689
      %691 = vrot.lane.b32.xlu0 %v659, 16
      %v692 = vpop.permute.xlu0 %691
      %693 = vrot.lane.b32.xlu0 %v662, 16
      %v694 = vpop.permute.xlu0 %693
      %vm711 = vcmask 191616
      %712 = vst.msk [vmem:[#allocation2] sm:$0xf] %vm711, %v664
      %713 = vst.msk [vmem:[#allocation2 + $0x4] sm:$0xf] %vm711, %v666
      %714 = vst.msk [vmem:[#allocation2 + $0x8] sm:$0xf] %vm711, %v668
      %715 = vst.msk [vmem:[#allocation2 + $0xc] sm:$0xf] %vm711, %v670
      %716 = vst.msk [vmem:[#allocation2 + $0x10] sm:$0xf] %vm711, %v672
      %717 = vst.msk [vmem:[#allocation2 + $0x14] sm:$0xf] %vm711, %v674
      %718 = vst.msk [vmem:[#allocation2 + $0x18] sm:$0xf] %vm711, %v676
      %719 = vst.msk [vmem:[#allocation2 + $0x1c] sm:$0xf] %vm711, %v678
      %720 = vst.msk [vmem:[#allocation2 + $0x20] sm:$0xf] %vm711, %v680
      %721 = vst.msk [vmem:[#allocation2 + $0x24] sm:$0xf] %vm711, %v682
      %722 = vst.msk [vmem:[#allocation2 + $0x28] sm:$0xf] %vm711, %v684
      %723 = vst.msk [vmem:[#allocation2 + $0x2c] sm:$0xf] %vm711, %v686
      %724 = vst.msk [vmem:[#allocation2 + $0x30] sm:$0xf] %vm711, %v688
      %725 = vst.msk [vmem:[#allocation2 + $0x34] sm:$0xf] %vm711, %v690
      %726 = vst.msk [vmem:[#allocation2 + $0x38] sm:$0xf] %vm711, %v692
      %727 = vst.msk [vmem:[#allocation2 + $0x3c] sm:$0xf] %vm711, %v694
      %s728 = sadd.s32 %s218, 1
      %s729 = smul.u32 %s728, 3
      %s730 = smul.addr %s729, 4
      %s731 = scalar_lea.vmem %s197, %s730
      %v732 = vld [vmem:[%s731] sm:$0xf]
      %v733 = vld [vmem:[%s731 + $0x4] sm:$0xf]
      %v734 = vld [vmem:[%s731 + $0xc] sm:$0xf]
      %v735 = vld [vmem:[%s731 + $0x10] sm:$0xf]
      %v736 = vld [vmem:[%s731 + $0x18] sm:$0xf]
      %v737 = vld [vmem:[%s731 + $0x1c] sm:$0xf]
      %v738 = vld [vmem:[%s731 + $0x24] sm:$0xf]
      %v739 = vld [vmem:[%s731 + $0x28] sm:$0xf]
      %v740 = vld [vmem:[%s731 + $0x30] sm:$0xf]
      %v741 = vld [vmem:[%s731 + $0x34] sm:$0xf]
      %v742 = vld [vmem:[%s731 + $0x3c] sm:$0xf]
      %v743 = vld [vmem:[%s731 + $0x40] sm:$0xf]
      %v744 = vld [vmem:[%s731 + $0x48] sm:$0xf]
      %v745 = vld [vmem:[%s731 + $0x4c] sm:$0xf]
      %v746 = vld [vmem:[%s731 + $0x54] sm:$0xf]
      %v747 = vld [vmem:[%s731 + $0x58] sm:$0xf]
      %764 = vrot.lane.b32.xlu0 %v732, 24
      %v765 = vpop.permute.xlu0 %764
      %766 = vrot.lane.b32.xlu0 %v733, 24
      %v767 = vpop.permute.xlu0 %766
      %768 = vrot.lane.b32.xlu0 %v734, 24
      %v769 = vpop.permute.xlu0 %768
      %770 = vrot.lane.b32.xlu0 %v735, 24
      %v771 = vpop.permute.xlu0 %770
      %772 = vrot.lane.b32.xlu0 %v736, 24
      %v773 = vpop.permute.xlu0 %772
      %774 = vrot.lane.b32.xlu0 %v737, 24
      %v775 = vpop.permute.xlu0 %774
      %776 = vrot.lane.b32.xlu0 %v738, 24
      %v777 = vpop.permute.xlu0 %776
      %778 = vrot.lane.b32.xlu0 %v739, 24
      %v779 = vpop.permute.xlu0 %778
      %780 = vrot.lane.b32.xlu0 %v740, 24
      %v781 = vpop.permute.xlu0 %780
      %782 = vrot.lane.b32.xlu0 %v741, 24
      %v783 = vpop.permute.xlu0 %782
      %784 = vrot.lane.b32.xlu0 %v742, 24
      %v785 = vpop.permute.xlu0 %784
      %786 = vrot.lane.b32.xlu0 %v743, 24
      %v787 = vpop.permute.xlu0 %786
      %788 = vrot.lane.b32.xlu0 %v744, 24
      %v789 = vpop.permute.xlu0 %788
      %790 = vrot.lane.b32.xlu0 %v745, 24
      %v791 = vpop.permute.xlu0 %790
      %792 = vrot.lane.b32.xlu0 %v746, 24
      %v793 = vpop.permute.xlu0 %792
      %794 = vrot.lane.b32.xlu0 %v747, 24
      %v795 = vpop.permute.xlu0 %794
      %vm812 = vcmask 257216
      %813 = vst.msk [vmem:[#allocation2] sm:$0xf] %vm812, %v765
      %814 = vst.msk [vmem:[#allocation2 + $0x4] sm:$0xf] %vm812, %v767
      %815 = vst.msk [vmem:[#allocation2 + $0x8] sm:$0xf] %vm812, %v769
      %816 = vst.msk [vmem:[#allocation2 + $0xc] sm:$0xf] %vm812, %v771
      %817 = vst.msk [vmem:[#allocation2 + $0x10] sm:$0xf] %vm812, %v773
      %818 = vst.msk [vmem:[#allocation2 + $0x14] sm:$0xf] %vm812, %v775
      %819 = vst.msk [vmem:[#allocation2 + $0x18] sm:$0xf] %vm812, %v777
      %820 = vst.msk [vmem:[#allocation2 + $0x1c] sm:$0xf] %vm812, %v779
      %821 = vst.msk [vmem:[#allocation2 + $0x20] sm:$0xf] %vm812, %v781
      %822 = vst.msk [vmem:[#allocation2 + $0x24] sm:$0xf] %vm812, %v783
      %823 = vst.msk [vmem:[#allocation2 + $0x28] sm:$0xf] %vm812, %v785
      %824 = vst.msk [vmem:[#allocation2 + $0x2c] sm:$0xf] %vm812, %v787
      %825 = vst.msk [vmem:[#allocation2 + $0x30] sm:$0xf] %vm812, %v789
      %826 = vst.msk [vmem:[#allocation2 + $0x34] sm:$0xf] %vm812, %v791
      %827 = vst.msk [vmem:[#allocation2 + $0x38] sm:$0xf] %vm812, %v793
      %828 = vst.msk [vmem:[#allocation2 + $0x3c] sm:$0xf] %vm812, %v795
      %v829 = vld [vmem:[%s731] sm:$0xf]
      %v830 = vld [vmem:[%s731 + $0x4] sm:$0xf]
      %v831 = vld [vmem:[%s731 + $0x8] sm:$0x1]
      %v832 = vld [vmem:[%s731 + $0xc] sm:$0xf]
      %v833 = vld [vmem:[%s731 + $0x10] sm:$0xf]
      %v834 = vld [vmem:[%s731 + $0x14] sm:$0x1]
      %v835 = vld [vmem:[%s731 + $0x18] sm:$0xf]
      %v836 = vld [vmem:[%s731 + $0x1c] sm:$0xf]
      %v837 = vld [vmem:[%s731 + $0x20] sm:$0x1]
      %v838 = vld [vmem:[%s731 + $0x24] sm:$0xf]
      %v839 = vld [vmem:[%s731 + $0x28] sm:$0xf]
      %v840 = vld [vmem:[%s731 + $0x2c] sm:$0x1]
      %v841 = vld [vmem:[%s731 + $0x30] sm:$0xf]
      %v842 = vld [vmem:[%s731 + $0x34] sm:$0xf]
      %v843 = vld [vmem:[%s731 + $0x38] sm:$0x1]
      %v844 = vld [vmem:[%s731 + $0x3c] sm:$0xf]
      %v845 = vld [vmem:[%s731 + $0x40] sm:$0xf]
      %v846 = vld [vmem:[%s731 + $0x44] sm:$0x1]
      %v847 = vld [vmem:[%s731 + $0x48] sm:$0xf]
      %v848 = vld [vmem:[%s731 + $0x4c] sm:$0xf]
      %v849 = vld [vmem:[%s731 + $0x50] sm:$0x1]
      %v850 = vld [vmem:[%s731 + $0x54] sm:$0xf]
      %v851 = vld [vmem:[%s731 + $0x58] sm:$0xf]
      %v852 = vld [vmem:[%s731 + $0x5c] sm:$0x1]
      %v854 = vshrl.u32 %v829, 16
      %v856 = vrot.slane %v854, 4
      %v857 = vshll.u32 %v829, 16
      %v859 = vrot.slane %v857, 5
      %v860 = vor.u32 %v856, %v859
      %v861 = vrot.slane %v860, 4
      %v863 = vshll.u32 %v830, 16
      %v865 = vrot.slane %v863, 5
      %v866 = vsel %vm298, %v861, %v865
      %v867 = vshrl.u32 %v830, 16
      %v869 = vrot.slane %v867, 4
      %v870 = vor.u32 %v869, %v865
      %v871 = vrot.slane %v870, 4
      %v873 = vshll.u32 %v831, 16
      %v875 = vrot.slane %v873, 5
      %v876 = vsel %vm298, %v871, %v875
      %v878 = vshrl.u32 %v832, 16
      %v880 = vrot.slane %v878, 4
      %v881 = vshll.u32 %v832, 16
      %v883 = vrot.slane %v881, 5
      %v884 = vor.u32 %v880, %v883
      %v885 = vrot.slane %v884, 4
      %v887 = vshll.u32 %v833, 16
      %v889 = vrot.slane %v887, 5
      %v890 = vsel %vm298, %v885, %v889
      %v891 = vshrl.u32 %v833, 16
      %v893 = vrot.slane %v891, 4
      %v894 = vor.u32 %v893, %v889
      %v895 = vrot.slane %v894, 4
      %v897 = vshll.u32 %v834, 16
      %v899 = vrot.slane %v897, 5
      %v900 = vsel %vm298, %v895, %v899
      %v902 = vshrl.u32 %v835, 16
      %v904 = vrot.slane %v902, 4
      %v905 = vshll.u32 %v835, 16
      %v907 = vrot.slane %v905, 5
      %v908 = vor.u32 %v904, %v907
      %v909 = vrot.slane %v908, 4
      %v911 = vshll.u32 %v836, 16
      %v913 = vrot.slane %v911, 5
      %v914 = vsel %vm298, %v909, %v913
      %v915 = vshrl.u32 %v836, 16
      %v917 = vrot.slane %v915, 4
      %v918 = vor.u32 %v917, %v913
      %v919 = vrot.slane %v918, 4
      %v921 = vshll.u32 %v837, 16
      %v923 = vrot.slane %v921, 5
      %v924 = vsel %vm298, %v919, %v923
      %v926 = vshrl.u32 %v838, 16
      %v928 = vrot.slane %v926, 4
      %v929 = vshll.u32 %v838, 16
      %v931 = vrot.slane %v929, 5
      %v932 = vor.u32 %v928, %v931
      %v933 = vrot.slane %v932, 4
      %v935 = vshll.u32 %v839, 16
      %v937 = vrot.slane %v935, 5
      %v938 = vsel %vm298, %v933, %v937
      %v939 = vshrl.u32 %v839, 16
      %v941 = vrot.slane %v939, 4
      %v942 = vor.u32 %v941, %v937
      %v943 = vrot.slane %v942, 4
      %v945 = vshll.u32 %v840, 16
      %v947 = vrot.slane %v945, 5
      %v948 = vsel %vm298, %v943, %v947
      %v950 = vshrl.u32 %v841, 16
      %v952 = vrot.slane %v950, 4
      %v953 = vshll.u32 %v841, 16
      %v955 = vrot.slane %v953, 5
      %v956 = vor.u32 %v952, %v955
      %v957 = vrot.slane %v956, 4
      %v959 = vshll.u32 %v842, 16
      %v961 = vrot.slane %v959, 5
      %v962 = vsel %vm298, %v957, %v961
      %v963 = vshrl.u32 %v842, 16
      %v965 = vrot.slane %v963, 4
      %v966 = vor.u32 %v965, %v961
      %v967 = vrot.slane %v966, 4
      %v969 = vshll.u32 %v843, 16
      %v971 = vrot.slane %v969, 5
      %v972 = vsel %vm298, %v967, %v971
      %v974 = vshrl.u32 %v844, 16
      %v976 = vrot.slane %v974, 4
      %v977 = vshll.u32 %v844, 16
      %v979 = vrot.slane %v977, 5
      %v980 = vor.u32 %v976, %v979
      %v981 = vrot.slane %v980, 4
      %v983 = vshll.u32 %v845, 16
      %v985 = vrot.slane %v983, 5
      %v986 = vsel %vm298, %v981, %v985
      %v987 = vshrl.u32 %v845, 16
      %v989 = vrot.slane %v987, 4
      %v990 = vor.u32 %v989, %v985
      %v991 = vrot.slane %v990, 4
      %v993 = vshll.u32 %v846, 16
      %v995 = vrot.slane %v993, 5
      %v996 = vsel %vm298, %v991, %v995
      %v998 = vshrl.u32 %v847, 16
      %v1000 = vrot.slane %v998, 4
      %v1001 = vshll.u32 %v847, 16
      %v1003 = vrot.slane %v1001, 5
      %v1004 = vor.u32 %v1000, %v1003
      %v1005 = vrot.slane %v1004, 4
      %v1007 = vshll.u32 %v848, 16
      %v1009 = vrot.slane %v1007, 5
      %v1010 = vsel %vm298, %v1005, %v1009
      %v1011 = vshrl.u32 %v848, 16
      %v1013 = vrot.slane %v1011, 4
      %v1014 = vor.u32 %v1013, %v1009
      %v1015 = vrot.slane %v1014, 4
      %v1017 = vshll.u32 %v849, 16
      %v1019 = vrot.slane %v1017, 5
      %v1020 = vsel %vm298, %v1015, %v1019
      %v1022 = vshrl.u32 %v850, 16
      %v1024 = vrot.slane %v1022, 4
      %v1025 = vshll.u32 %v850, 16
      %v1027 = vrot.slane %v1025, 5
      %v1028 = vor.u32 %v1024, %v1027
      %v1029 = vrot.slane %v1028, 4
      %v1031 = vshll.u32 %v851, 16
      %v1033 = vrot.slane %v1031, 5
      %v1034 = vsel %vm298, %v1029, %v1033
      %v1035 = vshrl.u32 %v851, 16
      %v1037 = vrot.slane %v1035, 4
      %v1038 = vor.u32 %v1037, %v1033
      %v1039 = vrot.slane %v1038, 4
      %v1041 = vshll.u32 %v852, 16
      %v1043 = vrot.slane %v1041, 5
      %v1044 = vsel %vm298, %v1039, %v1043
      %1045 = vrot.lane.b32.xlu0 %v866, 32
      %v1046 = vpop.permute.xlu0 %1045
      %1047 = vrot.lane.b32.xlu0 %v876, 32
      %v1048 = vpop.permute.xlu0 %1047
      %1049 = vrot.lane.b32.xlu0 %v890, 32
      %v1050 = vpop.permute.xlu0 %1049
      %1051 = vrot.lane.b32.xlu0 %v900, 32
      %v1052 = vpop.permute.xlu0 %1051
      %1053 = vrot.lane.b32.xlu0 %v914, 32
      %v1054 = vpop.permute.xlu0 %1053
      %1055 = vrot.lane.b32.xlu0 %v924, 32
      %v1056 = vpop.permute.xlu0 %1055
      %1057 = vrot.lane.b32.xlu0 %v938, 32
      %v1058 = vpop.permute.xlu0 %1057
      %1059 = vrot.lane.b32.xlu0 %v948, 32
      %v1060 = vpop.permute.xlu0 %1059
      %1061 = vrot.lane.b32.xlu0 %v962, 32
      %v1062 = vpop.permute.xlu0 %1061
      %1063 = vrot.lane.b32.xlu0 %v972, 32
      %v1064 = vpop.permute.xlu0 %1063
      %1065 = vrot.lane.b32.xlu0 %v986, 32
      %v1066 = vpop.permute.xlu0 %1065
      %1067 = vrot.lane.b32.xlu0 %v996, 32
      %v1068 = vpop.permute.xlu0 %1067
      %1069 = vrot.lane.b32.xlu0 %v1010, 32
      %v1070 = vpop.permute.xlu0 %1069
      %1071 = vrot.lane.b32.xlu0 %v1020, 32
      %v1072 = vpop.permute.xlu0 %1071
      %1073 = vrot.lane.b32.xlu0 %v1034, 32
      %v1074 = vpop.permute.xlu0 %1073
      %1075 = vrot.lane.b32.xlu0 %v1044, 32
      %v1076 = vpop.permute.xlu0 %1075
      %vm1093 = vcmask 322816
      %1094 = vst.msk [vmem:[#allocation2] sm:$0xf] %vm1093, %v1046
      %1095 = vst.msk [vmem:[#allocation2 + $0x4] sm:$0xf] %vm1093, %v1048
      %1096 = vst.msk [vmem:[#allocation2 + $0x8] sm:$0xf] %vm1093, %v1050
      %1097 = vst.msk [vmem:[#allocation2 + $0xc] sm:$0xf] %vm1093, %v1052
      %1098 = vst.msk [vmem:[#allocation2 + $0x10] sm:$0xf] %vm1093, %v1054
      %1099 = vst.msk [vmem:[#allocation2 + $0x14] sm:$0xf] %vm1093, %v1056
      %1100 = vst.msk [vmem:[#allocation2 + $0x18] sm:$0xf] %vm1093, %v1058
      %1101 = vst.msk [vmem:[#allocation2 + $0x1c] sm:$0xf] %vm1093, %v1060
      %1102 = vst.msk [vmem:[#allocation2 + $0x20] sm:$0xf] %vm1093, %v1062
      %1103 = vst.msk [vmem:[#allocation2 + $0x24] sm:$0xf] %vm1093, %v1064
      %1104 = vst.msk [vmem:[#allocation2 + $0x28] sm:$0xf] %vm1093, %v1066
      %1105 = vst.msk [vmem:[#allocation2 + $0x2c] sm:$0xf] %vm1093, %v1068
      %1106 = vst.msk [vmem:[#allocation2 + $0x30] sm:$0xf] %vm1093, %v1070
      %1107 = vst.msk [vmem:[#allocation2 + $0x34] sm:$0xf] %vm1093, %v1072
      %1108 = vst.msk [vmem:[#allocation2 + $0x38] sm:$0xf] %vm1093, %v1074
      %1109 = vst.msk [vmem:[#allocation2 + $0x3c] sm:$0xf] %vm1093, %v1076
      %v1110 = vld [vmem:[%s731] sm:$0xe]
      %v1111 = vld [vmem:[%s731 + $0x4] sm:$0xf]
      %v1112 = vld [vmem:[%s731 + $0x8] sm:$0x1]
      %v1113 = vld [vmem:[%s731 + $0xc] sm:$0xe]
      %v1114 = vld [vmem:[%s731 + $0x10] sm:$0xf]
      %v1115 = vld [vmem:[%s731 + $0x14] sm:$0x1]
      %v1116 = vld [vmem:[%s731 + $0x18] sm:$0xe]
      %v1117 = vld [vmem:[%s731 + $0x1c] sm:$0xf]
      %v1118 = vld [vmem:[%s731 + $0x20] sm:$0x1]
      %v1119 = vld [vmem:[%s731 + $0x24] sm:$0xe]
      %v1120 = vld [vmem:[%s731 + $0x28] sm:$0xf]
      %v1121 = vld [vmem:[%s731 + $0x2c] sm:$0x1]
      %v1122 = vld [vmem:[%s731 + $0x30] sm:$0xe]
      %v1123 = vld [vmem:[%s731 + $0x34] sm:$0xf]
      %v1124 = vld [vmem:[%s731 + $0x38] sm:$0x1]
      %v1125 = vld [vmem:[%s731 + $0x3c] sm:$0xe]
      %v1126 = vld [vmem:[%s731 + $0x40] sm:$0xf]
      %v1127 = vld [vmem:[%s731 + $0x44] sm:$0x1]
      %v1128 = vld [vmem:[%s731 + $0x48] sm:$0xe]
      %v1129 = vld [vmem:[%s731 + $0x4c] sm:$0xf]
      %v1130 = vld [vmem:[%s731 + $0x50] sm:$0x1]
      %v1131 = vld [vmem:[%s731 + $0x54] sm:$0xe]
      %v1132 = vld [vmem:[%s731 + $0x58] sm:$0xf]
      %v1133 = vld [vmem:[%s731 + $0x5c] sm:$0x1]
      %v1158 = vrot.slane %v1110, 5
      %v1159 = vrot.slane %v1158, 4
      %v1160 = vrot.slane %v1111, 5
      %v1161 = vsel %vm606, %v1159, %v1160
      %v1162 = vrot.slane %v1160, 4
      %v1163 = vrot.slane %v1112, 5
      %v1164 = vsel %vm606, %v1162, %v1163
      %v1165 = vrot.slane %v1113, 5
      %v1166 = vrot.slane %v1165, 4
      %v1167 = vrot.slane %v1114, 5
      %v1168 = vsel %vm606, %v1166, %v1167
      %v1169 = vrot.slane %v1167, 4
      %v1170 = vrot.slane %v1115, 5
      %v1171 = vsel %vm606, %v1169, %v1170
      %v1172 = vrot.slane %v1116, 5
      %v1173 = vrot.slane %v1172, 4
      %v1174 = vrot.slane %v1117, 5
      %v1175 = vsel %vm606, %v1173, %v1174
      %v1176 = vrot.slane %v1174, 4
      %v1177 = vrot.slane %v1118, 5
      %v1178 = vsel %vm606, %v1176, %v1177
      %v1179 = vrot.slane %v1119, 5
      %v1180 = vrot.slane %v1179, 4
      %v1181 = vrot.slane %v1120, 5
      %v1182 = vsel %vm606, %v1180, %v1181
      %v1183 = vrot.slane %v1181, 4
      %v1184 = vrot.slane %v1121, 5
      %v1185 = vsel %vm606, %v1183, %v1184
      %v1186 = vrot.slane %v1122, 5
      %v1187 = vrot.slane %v1186, 4
      %v1188 = vrot.slane %v1123, 5
      %v1189 = vsel %vm606, %v1187, %v1188
      %v1190 = vrot.slane %v1188, 4
      %v1191 = vrot.slane %v1124, 5
      %v1192 = vsel %vm606, %v1190, %v1191
      %v1193 = vrot.slane %v1125, 5
      %v1194 = vrot.slane %v1193, 4
      %v1195 = vrot.slane %v1126, 5
      %v1196 = vsel %vm606, %v1194, %v1195
      %v1197 = vrot.slane %v1195, 4
      %v1198 = vrot.slane %v1127, 5
      %v1199 = vsel %vm606, %v1197, %v1198
      %v1200 = vrot.slane %v1128, 5
      %v1201 = vrot.slane %v1200, 4
      %v1202 = vrot.slane %v1129, 5
      %v1203 = vsel %vm606, %v1201, %v1202
      %v1204 = vrot.slane %v1202, 4
      %v1205 = vrot.slane %v1130, 5
      %v1206 = vsel %vm606, %v1204, %v1205
      %v1207 = vrot.slane %v1131, 5
      %v1208 = vrot.slane %v1207, 4
      %v1209 = vrot.slane %v1132, 5
      %v1210 = vsel %vm606, %v1208, %v1209
      %v1211 = vrot.slane %v1209, 4
      %v1212 = vrot.slane %v1133, 5
      %v1213 = vsel %vm606, %v1211, %v1212
      %1214 = vrot.lane.b32.xlu0 %v1161, 40
      %v1215 = vpop.permute.xlu0 %1214
      %1216 = vrot.lane.b32.xlu0 %v1164, 40
      %v1217 = vpop.permute.xlu0 %1216
      %1218 = vrot.lane.b32.xlu0 %v1168, 40
      %v1219 = vpop.permute.xlu0 %1218
      %1220 = vrot.lane.b32.xlu0 %v1171, 40
      %v1221 = vpop.permute.xlu0 %1220
      %1222 = vrot.lane.b32.xlu0 %v1175, 40
      %v1223 = vpop.permute.xlu0 %1222
      %1224 = vrot.lane.b32.xlu0 %v1178, 40
      %v1225 = vpop.permute.xlu0 %1224
      %1226 = vrot.lane.b32.xlu0 %v1182, 40
      %v1227 = vpop.permute.xlu0 %1226
      %1228 = vrot.lane.b32.xlu0 %v1185, 40
      %v1229 = vpop.permute.xlu0 %1228
      %1230 = vrot.lane.b32.xlu0 %v1189, 40
      %v1231 = vpop.permute.xlu0 %1230
      %1232 = vrot.lane.b32.xlu0 %v1192, 40
      %v1233 = vpop.permute.xlu0 %1232
      %1234 = vrot.lane.b32.xlu0 %v1196, 40
      %v1235 = vpop.permute.xlu0 %1234
      %1236 = vrot.lane.b32.xlu0 %v1199, 40
      %v1237 = vpop.permute.xlu0 %1236
      %1238 = vrot.lane.b32.xlu0 %v1203, 40
      %v1239 = vpop.permute.xlu0 %1238
      %1240 = vrot.lane.b32.xlu0 %v1206, 40
      %v1241 = vpop.permute.xlu0 %1240
      %1242 = vrot.lane.b32.xlu0 %v1210, 40
      %v1243 = vpop.permute.xlu0 %1242
      %1244 = vrot.lane.b32.xlu0 %v1213, 40
      %v1245 = vpop.permute.xlu0 %1244
      %vm1262 = vcmask 388416
      %1263 = vst.msk [vmem:[#allocation2] sm:$0xf] %vm1262, %v1215
      %1264 = vst.msk [vmem:[#allocation2 + $0x4] sm:$0xf] %vm1262, %v1217
      %1265 = vst.msk [vmem:[#allocation2 + $0x8] sm:$0xf] %vm1262, %v1219
      %1266 = vst.msk [vmem:[#allocation2 + $0xc] sm:$0xf] %vm1262, %v1221
      %1267 = vst.msk [vmem:[#allocation2 + $0x10] sm:$0xf] %vm1262, %v1223
      %1268 = vst.msk [vmem:[#allocation2 + $0x14] sm:$0xf] %vm1262, %v1225
      %1269 = vst.msk [vmem:[#allocation2 + $0x18] sm:$0xf] %vm1262, %v1227
      %1270 = vst.msk [vmem:[#allocation2 + $0x1c] sm:$0xf] %vm1262, %v1229
      %1271 = vst.msk [vmem:[#allocation2 + $0x20] sm:$0xf] %vm1262, %v1231
      %1272 = vst.msk [vmem:[#allocation2 + $0x24] sm:$0xf] %vm1262, %v1233
      %1273 = vst.msk [vmem:[#allocation2 + $0x28] sm:$0xf] %vm1262, %v1235
      %1274 = vst.msk [vmem:[#allocation2 + $0x2c] sm:$0xf] %vm1262, %v1237
      %1275 = vst.msk [vmem:[#allocation2 + $0x30] sm:$0xf] %vm1262, %v1239
      %1276 = vst.msk [vmem:[#allocation2 + $0x34] sm:$0xf] %vm1262, %v1241
      %1277 = vst.msk [vmem:[#allocation2 + $0x38] sm:$0xf] %vm1262, %v1243
      %1278 = vst.msk [vmem:[#allocation2 + $0x3c] sm:$0xf] %vm1262, %v1245
      %s1279 = sadd.s32 %s218, 2
      %s1280 = smul.u32 %s1279, 3
      %s1281 = smul.addr %s1280, 4
      %s1282 = scalar_lea.vmem %s197, %s1281
      %v1283 = vld [vmem:[%s1282] sm:$0xf]
      %v1284 = vld [vmem:[%s1282 + $0x4] sm:$0xf]
      %v1285 = vld [vmem:[%s1282 + $0xc] sm:$0xf]
      %v1286 = vld [vmem:[%s1282 + $0x10] sm:$0xf]
      %v1287 = vld [vmem:[%s1282 + $0x18] sm:$0xf]
      %v1288 = vld [vmem:[%s1282 + $0x1c] sm:$0xf]
      %v1289 = vld [vmem:[%s1282 + $0x24] sm:$0xf]
      %v1290 = vld [vmem:[%s1282 + $0x28] sm:$0xf]
      %v1291 = vld [vmem:[%s1282 + $0x30] sm:$0xf]
      %v1292 = vld [vmem:[%s1282 + $0x34] sm:$0xf]
      %v1293 = vld [vmem:[%s1282 + $0x3c] sm:$0xf]
      %v1294 = vld [vmem:[%s1282 + $0x40] sm:$0xf]
      %v1295 = vld [vmem:[%s1282 + $0x48] sm:$0xf]
      %v1296 = vld [vmem:[%s1282 + $0x4c] sm:$0xf]
      %v1297 = vld [vmem:[%s1282 + $0x54] sm:$0xf]
      %v1298 = vld [vmem:[%s1282 + $0x58] sm:$0xf]
      %1315 = vrot.lane.b32.xlu0 %v1283, 48
      %v1316 = vpop.permute.xlu0 %1315
      %1317 = vrot.lane.b32.xlu0 %v1284, 48
      %v1318 = vpop.permute.xlu0 %1317
      %1319 = vrot.lane.b32.xlu0 %v1285, 48
      %v1320 = vpop.permute.xlu0 %1319
      %1321 = vrot.lane.b32.xlu0 %v1286, 48
      %v1322 = vpop.permute.xlu0 %1321
      %1323 = vrot.lane.b32.xlu0 %v1287, 48
      %v1324 = vpop.permute.xlu0 %1323
      %1325 = vrot.lane.b32.xlu0 %v1288, 48
      %v1326 = vpop.permute.xlu0 %1325
      %1327 = vrot.lane.b32.xlu0 %v1289, 48
      %v1328 = vpop.permute.xlu0 %1327
      %1329 = vrot.lane.b32.xlu0 %v1290, 48
      %v1330 = vpop.permute.xlu0 %1329
      %1331 = vrot.lane.b32.xlu0 %v1291, 48
      %v1332 = vpop.permute.xlu0 %1331
      %1333 = vrot.lane.b32.xlu0 %v1292, 48
      %v1334 = vpop.permute.xlu0 %1333
      %1335 = vrot.lane.b32.xlu0 %v1293, 48
      %v1336 = vpop.permute.xlu0 %1335
      %1337 = vrot.lane.b32.xlu0 %v1294, 48
      %v1338 = vpop.permute.xlu0 %1337
      %1339 = vrot.lane.b32.xlu0 %v1295, 48
      %v1340 = vpop.permute.xlu0 %1339
      %1341 = vrot.lane.b32.xlu0 %v1296, 48
      %v1342 = vpop.permute.xlu0 %1341
      %1343 = vrot.lane.b32.xlu0 %v1297, 48
      %v1344 = vpop.permute.xlu0 %1343
      %1345 = vrot.lane.b32.xlu0 %v1298, 48
      %v1346 = vpop.permute.xlu0 %1345
      %vm1363 = vcmask 454016
      %1364 = vst.msk [vmem:[#allocation2] sm:$0xf] %vm1363, %v1316
      %1365 = vst.msk [vmem:[#allocation2 + $0x4] sm:$0xf] %vm1363, %v1318
      %1366 = vst.msk [vmem:[#allocation2 + $0x8] sm:$0xf] %vm1363, %v1320
      %1367 = vst.msk [vmem:[#allocation2 + $0xc] sm:$0xf] %vm1363, %v1322
      %1368 = vst.msk [vmem:[#allocation2 + $0x10] sm:$0xf] %vm1363, %v1324
      %1369 = vst.msk [vmem:[#allocation2 + $0x14] sm:$0xf] %vm1363, %v1326
      %1370 = vst.msk [vmem:[#allocation2 + $0x18] sm:$0xf] %vm1363, %v1328
      %1371 = vst.msk [vmem:[#allocation2 + $0x1c] sm:$0xf] %vm1363, %v1330
      %1372 = vst.msk [vmem:[#allocation2 + $0x20] sm:$0xf] %vm1363, %v1332
      %1373 = vst.msk [vmem:[#allocation2 + $0x24] sm:$0xf] %vm1363, %v1334
      %1374 = vst.msk [vmem:[#allocation2 + $0x28] sm:$0xf] %vm1363, %v1336
      %1375 = vst.msk [vmem:[#allocation2 + $0x2c] sm:$0xf] %vm1363, %v1338
      %1376 = vst.msk [vmem:[#allocation2 + $0x30] sm:$0xf] %vm1363, %v1340
      %1377 = vst.msk [vmem:[#allocation2 + $0x34] sm:$0xf] %vm1363, %v1342
      %1378 = vst.msk [vmem:[#allocation2 + $0x38] sm:$0xf] %vm1363, %v1344
      %1379 = vst.msk [vmem:[#allocation2 + $0x3c] sm:$0xf] %vm1363, %v1346
      %v1380 = vld [vmem:[%s1282] sm:$0xf]
      %v1381 = vld [vmem:[%s1282 + $0x4] sm:$0xf]
      %v1382 = vld [vmem:[%s1282 + $0x8] sm:$0x1]
      %v1383 = vld [vmem:[%s1282 + $0xc] sm:$0xf]
      %v1384 = vld [vmem:[%s1282 + $0x10] sm:$0xf]
      %v1385 = vld [vmem:[%s1282 + $0x14] sm:$0x1]
      %v1386 = vld [vmem:[%s1282 + $0x18] sm:$0xf]
      %v1387 = vld [vmem:[%s1282 + $0x1c] sm:$0xf]
      %v1388 = vld [vmem:[%s1282 + $0x20] sm:$0x1]
      %v1389 = vld [vmem:[%s1282 + $0x24] sm:$0xf]
      %v1390 = vld [vmem:[%s1282 + $0x28] sm:$0xf]
      %v1391 = vld [vmem:[%s1282 + $0x2c] sm:$0x1]
      %v1392 = vld [vmem:[%s1282 + $0x30] sm:$0xf]
      %v1393 = vld [vmem:[%s1282 + $0x34] sm:$0xf]
      %v1394 = vld [vmem:[%s1282 + $0x38] sm:$0x1]
      %v1395 = vld [vmem:[%s1282 + $0x3c] sm:$0xf]
      %v1396 = vld [vmem:[%s1282 + $0x40] sm:$0xf]
      %v1397 = vld [vmem:[%s1282 + $0x44] sm:$0x1]
      %v1398 = vld [vmem:[%s1282 + $0x48] sm:$0xf]
      %v1399 = vld [vmem:[%s1282 + $0x4c] sm:$0xf]
      %v1400 = vld [vmem:[%s1282 + $0x50] sm:$0x1]
      %v1401 = vld [vmem:[%s1282 + $0x54] sm:$0xf]
      %v1402 = vld [vmem:[%s1282 + $0x58] sm:$0xf]
      %v1403 = vld [vmem:[%s1282 + $0x5c] sm:$0x1]
      %v1405 = vshrl.u32 %v1380, 16
      %v1407 = vrot.slane %v1405, 4
      %v1408 = vshll.u32 %v1380, 16
      %v1410 = vrot.slane %v1408, 5
      %v1411 = vor.u32 %v1407, %v1410
      %v1412 = vrot.slane %v1411, 4
      %v1414 = vshll.u32 %v1381, 16
      %v1416 = vrot.slane %v1414, 5
      %v1417 = vsel %vm298, %v1412, %v1416
      %v1418 = vshrl.u32 %v1381, 16
      %v1420 = vrot.slane %v1418, 4
      %v1421 = vor.u32 %v1420, %v1416
      %v1422 = vrot.slane %v1421, 4
      %v1424 = vshll.u32 %v1382, 16
      %v1426 = vrot.slane %v1424, 5
      %v1427 = vsel %vm298, %v1422, %v1426
      %v1429 = vshrl.u32 %v1383, 16
      %v1431 = vrot.slane %v1429, 4
      %v1432 = vshll.u32 %v1383, 16
      %v1434 = vrot.slane %v1432, 5
      %v1435 = vor.u32 %v1431, %v1434
      %v1436 = vrot.slane %v1435, 4
      %v1438 = vshll.u32 %v1384, 16
      %v1440 = vrot.slane %v1438, 5
      %v1441 = vsel %vm298, %v1436, %v1440
      %v1442 = vshrl.u32 %v1384, 16
      %v1444 = vrot.slane %v1442, 4
      %v1445 = vor.u32 %v1444, %v1440
      %v1446 = vrot.slane %v1445, 4
      %v1448 = vshll.u32 %v1385, 16
      %v1450 = vrot.slane %v1448, 5
      %v1451 = vsel %vm298, %v1446, %v1450
      %v1453 = vshrl.u32 %v1386, 16
      %v1455 = vrot.slane %v1453, 4
      %v1456 = vshll.u32 %v1386, 16
      %v1458 = vrot.slane %v1456, 5
      %v1459 = vor.u32 %v1455, %v1458
      %v1460 = vrot.slane %v1459, 4
      %v1462 = vshll.u32 %v1387, 16
      %v1464 = vrot.slane %v1462, 5
      %v1465 = vsel %vm298, %v1460, %v1464
      %v1466 = vshrl.u32 %v1387, 16
      %v1468 = vrot.slane %v1466, 4
      %v1469 = vor.u32 %v1468, %v1464
      %v1470 = vrot.slane %v1469, 4
      %v1472 = vshll.u32 %v1388, 16
      %v1474 = vrot.slane %v1472, 5
      %v1475 = vsel %vm298, %v1470, %v1474
      %v1477 = vshrl.u32 %v1389, 16
      %v1479 = vrot.slane %v1477, 4
      %v1480 = vshll.u32 %v1389, 16
      %v1482 = vrot.slane %v1480, 5
      %v1483 = vor.u32 %v1479, %v1482
      %v1484 = vrot.slane %v1483, 4
      %v1486 = vshll.u32 %v1390, 16
      %v1488 = vrot.slane %v1486, 5
      %v1489 = vsel %vm298, %v1484, %v1488
      %v1490 = vshrl.u32 %v1390, 16
      %v1492 = vrot.slane %v1490, 4
      %v1493 = vor.u32 %v1492, %v1488
      %v1494 = vrot.slane %v1493, 4
      %v1496 = vshll.u32 %v1391, 16
      %v1498 = vrot.slane %v1496, 5
      %v1499 = vsel %vm298, %v1494, %v1498
      %v1501 = vshrl.u32 %v1392, 16
      %v1503 = vrot.slane %v1501, 4
      %v1504 = vshll.u32 %v1392, 16
      %v1506 = vrot.slane %v1504, 5
      %v1507 = vor.u32 %v1503, %v1506
      %v1508 = vrot.slane %v1507, 4
      %v1510 = vshll.u32 %v1393, 16
      %v1512 = vrot.slane %v1510, 5
      %v1513 = vsel %vm298, %v1508, %v1512
      %v1514 = vshrl.u32 %v1393, 16
      %v1516 = vrot.slane %v1514, 4
      %v1517 = vor.u32 %v1516, %v1512
      %v1518 = vrot.slane %v1517, 4
      %v1520 = vshll.u32 %v1394, 16
      %v1522 = vrot.slane %v1520, 5
      %v1523 = vsel %vm298, %v1518, %v1522
      %v1525 = vshrl.u32 %v1395, 16
      %v1527 = vrot.slane %v1525, 4
      %v1528 = vshll.u32 %v1395, 16
      %v1530 = vrot.slane %v1528, 5
      %v1531 = vor.u32 %v1527, %v1530
      %v1532 = vrot.slane %v1531, 4
      %v1534 = vshll.u32 %v1396, 16
      %v1536 = vrot.slane %v1534, 5
      %v1537 = vsel %vm298, %v1532, %v1536
      %v1538 = vshrl.u32 %v1396, 16
      %v1540 = vrot.slane %v1538, 4
      %v1541 = vor.u32 %v1540, %v1536
      %v1542 = vrot.slane %v1541, 4
      %v1544 = vshll.u32 %v1397, 16
      %v1546 = vrot.slane %v1544, 5
      %v1547 = vsel %vm298, %v1542, %v1546
      %v1549 = vshrl.u32 %v1398, 16
      %v1551 = vrot.slane %v1549, 4
      %v1552 = vshll.u32 %v1398, 16
      %v1554 = vrot.slane %v1552, 5
      %v1555 = vor.u32 %v1551, %v1554
      %v1556 = vrot.slane %v1555, 4
      %v1558 = vshll.u32 %v1399, 16
      %v1560 = vrot.slane %v1558, 5
      %v1561 = vsel %vm298, %v1556, %v1560
      %v1562 = vshrl.u32 %v1399, 16
      %v1564 = vrot.slane %v1562, 4
      %v1565 = vor.u32 %v1564, %v1560
      %v1566 = vrot.slane %v1565, 4
      %v1568 = vshll.u32 %v1400, 16
      %v1570 = vrot.slane %v1568, 5
      %v1571 = vsel %vm298, %v1566, %v1570
      %v1573 = vshrl.u32 %v1401, 16
      %v1575 = vrot.slane %v1573, 4
      %v1576 = vshll.u32 %v1401, 16
      %v1578 = vrot.slane %v1576, 5
      %v1579 = vor.u32 %v1575, %v1578
      %v1580 = vrot.slane %v1579, 4
      %v1582 = vshll.u32 %v1402, 16
      %v1584 = vrot.slane %v1582, 5
      %v1585 = vsel %vm298, %v1580, %v1584
      %v1586 = vshrl.u32 %v1402, 16
      %v1588 = vrot.slane %v1586, 4
      %v1589 = vor.u32 %v1588, %v1584
      %v1590 = vrot.slane %v1589, 4
      %v1592 = vshll.u32 %v1403, 16
      %v1594 = vrot.slane %v1592, 5
      %v1595 = vsel %vm298, %v1590, %v1594
      %1596 = vrot.lane.b32.xlu0 %v1417, 56
      %v1597 = vpop.permute.xlu0 %1596
      %1598 = vrot.lane.b32.xlu0 %v1427, 56
      %v1599 = vpop.permute.xlu0 %1598
      %1600 = vrot.lane.b32.xlu0 %v1441, 56
      %v1601 = vpop.permute.xlu0 %1600
      %1602 = vrot.lane.b32.xlu0 %v1451, 56
      %v1603 = vpop.permute.xlu0 %1602
      %1604 = vrot.lane.b32.xlu0 %v1465, 56
      %v1605 = vpop.permute.xlu0 %1604
      %1606 = vrot.lane.b32.xlu0 %v1475, 56
      %v1607 = vpop.permute.xlu0 %1606
      %1608 = vrot.lane.b32.xlu0 %v1489, 56
      %v1609 = vpop.permute.xlu0 %1608
      %1610 = vrot.lane.b32.xlu0 %v1499, 56
      %v1611 = vpop.permute.xlu0 %1610
      %1612 = vrot.lane.b32.xlu0 %v1513, 56
      %v1613 = vpop.permute.xlu0 %1612
      %1614 = vrot.lane.b32.xlu0 %v1523, 56
      %v1615 = vpop.permute.xlu0 %1614
      %1616 = vrot.lane.b32.xlu0 %v1537, 56
      %v1617 = vpop.permute.xlu0 %1616
      %1618 = vrot.lane.b32.xlu0 %v1547, 56
      %v1619 = vpop.permute.xlu0 %1618
      %1620 = vrot.lane.b32.xlu0 %v1561, 56
      %v1621 = vpop.permute.xlu0 %1620
      %1622 = vrot.lane.b32.xlu0 %v1571, 56
      %v1623 = vpop.permute.xlu0 %1622
      %1624 = vrot.lane.b32.xlu0 %v1585, 56
      %v1625 = vpop.permute.xlu0 %1624
      %1626 = vrot.lane.b32.xlu0 %v1595, 56
      %v1627 = vpop.permute.xlu0 %1626
      %vm1644 = vcmask 519616
      %1645 = vst.msk [vmem:[#allocation2] sm:$0xf] %vm1644, %v1597
      %1646 = vst.msk [vmem:[#allocation2 + $0x4] sm:$0xf] %vm1644, %v1599
      %1647 = vst.msk [vmem:[#allocation2 + $0x8] sm:$0xf] %vm1644, %v1601
      %1648 = vst.msk [vmem:[#allocation2 + $0xc] sm:$0xf] %vm1644, %v1603
      %1649 = vst.msk [vmem:[#allocation2 + $0x10] sm:$0xf] %vm1644, %v1605
      %1650 = vst.msk [vmem:[#allocation2 + $0x14] sm:$0xf] %vm1644, %v1607
      %1651 = vst.msk [vmem:[#allocation2 + $0x18] sm:$0xf] %vm1644, %v1609
      %1652 = vst.msk [vmem:[#allocation2 + $0x1c] sm:$0xf] %vm1644, %v1611
      %1653 = vst.msk [vmem:[#allocation2 + $0x20] sm:$0xf] %vm1644, %v1613
      %1654 = vst.msk [vmem:[#allocation2 + $0x24] sm:$0xf] %vm1644, %v1615
      %1655 = vst.msk [vmem:[#allocation2 + $0x28] sm:$0xf] %vm1644, %v1617
      %1656 = vst.msk [vmem:[#allocation2 + $0x2c] sm:$0xf] %vm1644, %v1619
      %1657 = vst.msk [vmem:[#allocation2 + $0x30] sm:$0xf] %vm1644, %v1621
      %1658 = vst.msk [vmem:[#allocation2 + $0x34] sm:$0xf] %vm1644, %v1623
      %1659 = vst.msk [vmem:[#allocation2 + $0x38] sm:$0xf] %vm1644, %v1625
      %1660 = vst.msk [vmem:[#allocation2 + $0x3c] sm:$0xf] %vm1644, %v1627
      %v1661 = vld [vmem:[%s1282] sm:$0xe]
      %v1662 = vld [vmem:[%s1282 + $0x4] sm:$0xf]
      %v1663 = vld [vmem:[%s1282 + $0x8] sm:$0x1]
      %v1664 = vld [vmem:[%s1282 + $0xc] sm:$0xe]
      %v1665 = vld [vmem:[%s1282 + $0x10] sm:$0xf]
      %v1666 = vld [vmem:[%s1282 + $0x14] sm:$0x1]
      %v1667 = vld [vmem:[%s1282 + $0x18] sm:$0xe]
      %v1668 = vld [vmem:[%s1282 + $0x1c] sm:$0xf]
      %v1669 = vld [vmem:[%s1282 + $0x20] sm:$0x1]
      %v1670 = vld [vmem:[%s1282 + $0x24] sm:$0xe]
      %v1671 = vld [vmem:[%s1282 + $0x28] sm:$0xf]
      %v1672 = vld [vmem:[%s1282 + $0x2c] sm:$0x1]
      %v1673 = vld [vmem:[%s1282 + $0x30] sm:$0xe]
      %v1674 = vld [vmem:[%s1282 + $0x34] sm:$0xf]
      %v1675 = vld [vmem:[%s1282 + $0x38] sm:$0x1]
      %v1676 = vld [vmem:[%s1282 + $0x3c] sm:$0xe]
      %v1677 = vld [vmem:[%s1282 + $0x40] sm:$0xf]
      %v1678 = vld [vmem:[%s1282 + $0x44] sm:$0x1]
      %v1679 = vld [vmem:[%s1282 + $0x48] sm:$0xe]
      %v1680 = vld [vmem:[%s1282 + $0x4c] sm:$0xf]
      %v1681 = vld [vmem:[%s1282 + $0x50] sm:$0x1]
      %v1682 = vld [vmem:[%s1282 + $0x54] sm:$0xe]
      %v1683 = vld [vmem:[%s1282 + $0x58] sm:$0xf]
      %v1684 = vld [vmem:[%s1282 + $0x5c] sm:$0x1]
      %v1709 = vrot.slane %v1661, 5
      %v1710 = vrot.slane %v1709, 4
      %v1711 = vrot.slane %v1662, 5
      %v1712 = vsel %vm606, %v1710, %v1711
      %v1713 = vrot.slane %v1711, 4
      %v1714 = vrot.slane %v1663, 5
      %v1715 = vsel %vm606, %v1713, %v1714
      %v1716 = vrot.slane %v1664, 5
      %v1717 = vrot.slane %v1716, 4
      %v1718 = vrot.slane %v1665, 5
      %v1719 = vsel %vm606, %v1717, %v1718
      %v1720 = vrot.slane %v1718, 4
      %v1721 = vrot.slane %v1666, 5
      %v1722 = vsel %vm606, %v1720, %v1721
      %v1723 = vrot.slane %v1667, 5
      %v1724 = vrot.slane %v1723, 4
      %v1725 = vrot.slane %v1668, 5
      %v1726 = vsel %vm606, %v1724, %v1725
      %v1727 = vrot.slane %v1725, 4
      %v1728 = vrot.slane %v1669, 5
      %v1729 = vsel %vm606, %v1727, %v1728
      %v1730 = vrot.slane %v1670, 5
      %v1731 = vrot.slane %v1730, 4
      %v1732 = vrot.slane %v1671, 5
      %v1733 = vsel %vm606, %v1731, %v1732
      %v1734 = vrot.slane %v1732, 4
      %v1735 = vrot.slane %v1672, 5
      %v1736 = vsel %vm606, %v1734, %v1735
      %v1737 = vrot.slane %v1673, 5
      %v1738 = vrot.slane %v1737, 4
      %v1739 = vrot.slane %v1674, 5
      %v1740 = vsel %vm606, %v1738, %v1739
      %v1741 = vrot.slane %v1739, 4
      %v1742 = vrot.slane %v1675, 5
      %v1743 = vsel %vm606, %v1741, %v1742
      %v1744 = vrot.slane %v1676, 5
      %v1745 = vrot.slane %v1744, 4
      %v1746 = vrot.slane %v1677, 5
      %v1747 = vsel %vm606, %v1745, %v1746
      %v1748 = vrot.slane %v1746, 4
      %v1749 = vrot.slane %v1678, 5
      %v1750 = vsel %vm606, %v1748, %v1749
      %v1751 = vrot.slane %v1679, 5
      %v1752 = vrot.slane %v1751, 4
      %v1753 = vrot.slane %v1680, 5
      %v1754 = vsel %vm606, %v1752, %v1753
      %v1755 = vrot.slane %v1753, 4
      %v1756 = vrot.slane %v1681, 5
      %v1757 = vsel %vm606, %v1755, %v1756
      %v1758 = vrot.slane %v1682, 5
      %v1759 = vrot.slane %v1758, 4
      %v1760 = vrot.slane %v1683, 5
      %v1761 = vsel %vm606, %v1759, %v1760
      %v1762 = vrot.slane %v1760, 4
      %v1763 = vrot.slane %v1684, 5
      %v1764 = vsel %vm606, %v1762, %v1763
      %1765 = vrot.lane.b32.xlu0 %v1712, 64
      %v1766 = vpop.permute.xlu0 %1765
      %1767 = vrot.lane.b32.xlu0 %v1715, 64
      %v1768 = vpop.permute.xlu0 %1767
      %1769 = vrot.lane.b32.xlu0 %v1719, 64
      %v1770 = vpop.permute.xlu0 %1769
      %1771 = vrot.lane.b32.xlu0 %v1722, 64
      %v1772 = vpop.permute.xlu0 %1771
      %1773 = vrot.lane.b32.xlu0 %v1726, 64
      %v1774 = vpop.permute.xlu0 %1773
      %1775 = vrot.lane.b32.xlu0 %v1729, 64
      %v1776 = vpop.permute.xlu0 %1775
      %1777 = vrot.lane.b32.xlu0 %v1733, 64
      %v1778 = vpop.permute.xlu0 %1777
      %1779 = vrot.lane.b32.xlu0 %v1736, 64
      %v1780 = vpop.permute.xlu0 %1779
      %1781 = vrot.lane.b32.xlu0 %v1740, 64
      %v1782 = vpop.permute.xlu0 %1781
      %1783 = vrot.lane.b32.xlu0 %v1743, 64
      %v1784 = vpop.permute.xlu0 %1783
      %1785 = vrot.lane.b32.xlu0 %v1747, 64
      %v1786 = vpop.permute.xlu0 %1785
      %1787 = vrot.lane.b32.xlu0 %v1750, 64
      %v1788 = vpop.permute.xlu0 %1787
      %1789 = vrot.lane.b32.xlu0 %v1754, 64
      %v1790 = vpop.permute.xlu0 %1789
      %1791 = vrot.lane.b32.xlu0 %v1757, 64
      %v1792 = vpop.permute.xlu0 %1791
      %1793 = vrot.lane.b32.xlu0 %v1761, 64
      %v1794 = vpop.permute.xlu0 %1793
      %1795 = vrot.lane.b32.xlu0 %v1764, 64
      %v1796 = vpop.permute.xlu0 %1795
      %vm1813 = vcmask 585216
      %1814 = vst.msk [vmem:[#allocation2] sm:$0xf] %vm1813, %v1766
      %1815 = vst.msk [vmem:[#allocation2 + $0x4] sm:$0xf] %vm1813, %v1768
      %1816 = vst.msk [vmem:[#allocation2 + $0x8] sm:$0xf] %vm1813, %v1770
      %1817 = vst.msk [vmem:[#allocation2 + $0xc] sm:$0xf] %vm1813, %v1772
      %1818 = vst.msk [vmem:[#allocation2 + $0x10] sm:$0xf] %vm1813, %v1774
      %1819 = vst.msk [vmem:[#allocation2 + $0x14] sm:$0xf] %vm1813, %v1776
      %1820 = vst.msk [vmem:[#allocation2 + $0x18] sm:$0xf] %vm1813, %v1778
      %1821 = vst.msk [vmem:[#allocation2 + $0x1c] sm:$0xf] %vm1813, %v1780
      %1822 = vst.msk [vmem:[#allocation2 + $0x20] sm:$0xf] %vm1813, %v1782
      %1823 = vst.msk [vmem:[#allocation2 + $0x24] sm:$0xf] %vm1813, %v1784
      %1824 = vst.msk [vmem:[#allocation2 + $0x28] sm:$0xf] %vm1813, %v1786
      %1825 = vst.msk [vmem:[#allocation2 + $0x2c] sm:$0xf] %vm1813, %v1788
      %1826 = vst.msk [vmem:[#allocation2 + $0x30] sm:$0xf] %vm1813, %v1790
      %1827 = vst.msk [vmem:[#allocation2 + $0x34] sm:$0xf] %vm1813, %v1792
      %1828 = vst.msk [vmem:[#allocation2 + $0x38] sm:$0xf] %vm1813, %v1794
      %1829 = vst.msk [vmem:[#allocation2 + $0x3c] sm:$0xf] %vm1813, %v1796
      %v1830 = vld [vmem:[#allocation2] sm:$0xf]
      %v1831 = vld [vmem:[#allocation2 + $0x4] sm:$0xf]
      %v1832 = vld [vmem:[#allocation2 + $0x8] sm:$0xf]
      %v1833 = vld [vmem:[#allocation2 + $0xc] sm:$0xf]
      %v1834 = vld [vmem:[#allocation2 + $0x10] sm:$0xf]
      %v1835 = vld [vmem:[#allocation2 + $0x14] sm:$0xf]
      %v1836 = vld [vmem:[#allocation2 + $0x18] sm:$0xf]
      %v1837 = vld [vmem:[#allocation2 + $0x1c] sm:$0xf]
      %v1838 = vld [vmem:[#allocation2 + $0x20] sm:$0xf]
      %v1839 = vld [vmem:[#allocation2 + $0x24] sm:$0xf]
      %v1840 = vld [vmem:[#allocation2 + $0x28] sm:$0xf]
      %v1841 = vld [vmem:[#allocation2 + $0x2c] sm:$0xf]
      %v1842 = vld [vmem:[#allocation2 + $0x30] sm:$0xf]
      %v1843 = vld [vmem:[#allocation2 + $0x34] sm:$0xf]
      %v1844 = vld [vmem:[#allocation2 + $0x38] sm:$0xf]
      %v1845 = vld [vmem:[#allocation2 + $0x3c] sm:$0xf]
      %v1846 = vld [vmem:[%s1] sm:$0xf]
      %v1847 = vld [vmem:[%s1 + $0x4] sm:$0xf]
      %v1848 = vld [vmem:[%s1 + $0x8] sm:$0xf]
      %v1849 = vld [vmem:[%s1 + $0xc] sm:$0xf]
      %v1850 = vld [vmem:[%s1 + $0x10] sm:$0xf]
      %v1851 = vld [vmem:[%s1 + $0x14] sm:$0xf]
      %v1852 = vld [vmem:[%s1 + $0x18] sm:$0xf]
      %v1853 = vld [vmem:[%s1 + $0x1c] sm:$0xf]
      %v1854 = vld [vmem:[%s1 + $0x20] sm:$0xf]
      %v1855 = vld [vmem:[%s1 + $0x24] sm:$0xf]
      %v1856 = vld [vmem:[%s1 + $0x28] sm:$0xf]
      %v1857 = vld [vmem:[%s1 + $0x2c] sm:$0xf]
      %v1858 = vld [vmem:[%s1 + $0x30] sm:$0xf]
      %v1859 = vld [vmem:[%s1 + $0x34] sm:$0xf]
      %v1860 = vld [vmem:[%s1 + $0x38] sm:$0xf]
      %v1861 = vld [vmem:[%s1 + $0x3c] sm:$0xf]
      %v1878 = vunpack.c.l.b16 %v1830
      %v1879 = vunpack.c.l.b16 %v1831
      %v1880 = vunpack.c.l.b16 %v1832
      %v1881 = vunpack.c.l.b16 %v1833
      %v1882 = vunpack.c.l.b16 %v1834
      %v1883 = vunpack.c.l.b16 %v1835
      %v1884 = vunpack.c.l.b16 %v1836
      %v1885 = vunpack.c.l.b16 %v1837
      %v1886 = vunpack.c.l.b16 %v1838
      %v1887 = vunpack.c.l.b16 %v1839
      %v1888 = vunpack.c.l.b16 %v1840
      %v1889 = vunpack.c.l.b16 %v1841
      %v1890 = vunpack.c.l.b16 %v1842
      %v1891 = vunpack.c.l.b16 %v1843
      %v1892 = vunpack.c.l.b16 %v1844
      %v1893 = vunpack.c.l.b16 %v1845
      %v1894 = vpack.c.b16 %v1879, %v1878
      %v1895 = vpack.c.b16 %v1881, %v1880
      %v1896 = vpack.c.b16 %v1883, %v1882
      %v1897 = vpack.c.b16 %v1885, %v1884
      %v1898 = vpack.c.b16 %v1887, %v1886
      %v1899 = vpack.c.b16 %v1889, %v1888
      %v1900 = vpack.c.b16 %v1891, %v1890
      %v1901 = vpack.c.b16 %v1893, %v1892
      %v1926 = vunpack.c.l.b16 %v1846
      %v1927 = vunpack.c.l.b16 %v1847
      %v1928 = vunpack.c.l.b16 %v1848
      %v1929 = vunpack.c.l.b16 %v1849
      %v1930 = vunpack.c.l.b16 %v1850
      %v1931 = vunpack.c.l.b16 %v1851
      %v1932 = vunpack.c.l.b16 %v1852
      %v1933 = vunpack.c.l.b16 %v1853
      %v1934 = vunpack.c.l.b16 %v1854
      %v1935 = vunpack.c.l.b16 %v1855
      %v1936 = vunpack.c.l.b16 %v1856
      %v1937 = vunpack.c.l.b16 %v1857
      %v1938 = vunpack.c.l.b16 %v1858
      %v1939 = vunpack.c.l.b16 %v1859
      %v1940 = vunpack.c.l.b16 %v1860
      %v1941 = vunpack.c.l.b16 %v1861
      %v1942 = vpack.c.b16 %v1927, %v1926
      %v1943 = vpack.c.b16 %v1929, %v1928
      %v1944 = vpack.c.b16 %v1931, %v1930
      %v1945 = vpack.c.b16 %v1933, %v1932
      %v1946 = vpack.c.b16 %v1935, %v1934
      %v1947 = vpack.c.b16 %v1937, %v1936
      %v1948 = vpack.c.b16 %v1939, %v1938
      %v1949 = vpack.c.b16 %v1941, %v1940
      %1958 = vmatpush.bf16.msra.mxu0 %v1949
      %1959 = vmatpush.bf16.msra.mxu0 %v1948
      %1960 = vmatpush.bf16.msra.mxu0 %v1947
      %1961 = vmatpush.bf16.msra.mxu0 %v1946
      %1962 = vmatpush.bf16.msra.mxu0 %v1945
      %1963 = vmatpush.bf16.msra.mxu0 %v1944
      %1964 = vmatpush.bf16.msra.mxu0 %v1943
      %1965 = vmatpush.bf16.msra.mxu0 %v1942
      %1966 = vmatmul.bf16.gmra.mxu0 %v1894
      %v1967 = vpop.f32.mrf.mxu0
      %v1968 = vadd.f32 0.0, %v1967
      %v1969 = vpop.f32.mrf.mxu0
      %v1970 = vadd.f32 0.0, %v1969
      %1971 = vmatmul.bf16.gmra.mxu0 %v1895
      %v1972 = vpop.f32.mrf.mxu0
      %v1973 = vadd.f32 0.0, %v1972
      %v1974 = vpop.f32.mrf.mxu0
      %v1975 = vadd.f32 0.0, %v1974
      %1976 = vmatmul.bf16.gmra.mxu0 %v1896
      %v1977 = vpop.f32.mrf.mxu0
      %v1978 = vadd.f32 0.0, %v1977
      %v1979 = vpop.f32.mrf.mxu0
      %v1980 = vadd.f32 0.0, %v1979
      %1981 = vmatmul.bf16.gmra.mxu0 %v1897
      %v1982 = vpop.f32.mrf.mxu0
      %v1983 = vadd.f32 0.0, %v1982
      %v1984 = vpop.f32.mrf.mxu0
      %v1985 = vadd.f32 0.0, %v1984
      %1986 = vmatmul.bf16.gmra.mxu0 %v1898
      %v1987 = vpop.f32.mrf.mxu0
      %v1988 = vadd.f32 0.0, %v1987
      %v1989 = vpop.f32.mrf.mxu0
      %v1990 = vadd.f32 0.0, %v1989
      %1991 = vmatmul.bf16.gmra.mxu0 %v1899
      %v1992 = vpop.f32.mrf.mxu0
      %v1993 = vadd.f32 0.0, %v1992
      %v1994 = vpop.f32.mrf.mxu0
      %v1995 = vadd.f32 0.0, %v1994
      %1996 = vmatmul.bf16.gmra.mxu0 %v1900
      %v1997 = vpop.f32.mrf.mxu0
      %v1998 = vadd.f32 0.0, %v1997
      %v1999 = vpop.f32.mrf.mxu0
      %v2000 = vadd.f32 0.0, %v1999
      %2001 = vmatmul.bf16.gmra.mxu0 %v1901
      %v2002 = vpop.f32.mrf.mxu0
      %v2003 = vadd.f32 0.0, %v2002
      %v2004 = vpop.f32.mrf.mxu0
      %v2005 = vadd.f32 0.0, %v2004
      %2006 = vdwg.mxu0
      %v2007 = vadd.f32 %v1968, %v1970
      %v2008 = vadd.f32 %v2007, %v1973
      %v2009 = vadd.f32 %v2008, %v1975
      %v2010 = vadd.f32 %v2009, %v1978
      %v2011 = vadd.f32 %v2010, %v1980
      %v2012 = vadd.f32 %v2011, %v1983
      %v2013 = vadd.f32 %v2012, %v1985
      %v2014 = vadd.f32 %v2013, %v1988
      %v2015 = vadd.f32 %v2014, %v1990
      %v2016 = vadd.f32 %v2015, %v1993
      %v2017 = vadd.f32 %v2016, %v1995
      %v2018 = vadd.f32 %v2017, %v1998
      %v2019 = vadd.f32 %v2018, %v2000
      %v2020 = vadd.f32 %v2019, %v2003
      %v2021 = vadd.f32 %v2020, %v2005
      %v2022 = vrot.slane %v2021, 4
      %v2023 = vadd.f32 %v2021, %v2022
      %v2024 = vrot.slane %v2023, 2
      %v2025 = vadd.f32 %v2023, %v2024
      %v2026 = vrot.slane %v2025, 1
      %v2027 = vadd.f32 %v2025, %v2026
      %v2028 = vmul.f32 %v1968, %v1968
      %v2029 = vmul.f32 %v1970, %v1970
      %v2030 = vmul.f32 %v1973, %v1973
      %v2031 = vmul.f32 %v1975, %v1975
      %v2032 = vmul.f32 %v1978, %v1978
      %v2033 = vmul.f32 %v1980, %v1980
      %v2034 = vmul.f32 %v1983, %v1983
      %v2035 = vmul.f32 %v1985, %v1985
      %v2036 = vmul.f32 %v1988, %v1988
      %v2037 = vmul.f32 %v1990, %v1990
      %v2038 = vmul.f32 %v1993, %v1993
      %v2039 = vmul.f32 %v1995, %v1995
      %v2040 = vmul.f32 %v1998, %v1998
      %v2041 = vmul.f32 %v2000, %v2000
      %v2042 = vmul.f32 %v2003, %v2003
      %v2043 = vmul.f32 %v2005, %v2005
      %v2044 = vadd.f32 %v2028, %v2029
      %v2045 = vadd.f32 %v2044, %v2030
      %v2046 = vadd.f32 %v2045, %v2031
      %v2047 = vadd.f32 %v2046, %v2032
      %v2048 = vadd.f32 %v2047, %v2033
      %v2049 = vadd.f32 %v2048, %v2034
      %v2050 = vadd.f32 %v2049, %v2035
      %v2051 = vadd.f32 %v2050, %v2036
      %v2052 = vadd.f32 %v2051, %v2037
      %v2053 = vadd.f32 %v2052, %v2038
      %v2054 = vadd.f32 %v2053, %v2039
      %v2055 = vadd.f32 %v2054, %v2040
      %v2056 = vadd.f32 %v2055, %v2041
      %v2057 = vadd.f32 %v2056, %v2042
      %v2058 = vadd.f32 %v2057, %v2043
      %v2059 = vrot.slane %v2058, 4
      %v2060 = vadd.f32 %v2058, %v2059
      %v2061 = vrot.slane %v2060, 2
      %v2062 = vadd.f32 %v2060, %v2061
      %v2063 = vrot.slane %v2062, 1
      %v2064 = vadd.f32 %v2062, %v2063
      %vm2065 = vcmask 1040384
      %v2066 = vsel %vm2065, %v2027, %v2064
      %2067 = vst [vmem:[%s216] sm:$0x3] %v2066
      %v2068 = vpack.c.bf16 %v1968, %v1968
      %v2069 = vpack.c.bf16 %v1970, %v1970
      %v2070 = vpack.c.bf16 %v1973, %v1973
      %v2071 = vpack.c.bf16 %v1975, %v1975
      %v2072 = vpack.c.bf16 %v1978, %v1978
      %v2073 = vpack.c.bf16 %v1980, %v1980
      %v2074 = vpack.c.bf16 %v1983, %v1983
      %v2075 = vpack.c.bf16 %v1985, %v1985
      %v2076 = vpack.c.bf16 %v1988, %v1988
      %v2077 = vpack.c.bf16 %v1990, %v1990
      %v2078 = vpack.c.bf16 %v1993, %v1993
      %v2079 = vpack.c.bf16 %v1995, %v1995
      %v2080 = vpack.c.bf16 %v1998, %v1998
      %v2081 = vpack.c.bf16 %v2000, %v2000
      %v2082 = vpack.c.bf16 %v2003, %v2003
      %v2083 = vpack.c.bf16 %v2005, %v2005
      %2084 = vst [vmem:[%s207] sm:$0xf] %v2068
      %2085 = vst [vmem:[%s207 + $0x4] sm:$0xf] %v2069
      %2086 = vst [vmem:[%s207 + $0x8] sm:$0xf] %v2070
      %2087 = vst [vmem:[%s207 + $0xc] sm:$0xf] %v2071
      %2088 = vst [vmem:[%s207 + $0x10] sm:$0xf] %v2072
      %2089 = vst [vmem:[%s207 + $0x14] sm:$0xf] %v2073
      %2090 = vst [vmem:[%s207 + $0x18] sm:$0xf] %v2074
      %2091 = vst [vmem:[%s207 + $0x1c] sm:$0xf] %v2075
      %2092 = vst [vmem:[%s207 + $0x20] sm:$0xf] %v2076
      %2093 = vst [vmem:[%s207 + $0x24] sm:$0xf] %v2077
      %2094 = vst [vmem:[%s207 + $0x28] sm:$0xf] %v2078
      %2095 = vst [vmem:[%s207 + $0x2c] sm:$0xf] %v2079
      %2096 = vst [vmem:[%s207 + $0x30] sm:$0xf] %v2080
      %2097 = vst [vmem:[%s207 + $0x34] sm:$0xf] %v2081
      %2098 = vst [vmem:[%s207 + $0x38] sm:$0xf] %v2082
      %2099 = vst [vmem:[%s207 + $0x3c] sm:$0xf] %v2083
      %s2100 = smul.u32 8, %s20
      %p2101 = scmp.lt.s32.totalorder %s19, 1
      %s2102 = scalar_select %p2101, %s19, 1
      %p2103 = scmp.lt.s32.totalorder %s2100, 15
      %s2104 = scalar_select %p2103, %s2100, 15
      %s2105 = smul.addr %s2104, 2
      %s2106 = smul.addr %s2102, 32
      %s2107 = sadd.s32 %s2105, %s2106
      %s2108 = smul.addr %s2107, 4
      %s2109 = scalar_lea.vmem %s2, %s2108
      %p2110 = scmp.lt.s32.totalorder %s19, 1
      %s2111 = scalar_select %p2110, %s19, 1
      %p2112 = scmp.lt.s32.totalorder %s20, 1
      %s2113 = scalar_select %p2112, %s20, 1
      %s2114 = smul.addr %s2111, 2
      %s2115 = sadd.s32 %s2113, %s2114
      %s2116 = smul.addr %s2115, 2
      %s2117 = scalar_lea.vmem %s3, %s2116
      // Predicated region
      $region29: #{conv_block.6} parent=27 // pred_check
        %p2118 = pneg %p94
      $region30: #{conv_block.6} parent=27 // pred_check_branch
        %2120 = sbr.rel (%p2118) target = $region32
      $region31: #{conv_block.6} parent=27 // pred_region
        %s2121 = smul.u32 8, %s20
      $region32: #{conv_block.6} parent=27 // pred_fallthru
        _
      // Predicated region
      $region33: #{conv_block.6} parent=27 // pred_check
        %p2122 = pneg %p122
      $region34: #{conv_block.6} parent=27 // pred_check_branch
        %2124 = sbr.rel (%p2122) target = $region36
      $region35: #{conv_block.6} parent=27 // pred_region
        _
      $region36: #{conv_block.6} parent=27 // pred_fallthru
        _
    $region28: #{conv_block.6} parent=5 // pred_fallthru
      _
    %p2125 = scmp.le.s32.totalorder 2, %s10
    // Predicated region
    $region37: #{conv_block.6} parent=5 // pred_check
      %p2126 = pneg %p2125
    $region38: #{conv_block.6} parent=5 // pred_check_branch
      %2128 = sbr.rel (%p2126) target = $region40
    $region39: #{conv_block.6} parent=5 // pred_region
      %s2129 = ssub.s32 %s10, 2
      // Predicated region
      $region41: #{conv_block.6} parent=39 // pred_check
        %p2130 = pneg %p100
      $region42: #{conv_block.6} parent=39 // pred_check_branch
        %2132 = sbr.rel (%p2130) target = $region44
      $region43: #{conv_block.6} parent=39 // pred_region
        %s2133 = smul.u32 8, %s22
        %p2134 = scmp.lt.s32.totalorder %s21, 1
        %s2135 = scalar_select %p2134, %s21, 1
        %p2136 = scmp.lt.s32.totalorder %s2133, 15
        %s2137 = scalar_select %p2136, %s2133, 15
        %s2138 = smul.addr %s2137, 2
        %s2139 = smul.addr %s2135, 32
        %s2140 = sadd.s32 %s2138, %s2139
        %s2141 = smul.addr %s2140, 4
        %s2142 = scalar_lea.vmem %s2, %s2141
      $region44: #{conv_block.6} parent=39 // pred_fallthru
        _
      // Predicated region
      $region45: #{conv_block.6} parent=39 // pred_check
        %p2143 = pneg %p128
      $region46: #{conv_block.6} parent=39 // pred_check_branch
        %2145 = sbr.rel (%p2143) target = $region48
      $region47: #{conv_block.6} parent=39 // pred_region
        %p2146 = scmp.lt.s32.totalorder %s21, 1
        %s2147 = scalar_select %p2146, %s21, 1
        %p2148 = scmp.lt.s32.totalorder %s22, 1
        %s2149 = scalar_select %p2148, %s22, 1
        %s2150 = smul.addr %s2147, 2
        %s2151 = sadd.s32 %s2149, %s2150
        %s2152 = smul.addr %s2151, 2
        %s2153 = scalar_lea.vmem %s3, %s2152
      $region48: #{conv_block.6} parent=39 // pred_fallthru
        _
    $region40: #{conv_block.6} parent=5 // pred_fallthru
      _
  $region6: #{conv_block.6} parent=0 // loop_footer
    %s14 = sadd.s32 1, %s10
  $region7: #{conv_block.6} parent=0 // loop_footer_branch
    %9 = sbr.rel target = $region3
  $region8: #{conv_block.6} parent=0 // loop_exit
    _

</llo_original>
